<compile_context>
chip_gen: v6e
topology: v6e:2x2x1
jax: 0.10.0
libtpu: 0.0.40
codegen_flags: <defaults>
</compile_context>

<pallas_src>
import jax
import jax.numpy as jnp
from jax import lax
from jax.experimental import pallas as pl
from jax.experimental.pallas import tpu as pltpu
import numpy as np

PAD = 0
_NEG = -1e30  # bias for padded vocab lanes: never wins the max, exp() underflows to 0


def _classifier_kernel(x_ref, w_ref, b_ref, gold_ref, mask_ref,
                       nll_ref, corr_ref, z_ref,
                       m_scr, l_scr, g_scr, a_scr):
    # Grid = (row_tiles, vocab_tiles); vocab (j) is the inner reduction axis.
    #
    # x_ref    : (TM, D)  bf16  row tile of the flattened feed
    # w_ref    : (VT, D)  bf16  vocab tile of map_vocab.weight (PyTorch (V, D) layout)
    # b_ref    : (1, VT)  f32   vocab tile of the bias (padded lanes = -1e30)
    # gold_ref : (TM, 1)  i32   gold ids for this row tile
    # mask_ref : (TM, 1)  f32   gold_mask for this row tile
    # outputs  : (1, 1) resident accumulators: nll f32, pred_correct i32, batch_Z f32
    # scratch  : per-row-tile online-softmax state carried across vocab tiles
    i = pl.program_id(0)
    j = pl.program_id(1)
    nv = pl.num_programs(1)

    @pl.when((i == 0) & (j == 0))
    def _init_outputs():
        nll_ref[...] = jnp.zeros_like(nll_ref)
        corr_ref[...] = jnp.zeros_like(corr_ref)
        z_ref[...] = jnp.zeros_like(z_ref)

    @pl.when(j == 0)
    def _init_state():
        m_scr[...] = jnp.full_like(m_scr, -jnp.inf)   # running max of logits
        l_scr[...] = jnp.zeros_like(l_scr)            # running sum of exp(logit - m)
        g_scr[...] = jnp.zeros_like(g_scr)            # logit at the gold index
        a_scr[...] = jnp.zeros_like(a_scr)            # running argmax (global index)

    # (TM, VT) f32 logits tile: bf16 MXU matmul, f32 accumulation, contracting
    # directly against the (V, D) weight layout (no transposed weight copy).
    logits = lax.dot_general(
        x_ref[...], w_ref[...], (((1,), (1,)), ((), ())),
        preferred_element_type=jnp.float32) + b_ref[...]

    gold = gold_ref[...]                                    # (TM, 1) i32
    vt = logits.shape[-1]
    v_base = j * vt
    lane = lax.broadcasted_iota(jnp.int32, logits.shape, 1)  # local vocab ids

    # One cross-lane max pass, reused for both the logsumexp shift and the argmax.
    tile_max = jnp.max(logits, axis=-1, keepdims=True)                     # (TM, 1)
    tile_arg = jnp.min(jnp.where(logits == tile_max, lane, vt),
                       axis=-1, keepdims=True) + v_base                    # first idx

    m_old = m_scr[...]
    m_new = jnp.maximum(m_old, tile_max)
    # cross-tile ties keep the earlier index (matches first-index argmax semantics)
    a_scr[...] = jnp.where(tile_max > m_old, tile_arg, a_scr[...])
    l_scr[...] = (l_scr[...] * jnp.exp(m_old - m_new)
                  + jnp.sum(jnp.exp(logits - m_new), axis=-1, keepdims=True))
    m_scr[...] = m_new

    # gather the logit at the gold index (one-hot over this vocab tile)
    onehot = (lane + v_base) == gold
    g_scr[...] += jnp.sum(jnp.where(onehot, logits, 0.0), axis=-1, keepdims=True)

    @pl.when(j == nv - 1)
    def _finalize_row_tile():
        mask = mask_ref[...]                               # (TM, 1) f32
        valid = (gold != PAD).astype(jnp.float32)          # (TM, 1)
        log_norm = m_scr[...] + jnp.log(l_scr[...])        # (TM, 1)
        gold_logp = g_scr[...] - log_norm                  # logp[row, gold]
        # NLLLoss(weight[PAD]=0, reduction='sum', ignore_index=PAD) on logp * mask
        nll_ref[...] += -jnp.sum(gold_logp * mask * valid, keepdims=True)
        # batch_Z = sum |log_norm * gold_mask|
        z_ref[...] += jnp.sum(jnp.abs(log_norm * mask), keepdims=True)
        # pred_correct = (argmax(logits) == gold) over rows with gold != PAD
        corr_ref[...] += jnp.sum(
            ((a_scr[...] == gold) & (gold != PAD)).astype(jnp.int32),
            keepdims=True)


def _round_up(x, m):
    return (x + m - 1) // m * m


def classifier_forward(feed, gold, gold_mask, weight, bias, *,
                       tile_rows=256, v_tile=1024, vmem_limit_bytes=None):
    """Pallas equivalent of Classifier.forward(feed, gold, gold_mask).

    feed      : (T, B, D) or (N, D) float
    gold      : (T, B) or (N,) int
    gold_mask : same leading shape as gold, float
    weight    : (V, D)  -- PyTorch nn.Linear weight layout (NOT transposed)
    bias      : (V,)
    Returns (nll, pred_correct, batch_Z) scalars.
    """
    D = feed.shape[-1]
    V = weight.shape[0]

    x = feed.reshape(-1, D)
    g = gold.reshape(-1).astype(jnp.int32)
    m = gold_mask.reshape(-1).astype(jnp.float32)
    N = x.shape[0]

    # --- row tiling: pad N with gold=PAD, mask=0 rows (excluded by the kernel) ---
    TM = int(tile_rows)
    n_pad = _round_up(N, TM)
    if n_pad != N:
        x = jnp.pad(x, ((0, n_pad - N), (0, 0)))
        g = jnp.pad(g, (0, n_pad - N), constant_values=PAD)
        m = jnp.pad(m, (0, n_pad - N), constant_values=0.0)

    # --- vocab tiling: pad V with zero weights / -1e30 bias (cannot affect results) ---
    VT = _round_up(min(int(v_tile), _round_up(V, 128)), 128)
    v_pad = _round_up(V, VT)

    x_bf = x.astype(jnp.bfloat16)                          # bf16 MXU operand
    w_bf = weight.astype(jnp.bfloat16)                     # (V, D), no transpose copy
    b2 = bias.astype(jnp.float32).reshape(1, V)
    if v_pad != V:
        w_bf = jnp.pad(w_bf, ((0, v_pad - V), (0, 0)))
        b2 = jnp.pad(b2, ((0, 0), (0, v_pad - V)), constant_values=_NEG)

    g2 = g.reshape(-1, 1)
    m2 = m.reshape(-1, 1)

    grid = (n_pad // TM, v_pad // VT)

    out_shapes = (
        jax.ShapeDtypeStruct((1, 1), jnp.float32),   # nll
        jax.ShapeDtypeStruct((1, 1), jnp.int32),     # pred_correct
        jax.ShapeDtypeStruct((1, 1), jnp.float32),   # batch_Z
    )
    acc_spec = pl.BlockSpec((1, 1), lambda i, j: (0, 0))

    cp_kwargs = dict(dimension_semantics=("arbitrary", "arbitrary"))
    if vmem_limit_bytes is not None:
        cp_kwargs["vmem_limit_bytes"] = int(vmem_limit_bytes)

    nll, corr, z = pl.pallas_call(
        _classifier_kernel,
        out_shape=out_shapes,
        grid_spec=pltpu.PrefetchScalarGridSpec(
            num_scalar_prefetch=0,
            grid=grid,
            in_specs=[
                pl.BlockSpec((TM, D), lambda i, j: (i, 0)),    # feed rows
                pl.BlockSpec((VT, D), lambda i, j: (j, 0)),    # weight vocab tile
                pl.BlockSpec((1, VT), lambda i, j: (0, j)),    # bias vocab tile
                pl.BlockSpec((TM, 1), lambda i, j: (i, 0)),    # gold
                pl.BlockSpec((TM, 1), lambda i, j: (i, 0)),    # gold_mask
            ],
            out_specs=[acc_spec, acc_spec, acc_spec],
            scratch_shapes=[
                pltpu.VMEM((TM, 1), jnp.float32),   # running max
                pltpu.VMEM((TM, 1), jnp.float32),   # running sum-exp
                pltpu.VMEM((TM, 1), jnp.float32),   # gold logit
                pltpu.VMEM((TM, 1), jnp.int32),     # running argmax index
            ],
        ),
        compiler_params=pltpu.CompilerParams(**cp_kwargs),
    )(x_bf, w_bf, b2, g2, m2)
    return nll[0, 0], corr[0, 0], z[0, 0]


def _reference_forward(feed, gold, gold_mask, weight, bias):
    """Pure-JAX reference with the same bf16-matmul / f32-softmax numerics."""
    x = feed.reshape(-1, feed.shape[-1])
    g = gold.reshape(-1)
    m = gold_mask.reshape(-1).astype(jnp.float32)
    logits = jnp.dot(x.astype(jnp.bfloat16), weight.astype(jnp.bfloat16).T,
                     preferred_element_type=jnp.float32) + bias.astype(jnp.float32)
    log_norm = jax.scipy.special.logsumexp(logits, axis=-1, keepdims=True)
    logp = logits - log_norm
    valid = g != PAD
    gold_lp = jnp.take_along_axis(logp, g[:, None], axis=-1)[:, 0]
    nll = -jnp.sum(gold_lp * m * valid.astype(jnp.float32))
    z = jnp.sum(jnp.abs(log_norm[:, 0] * m))
    corr = jnp.sum((jnp.argmax(logits, axis=-1) == g) & valid)
    return nll, corr, z


if __name__ == "__main__":
    key = jax.random.PRNGKey(0)
    # small but non-trivial: exercises >1 row tile, >1 vocab tile, row & vocab padding
    T, B, D, V = 16, 10, 256, 1280

    k1, k2, k3, k4 = jax.random.split(key, 4)
    feed = jax.random.normal(k1, (T, B, D), dtype=jnp.float32)
    weight = 0.05 * jax.random.normal(k2, (V, D), dtype=jnp.float32)   # map_vocab.weight
    bias = 0.01 * jax.random.normal(k3, (V,), dtype=jnp.float32)       # map_vocab.bias
    gold = jax.random.randint(k4, (T, B), 1, V, dtype=jnp.int32)
    gold = gold.at[T - 1, :].set(PAD)                                   # padded positions
    gold = gold.at[T - 2, ::2].set(PAD)
    gold_mask = (gold != PAD).astype(jnp.float32)

    nll, corr, z = classifier_forward(feed, gold, gold_mask, weight, bias,
                                      tile_rows=128, v_tile=512)
    jax.block_until_ready((nll, corr, z))

    nll_r, corr_r, z_r = _reference_forward(feed, gold, gold_mask, weight, bias)
    np.testing.assert_allclose(np.asarray(nll), np.asarray(nll_r), rtol=2e-3, atol=1e-2)
    np.testing.assert_allclose(np.asarray(z), np.asarray(z_r), rtol=2e-3, atol=1e-2)
    assert int(corr) == int(corr_r), (int(corr), int(corr_r))

    print("KERNEL_OK")
</pallas_src>

<mosaic_0001>
module attributes {stable_mosaic.version = 11 : i64} {
  func.func @_classifier_kernel(%arg0: i32, %arg1: i32, %arg2: memref<128x256xbf16, #tpu.memory_space<vmem>>, %arg3: memref<512x256xbf16, #tpu.memory_space<vmem>>, %arg4: memref<1x512xf32, #tpu.memory_space<vmem>>, %arg5: memref<128x1xi32, #tpu.memory_space<vmem>>, %arg6: memref<128x1xf32, #tpu.memory_space<vmem>>, %arg7: memref<1x1xf32, #tpu.memory_space<vmem>>, %arg8: memref<1x1xi32, #tpu.memory_space<vmem>>, %arg9: memref<1x1xf32, #tpu.memory_space<vmem>>, %arg10: memref<128x1xf32, #tpu.memory_space<vmem>>, %arg11: memref<128x1xf32, #tpu.memory_space<vmem>>, %arg12: memref<128x1xf32, #tpu.memory_space<vmem>>, %arg13: memref<128x1xi32, #tpu.memory_space<vmem>>) attributes {dimension_semantics = [#tpu.dimension_semantics<arbitrary>, #tpu.dimension_semantics<arbitrary>], iteration_bounds = array<i64: 2, 3>, scalar_prefetch = 0 : i64, scratch_operands = 4 : i64, tpu.core_type = #tpu.core_type<tc>, window_params = [{transform_indices = @transform_0, window_bounds = array<i64: 128, 256>}, {transform_indices = @transform_1, window_bounds = array<i64: 512, 256>}, {transform_indices = @transform_2, window_bounds = array<i64: 1, 512>}, {transform_indices = @transform_3, window_bounds = array<i64: 128, 1>}, {transform_indices = @transform_4, window_bounds = array<i64: 128, 1>}, {pipeline_mode = #tpu.pipeline_mode<synchronous>, transform_indices = @transform_5, window_bounds = array<i64: 1, 1>}, {pipeline_mode = #tpu.pipeline_mode<synchronous>, transform_indices = @transform_6, window_bounds = array<i64: 1, 1>}, {pipeline_mode = #tpu.pipeline_mode<synchronous>, transform_indices = @transform_7, window_bounds = array<i64: 1, 1>}]} {
    %c0_i32 = arith.constant 0 : i32
    %0 = arith.cmpi eq, %arg0, %c0_i32 : i32
    %c0_i32_0 = arith.constant 0 : i32
    %1 = arith.cmpi eq, %arg1, %c0_i32_0 : i32
    %2 = arith.andi %0, %1 : i1
    %3 = arith.extui %2 : i1 to i32
    %c0_i32_1 = arith.constant 0 : i32
    %4 = arith.cmpi ne, %3, %c0_i32_1 : i32
    scf.if %4 {
      %cst_34 = arith.constant 0.000000e+00 : f32
      %59 = vector.broadcast %cst_34 : f32 to vector<1x1xf32>
      %c0_35 = arith.constant 0 : index
      %c0_36 = arith.constant 0 : index
      %60 = vector.load %arg7[%c0_35, %c0_36] : memref<1x1xf32, #tpu.memory_space<vmem>>, vector<1x1xf32>
      tpu.vector_store %arg7[%c0_35, %c0_36], %59 {strides = array<i32>} : memref<1x1xf32, #tpu.memory_space<vmem>>, vector<1x1xf32>,
      %c0_i32_37 = arith.constant 0 : i32
      %61 = vector.broadcast %c0_i32_37 : i32 to vector<1x1xi32>
      %c0_38 = arith.constant 0 : index
      %c0_39 = arith.constant 0 : index
      %62 = vector.load %arg8[%c0_38, %c0_39] : memref<1x1xi32, #tpu.memory_space<vmem>>, vector<1x1xi32>
      tpu.vector_store %arg8[%c0_38, %c0_39], %61 {strides = array<i32>} : memref<1x1xi32, #tpu.memory_space<vmem>>, vector<1x1xi32>,
      %cst_40 = arith.constant 0.000000e+00 : f32
      %63 = vector.broadcast %cst_40 : f32 to vector<1x1xf32>
      %c0_41 = arith.constant 0 : index
      %c0_42 = arith.constant 0 : index
      %64 = vector.load %arg9[%c0_41, %c0_42] : memref<1x1xf32, #tpu.memory_space<vmem>>, vector<1x1xf32>
      tpu.vector_store %arg9[%c0_41, %c0_42], %63 {strides = array<i32>} : memref<1x1xf32, #tpu.memory_space<vmem>>, vector<1x1xf32>,
    } else {
    }
    %c0_i32_2 = arith.constant 0 : i32
    %5 = arith.cmpi eq, %arg1, %c0_i32_2 : i32
    %6 = arith.extui %5 : i1 to i32
    %c0_i32_3 = arith.constant 0 : i32
    %7 = arith.cmpi ne, %6, %c0_i32_3 : i32
    scf.if %7 {
      %cst_34 = arith.constant 0xFF800000 : f32
      %59 = vector.broadcast %cst_34 : f32 to vector<128x1xf32>
      %c0_35 = arith.constant 0 : index
      %c0_36 = arith.constant 0 : index
      %60 = vector.load %arg10[%c0_35, %c0_36] : memref<128x1xf32, #tpu.memory_space<vmem>>, vector<128x1xf32>
      tpu.vector_store %arg10[%c0_35, %c0_36], %59 {strides = array<i32>} : memref<128x1xf32, #tpu.memory_space<vmem>>, vector<128x1xf32>,
      %cst_37 = arith.constant 0.000000e+00 : f32
      %61 = vector.broadcast %cst_37 : f32 to vector<128x1xf32>
      %c0_38 = arith.constant 0 : index
      %c0_39 = arith.constant 0 : index
      %62 = vector.load %arg11[%c0_38, %c0_39] : memref<128x1xf32, #tpu.memory_space<vmem>>, vector<128x1xf32>
      tpu.vector_store %arg11[%c0_38, %c0_39], %61 {strides = array<i32>} : memref<128x1xf32, #tpu.memory_space<vmem>>, vector<128x1xf32>,
      %cst_40 = arith.constant 0.000000e+00 : f32
      %63 = vector.broadcast %cst_40 : f32 to vector<128x1xf32>
      %c0_41 = arith.constant 0 : index
      %c0_42 = arith.constant 0 : index
      %64 = vector.load %arg12[%c0_41, %c0_42] : memref<128x1xf32, #tpu.memory_space<vmem>>, vector<128x1xf32>
      tpu.vector_store %arg12[%c0_41, %c0_42], %63 {strides = array<i32>} : memref<128x1xf32, #tpu.memory_space<vmem>>, vector<128x1xf32>,
      %c0_i32_43 = arith.constant 0 : i32
      %65 = vector.broadcast %c0_i32_43 : i32 to vector<128x1xi32>
      %c0_44 = arith.constant 0 : index
      %c0_45 = arith.constant 0 : index
      %66 = vector.load %arg13[%c0_44, %c0_45] : memref<128x1xi32, #tpu.memory_space<vmem>>, vector<128x1xi32>
      tpu.vector_store %arg13[%c0_44, %c0_45], %65 {strides = array<i32>} : memref<128x1xi32, #tpu.memory_space<vmem>>, vector<128x1xi32>,
    } else {
    }
    %c0 = arith.constant 0 : index
    %c0_4 = arith.constant 0 : index
    %8 = vector.load %arg2[%c0, %c0_4] : memref<128x256xbf16, #tpu.memory_space<vmem>>, vector<128x256xbf16>
    %c0_5 = arith.constant 0 : index
    %c0_6 = arith.constant 0 : index
    %9 = vector.load %arg3[%c0_5, %c0_6] : memref<512x256xbf16, #tpu.memory_space<vmem>>, vector<512x256xbf16>
    %cst = arith.constant dense<0.000000e+00> : vector<128x512xf32>
    %10 = tpu.matmul %8, %9, %cst {dimension_numbers = #tpu.dot_dimension_numbers<[1], [1], [0], [0], [0, 0, 1, 0], [], []>} : vector<128x256xbf16>, vector<512x256xbf16>, vector<128x512xf32> -> vector<128x512xf32>
    %c0_7 = arith.constant 0 : index
    %c0_8 = arith.constant 0 : index
    %11 = vector.load %arg4[%c0_7, %c0_8] : memref<1x512xf32, #tpu.memory_space<vmem>>, vector<1x512xf32>
    %12 = vector.broadcast %11 : vector<1x512xf32> to vector<128x512xf32>
    %13 = arith.addf %10, %12 : vector<128x512xf32>
    %c0_9 = arith.constant 0 : index
    %c0_10 = arith.constant 0 : index
    %14 = vector.load %arg5[%c0_9, %c0_10] : memref<128x1xi32, #tpu.memory_space<vmem>>, vector<128x1xi32>
    %c512_i32 = arith.constant 512 : i32
    %15 = arith.muli %arg1, %c512_i32 : i32
    %16 = tpu.iota {dimensions = array<i32: 1>} : vector<128x512xi32>
    %cst_11 = arith.constant dense<0xFF800000> : vector<128xf32>
    %17 = vector.multi_reduction <maximumf>, %13, %cst_11 [1] : vector<128x512xf32> to vector<128xf32>
    %18 = vector.shape_cast %17 : vector<128xf32> to vector<128x1xf32>
    %19 = vector.broadcast %18 : vector<128x1xf32> to vector<128x512xf32>
    %20 = arith.cmpf oeq, %13, %19 : vector<128x512xf32>
    %c512_i32_12 = arith.constant 512 : i32
    %21 = vector.broadcast %c512_i32_12 : i32 to vector<128x512xi32>
    %22 = arith.select %20, %16, %21 : vector<128x512xi1>, vector<128x512xi32>
    %cst_13 = arith.constant dense<2147483647> : vector<128xi32>
    %23 = vector.multi_reduction <minsi>, %22, %cst_13 [1] : vector<128x512xi32> to vector<128xi32>
    %24 = vector.shape_cast %23 : vector<128xi32> to vector<128x1xi32>
    %25 = vector.broadcast %15 : i32 to vector<128x1xi32>
    %26 = arith.addi %24, %25 : vector<128x1xi32>
    %c0_14 = arith.constant 0 : index
    %c0_15 = arith.constant 0 : index
    %27 = vector.load %arg10[%c0_14, %c0_15] : memref<128x1xf32, #tpu.memory_space<vmem>>, vector<128x1xf32>
    %28 = arith.maximumf %27, %18 : vector<128x1xf32>
    %29 = arith.cmpf ogt, %18, %27 : vector<128x1xf32>
    %c0_16 = arith.constant 0 : index
    %c0_17 = arith.constant 0 : index
    %30 = vector.load %arg13[%c0_16, %c0_17] : memref<128x1xi32, #tpu.memory_space<vmem>>, vector<128x1xi32>
    %31 = arith.select %29, %26, %30 : vector<128x1xi1>, vector<128x1xi32>
    %c0_18 = arith.constant 0 : index
    %c0_19 = arith.constant 0 : index
    %32 = vector.load %arg13[%c0_18, %c0_19] : memref<128x1xi32, #tpu.memory_space<vmem>>, vector<128x1xi32>
    tpu.vector_store %arg13[%c0_18, %c0_19], %31 {strides = array<i32>} : memref<128x1xi32, #tpu.memory_space<vmem>>, vector<128x1xi32>,
    %c0_20 = arith.constant 0 : index
    %c0_21 = arith.constant 0 : index
    %33 = vector.load %arg11[%c0_20, %c0_21] : memref<128x1xf32, #tpu.memory_space<vmem>>, vector<128x1xf32>
    %34 = arith.subf %27, %28 : vector<128x1xf32>
    %35 = math.exp %34 : vector<128x1xf32>
    %36 = arith.mulf %33, %35 : vector<128x1xf32>
    %37 = vector.broadcast %28 : vector<128x1xf32> to vector<128x512xf32>
    %38 = arith.subf %13, %37 : vector<128x512xf32>
    %39 = math.exp %38 : vector<128x512xf32>
    %cst_22 = arith.constant dense<0.000000e+00> : vector<128xf32>
    %40 = vector.multi_reduction <add>, %39, %cst_22 [1] : vector<128x512xf32> to vector<128xf32>
    %41 = vector.shape_cast %40 : vector<128xf32> to vector<128x1xf32>
    %42 = arith.addf %36, %41 : vector<128x1xf32>
    %c0_23 = arith.constant 0 : index
    %c0_24 = arith.constant 0 : index
    %43 = vector.load %arg11[%c0_23, %c0_24] : memref<128x1xf32, #tpu.memory_space<vmem>>, vector<128x1xf32>
    tpu.vector_store %arg11[%c0_23, %c0_24], %42 {strides = array<i32>} : memref<128x1xf32, #tpu.memory_space<vmem>>, vector<128x1xf32>,
    %c0_25 = arith.constant 0 : index
    %c0_26 = arith.constant 0 : index
    %44 = vector.load %arg10[%c0_25, %c0_26] : memref<128x1xf32, #tpu.memory_space<vmem>>, vector<128x1xf32>
    tpu.vector_store %arg10[%c0_25, %c0_26], %28 {strides = array<i32>} : memref<128x1xf32, #tpu.memory_space<vmem>>, vector<128x1xf32>,
    %45 = vector.broadcast %15 : i32 to vector<128x512xi32>
    %46 = arith.addi %16, %45 : vector<128x512xi32>
    %47 = vector.broadcast %14 : vector<128x1xi32> to vector<128x512xi32>
    %48 = arith.cmpi eq, %46, %47 : vector<128x512xi32>
    %c0_27 = arith.constant 0 : index
    %c0_28 = arith.constant 0 : index
    %49 = vector.load %arg12[%c0_27, %c0_28] : memref<128x1xf32, #tpu.memory_space<vmem>>, vector<128x1xf32>
    %cst_29 = arith.constant 0.000000e+00 : f32
    %50 = vector.broadcast %cst_29 : f32 to vector<128x512xf32>
    %51 = arith.select %48, %13, %50 : vector<128x512xi1>, vector<128x512xf32>
    %cst_30 = arith.constant dense<0.000000e+00> : vector<128xf32>
    %52 = vector.multi_reduction <add>, %51, %cst_30 [1] : vector<128x512xf32> to vector<128xf32>
    %53 = vector.shape_cast %52 : vector<128xf32> to vector<128x1xf32>
    %54 = arith.addf %49, %53 : vector<128x1xf32>
    %c0_31 = arith.constant 0 : index
    %c0_32 = arith.constant 0 : index
    %55 = vector.load %arg12[%c0_31, %c0_32] : memref<128x1xf32, #tpu.memory_space<vmem>>, vector<128x1xf32>
    tpu.vector_store %arg12[%c0_31, %c0_32], %54 {strides = array<i32>} : memref<128x1xf32, #tpu.memory_space<vmem>>, vector<128x1xf32>,
    %c2_i32 = arith.constant 2 : i32
    %56 = arith.cmpi eq, %arg1, %c2_i32 : i32
    %57 = arith.extui %56 : i1 to i32
    %c0_i32_33 = arith.constant 0 : i32
    %58 = arith.cmpi ne, %57, %c0_i32_33 : i32
    scf.if %58 {
      %c0_34 = arith.constant 0 : index
      %c0_35 = arith.constant 0 : index
      %59 = vector.load %arg6[%c0_34, %c0_35] : memref<128x1xf32, #tpu.memory_space<vmem>>, vector<128x1xf32>
      %c0_i32_36 = arith.constant 0 : i32
      %60 = vector.broadcast %c0_i32_36 : i32 to vector<128x1xi32>
      %61 = arith.cmpi ne, %14, %60 : vector<128x1xi32>
      %62 = arith.extui %61 : vector<128x1xi1> to vector<128x1xi32>
      %63 = arith.sitofp %62 : vector<128x1xi32> to vector<128x1xf32>
      %c0_37 = arith.constant 0 : index
      %c0_38 = arith.constant 0 : index
      %64 = vector.load %arg10[%c0_37, %c0_38] : memref<128x1xf32, #tpu.memory_space<vmem>>, vector<128x1xf32>
      %c0_39 = arith.constant 0 : index
      %c0_40 = arith.constant 0 : index
      %65 = vector.load %arg11[%c0_39, %c0_40] : memref<128x1xf32, #tpu.memory_space<vmem>>, vector<128x1xf32>
      %66 = math.log %65 : vector<128x1xf32>
      %67 = arith.addf %64, %66 : vector<128x1xf32>
      %c0_41 = arith.constant 0 : index
      %c0_42 = arith.constant 0 : index
      %68 = vector.load %arg12[%c0_41, %c0_42] : memref<128x1xf32, #tpu.memory_space<vmem>>, vector<128x1xf32>
      %69 = arith.subf %68, %67 : vector<128x1xf32>
      %c0_43 = arith.constant 0 : index
      %c0_44 = arith.constant 0 : index
      %70 = vector.load %arg7[%c0_43, %c0_44] : memref<1x1xf32, #tpu.memory_space<vmem>>, vector<1x1xf32>
      %71 = arith.mulf %69, %59 : vector<128x1xf32>
      %72 = arith.mulf %71, %63 : vector<128x1xf32>
      %73 = vector.shape_cast %72 : vector<128x1xf32> to vector<1x128x1xf32>
      %cst_45 = arith.constant dense<0.000000e+00> : vector<1xf32>
      %74 = vector.multi_reduction <add>, %73, %cst_45 [1, 2] : vector<1x128x1xf32> to vector<1xf32>
      %75 = vector.shape_cast %74 : vector<1xf32> to vector<1x1x1xf32>
      %76 = vector.extract %75[0, 0, 0] : f32 from vector<1x1x1xf32>
      %77 = vector.broadcast %76 : f32 to vector<1x1xf32>
      %cst_46 = arith.constant 0.000000e+00 : f32
      %78 = vector.broadcast %cst_46 : f32 to vector<1x1xf32>
      %79 = arith.subf %78, %77 : vector<1x1xf32>
      %80 = arith.addf %70, %79 : vector<1x1xf32>
      %c0_47 = arith.constant 0 : index
      %c0_48 = arith.constant 0 : index
      %81 = vector.load %arg7[%c0_47, %c0_48] : memref<1x1xf32, #tpu.memory_space<vmem>>, vector<1x1xf32>
      tpu.vector_store %arg7[%c0_47, %c0_48], %80 {strides = array<i32>} : memref<1x1xf32, #tpu.memory_space<vmem>>, vector<1x1xf32>,
      %c0_49 = arith.constant 0 : index
      %c0_50 = arith.constant 0 : index
      %82 = vector.load %arg9[%c0_49, %c0_50] : memref<1x1xf32, #tpu.memory_space<vmem>>, vector<1x1xf32>
      %83 = arith.mulf %67, %59 : vector<128x1xf32>
      %84 = math.absf %83 : vector<128x1xf32>
      %85 = vector.shape_cast %84 : vector<128x1xf32> to vector<1x128x1xf32>
      %cst_51 = arith.constant dense<0.000000e+00> : vector<1xf32>
      %86 = vector.multi_reduction <add>, %85, %cst_51 [1, 2] : vector<1x128x1xf32> to vector<1xf32>
      %87 = vector.shape_cast %86 : vector<1xf32> to vector<1x1x1xf32>
      %88 = vector.extract %87[0, 0, 0] : f32 from vector<1x1x1xf32>
      %89 = vector.broadcast %88 : f32 to vector<1x1xf32>
      %90 = arith.addf %82, %89 : vector<1x1xf32>
      %c0_52 = arith.constant 0 : index
      %c0_53 = arith.constant 0 : index
      %91 = vector.load %arg9[%c0_52, %c0_53] : memref<1x1xf32, #tpu.memory_space<vmem>>, vector<1x1xf32>
      tpu.vector_store %arg9[%c0_52, %c0_53], %90 {strides = array<i32>} : memref<1x1xf32, #tpu.memory_space<vmem>>, vector<1x1xf32>,
      %c0_54 = arith.constant 0 : index
      %c0_55 = arith.constant 0 : index
      %92 = vector.load %arg8[%c0_54, %c0_55] : memref<1x1xi32, #tpu.memory_space<vmem>>, vector<1x1xi32>
      %c0_56 = arith.constant 0 : index
      %c0_57 = arith.constant 0 : index
      %93 = vector.load %arg13[%c0_56, %c0_57] : memref<128x1xi32, #tpu.memory_space<vmem>>, vector<128x1xi32>
      %94 = arith.cmpi eq, %93, %14 : vector<128x1xi32>
      %c0_i32_58 = arith.constant 0 : i32
      %95 = vector.broadcast %c0_i32_58 : i32 to vector<128x1xi32>
      %96 = arith.cmpi ne, %14, %95 : vector<128x1xi32>
      %97 = arith.andi %94, %96 : vector<128x1xi1>
      %98 = arith.extui %97 : vector<128x1xi1> to vector<128x1xi32>
      %99 = vector.shape_cast %98 : vector<128x1xi32> to vector<1x128x1xi32>
      %cst_59 = arith.constant dense<0> : vector<1xi32>
      %100 = vector.multi_reduction <add>, %99, %cst_59 [1, 2] : vector<1x128x1xi32> to vector<1xi32>
      %101 = vector.shape_cast %100 : vector<1xi32> to vector<1x1x1xi32>
      %102 = vector.extract %101[0, 0, 0] : i32 from vector<1x1x1xi32>
      %103 = vector.broadcast %102 : i32 to vector<1x1xi32>
      %104 = arith.addi %92, %103 : vector<1x1xi32>
      %c0_60 = arith.constant 0 : index
      %c0_61 = arith.constant 0 : index
      %105 = vector.load %arg8[%c0_60, %c0_61] : memref<1x1xi32, #tpu.memory_space<vmem>>, vector<1x1xi32>
      tpu.vector_store %arg8[%c0_60, %c0_61], %104 {strides = array<i32>} : memref<1x1xi32, #tpu.memory_space<vmem>>, vector<1x1xi32>,
    } else {
    }
    return
  }
  func.func @transform_0(%arg0: i32, %arg1: i32) -> (i32, i32) {
    %c0_i32 = arith.constant 0 : i32
    %c0_i32_0 = arith.constant 0 : i32
    return %arg0, %c0_i32 : i32, i32
  }
  func.func @transform_1(%arg0: i32, %arg1: i32) -> (i32, i32) {
    %c0_i32 = arith.constant 0 : i32
    %c0_i32_0 = arith.constant 0 : i32
    return %arg1, %c0_i32 : i32, i32
  }
  func.func @transform_2(%arg0: i32, %arg1: i32) -> (i32, i32) {
    %c0_i32 = arith.constant 0 : i32
    %c0_i32_0 = arith.constant 0 : i32
    return %c0_i32, %arg1 : i32, i32
  }
  func.func @transform_3(%arg0: i32, %arg1: i32) -> (i32, i32) {
    %c0_i32 = arith.constant 0 : i32
    %c0_i32_0 = arith.constant 0 : i32
    return %arg0, %c0_i32 : i32, i32
  }
  func.func @transform_4(%arg0: i32, %arg1: i32) -> (i32, i32) {
    %c0_i32 = arith.constant 0 : i32
    %c0_i32_0 = arith.constant 0 : i32
    return %arg0, %c0_i32 : i32, i32
  }
  func.func @transform_5(%arg0: i32, %arg1: i32) -> (i32, i32) {
    %c0_i32 = arith.constant 0 : i32
    %c0_i32_0 = arith.constant 0 : i32
    %c0_i32_1 = arith.constant 0 : i32
    return %c0_i32, %c0_i32_0 : i32, i32
  }
  func.func @transform_6(%arg0: i32, %arg1: i32) -> (i32, i32) {
    %c0_i32 = arith.constant 0 : i32
    %c0_i32_0 = arith.constant 0 : i32
    %c0_i32_1 = arith.constant 0 : i32
    return %c0_i32, %c0_i32_0 : i32, i32
  }
  func.func @transform_7(%arg0: i32, %arg1: i32) -> (i32, i32) {
    %c0_i32 = arith.constant 0 : i32
    %c0_i32_0 = arith.constant 0 : i32
    %c0_i32_1 = arith.constant 0 : i32
    return %c0_i32, %c0_i32_0 : i32, i32
  }
}

</mosaic_0001>

<llo_original>
// kernel: tpu_custom_call.1
$region0: #{tpu_custom_call.1}
  #allocation0 [shape = 'u32[]', space=smem, size = 0x4, offset = 0x4, fixed_abs, tag = 'smem constant byte address 0x4 - core index']
  #allocation1 [shape = 'u32[144,128]{1,0:T(1,128)}', space=vmem, size = 0x12000, scoped, tag = 'internal scratch']
  #allocation2 [shape = 'f32[128,1]{1,0:T(8,128)}', space=vmem, size = 0x10000, scoped, tag = 'scratch operand']
  #allocation3 [shape = 'f32[128,1]{1,0:T(8,128)}', space=vmem, size = 0x10000, scoped, tag = 'scratch operand']
  #allocation4 [shape = 'f32[128,1]{1,0:T(8,128)}', space=vmem, size = 0x10000, scoped, tag = 'scratch operand']
  #allocation5 [shape = 's32[128,1]{1,0:T(8,128)}', space=vmem, size = 0x10000, scoped, tag = 'scratch operand']
  %s0 = inlined_call_operand.vmem [shape: bf16[256,256], index: 0, kind: input, shape index: {}]
  %s1 = inlined_call_operand.hbm [shape: bf16[1536,256], index: 1, kind: input, shape index: {}]
  %s2 = inlined_call_operand.vmem [shape: f32[1,1536], index: 2, kind: input, shape index: {}]
  %s3 = inlined_call_operand.vmem [shape: s32[256,1], index: 3, kind: input, shape index: {}]
  %s4 = inlined_call_operand.vmem [shape: f32[256,1], index: 4, kind: input, shape index: {}]
  %s5 = inlined_call_operand.hbm [shape: f32[1,1], index: 5, kind: output, shape index: {0}]
  %s6 = inlined_call_operand.hbm [shape: s32[1,1], index: 6, kind: output, shape index: {1}]
  %s7 = inlined_call_operand.hbm [shape: f32[1,1], index: 7, kind: output, shape index: {2}]
  %8 = xla_tuple %s5, %s6, %s7
  %s9 = sld [smem:[#allocation0]]
  $region85: #{tpu_custom_call.1} parent=0
    _
  %s11 = ssub.s32 1, %s9
  %s12 = scalar_select 0, %s11, %s9
  $region1: #{tpu_custom_call.1} parent=0
    #allocation6 [shape = 'u8[524288]{0}', space=vmem, size = 0x80000, scoped, tag = 'input window, operand 1']
    #allocation7 [shape = 's32[2]{0}', space=sflag, size = 0x8, scoped, tag = 'scoped memory for tpu_custom_call.1']
    #allocation8 [shape = 's32[2]{0}', space=sflag, size = 0x8, scoped, tag = 'scoped memory for tpu_custom_call.1']
    #allocation9 [shape = 'u8[512]{0}', space=vmem, size = 0x400, scoped, tag = 'output window, operand 0, single buffered']
    #allocation10 [shape = 'u8[512]{0}', space=vmem, size = 0x400, scoped, tag = 'output window, operand 1, single buffered']
    #allocation11 [shape = 's32[1]{0}', space=sflag, size = 0x4, scoped, tag = 'scoped memory for tpu_custom_call.1']
    #allocation12 [shape = 'u8[512]{0}', space=vmem, size = 0x400, scoped, tag = 'output window, operand 2, single buffered']
    %13 = vsyncpa [#allocation7], 0
    %s14 = scalar_lea.sflag [#allocation7], 1
    %15 = vsyncpa %s14, 0
    %16 = vsyncpa [#allocation8], 0
    %17 = vsyncpa [#allocation11], 0
    loop: start=0, step=1, limit=8
    $region2: #{tpu_custom_call.1} parent=1 // loop_pre_header
      _
    $region3: #{tpu_custom_call.1} parent=1 // loop_header
      %s19 = sphi 0, %s23
      %p20 = scmp.ge.s32.totalorder %s19, 8
      %s26 = sphi 0, %s38
      %s27 = sphi 0, %s34
      %s28 = sphi 0, %s26
      %s29 = sphi 0, %s27
      %s30 = sphi 0, %s28
      %s31 = sphi 0, %s29
      %s41 = sphi 0, %s43
      %s44 = sphi 0, %s41
      %s45 = sphi 0, %s44
      %s61 = sphi 0, %s45
      %s67 = sphi 0, %s69
      %s70 = sphi 0, %s67
      %s71 = sphi 0, %s70
      %s87 = sphi 0, %s71
      %s93 = sphi 0, %s95
      %s96 = sphi 0, %s93
      %s97 = sphi 0, %s96
      %s113 = sphi 0, %s97
      %s119 = sphi 0, %s121
      %s122 = sphi 0, %s119
      %s123 = sphi 0, %s122
      %s139 = sphi 0, %s123
      %s145 = sphi 0, %s147
      %s148 = sphi 0, %s145
      %s149 = sphi 0, %s148
      %s165 = sphi 0, %s149
      %s169 = sphi 0, %s169
      %s171 = sphi 0, %s169
      %s172 = sphi 0, %s171
      %s186 = sphi 0, %s172
      %s190 = sphi 0, %s190
      %s192 = sphi 0, %s190
      %s193 = sphi 0, %s192
      %s207 = sphi 0, %s193
      %s211 = sphi 0, %s211
      %s213 = sphi 0, %s211
      %s214 = sphi 0, %s213
      %s228 = sphi 0, %s214
    $region4: #{tpu_custom_call.1} parent=1 // loop_header_branch
      %22 = sbr.rel (%p20) target = $region8
    $region5: #{tpu_custom_call.1} parent=1 // loop_body
      %s24 = ssub.s32 %s19, 1
      %s25 = ssub.s32 %s19, 2
      %s32 = sadd.s32 1, %s27
      %p33 = scmp.ge.s32.totalorder %s32, 3
      %s34 = scalar_select %p33, 0, %s32
      %s35 = sadd.s32 1, %s26
      %s36 = scalar_select %p33, %s35, %s26
      %p37 = scmp.ge.s32.totalorder %s36, 2
      %s38 = scalar_select %p37, 0, %s36
      %s39 = ssub.s32 %s26, %s38
      %p40 = scmp.eq.s32.totalorder %s39, 0
      %s42 = sadd.s32 %s41, 1
      %s43 = scalar_select %p40, %s41, %s42
      %p46 = pneg %p40
      %p47 = scmp.eq.s32.totalorder %s19, 5
      %p48 = por %p46, %p47
      %p49 = scmp.ne.s32.totalorder %s41, %s44
      %p50 = scmp.eq.s32.totalorder %s19, 0
      %p51 = por %p49, %p50
      %p52 = scmp.ne.s32.totalorder %s41, %s44
      %p53 = scmp.eq.s32.totalorder %s24, 5
      %p54 = por %p52, %p53
      %p55 = scmp.ne.s32.totalorder %s44, %s45
      %p56 = scmp.eq.s32.totalorder %s24, 0
      %p57 = por %p55, %p56
      %p58 = scmp.ne.s32.totalorder %s44, %s45
      %p59 = scmp.eq.s32.totalorder %s25, 5
      %p60 = por %p58, %p59
      %p62 = scmp.ne.s32.totalorder %s45, %s61
      %p63 = scmp.eq.s32.totalorder %s25, 0
      %p64 = por %p62, %p63
      %s65 = ssub.s32 %s27, %s34
      %p66 = scmp.eq.s32.totalorder %s65, 0
      %s68 = sadd.s32 %s67, 1
      %s69 = scalar_select %p66, %s67, %s68
      %p72 = pneg %p66
      %p73 = scmp.eq.s32.totalorder %s19, 5
      %p74 = por %p72, %p73
      %p75 = scmp.ne.s32.totalorder %s67, %s70
      %p76 = scmp.eq.s32.totalorder %s19, 0
      %p77 = por %p75, %p76
      %p78 = scmp.ne.s32.totalorder %s67, %s70
      %p79 = scmp.eq.s32.totalorder %s24, 5
      %p80 = por %p78, %p79
      %p81 = scmp.ne.s32.totalorder %s70, %s71
      %p82 = scmp.eq.s32.totalorder %s24, 0
      %p83 = por %p81, %p82
      %p84 = scmp.ne.s32.totalorder %s70, %s71
      %p85 = scmp.eq.s32.totalorder %s25, 5
      %p86 = por %p84, %p85
      %p88 = scmp.ne.s32.totalorder %s71, %s87
      %p89 = scmp.eq.s32.totalorder %s25, 0
      %p90 = por %p88, %p89
      %s91 = ssub.s32 %s27, %s34
      %p92 = scmp.eq.s32.totalorder %s91, 0
      %s94 = sadd.s32 %s93, 1
      %s95 = scalar_select %p92, %s93, %s94
      %p98 = pneg %p92
      %p99 = scmp.eq.s32.totalorder %s19, 5
      %p100 = por %p98, %p99
      %p101 = scmp.ne.s32.totalorder %s93, %s96
      %p102 = scmp.eq.s32.totalorder %s19, 0
      %p103 = por %p101, %p102
      %p104 = scmp.ne.s32.totalorder %s93, %s96
      %p105 = scmp.eq.s32.totalorder %s24, 5
      %p106 = por %p104, %p105
      %p107 = scmp.ne.s32.totalorder %s96, %s97
      %p108 = scmp.eq.s32.totalorder %s24, 0
      %p109 = por %p107, %p108
      %p110 = scmp.ne.s32.totalorder %s96, %s97
      %p111 = scmp.eq.s32.totalorder %s25, 5
      %p112 = por %p110, %p111
      %p114 = scmp.ne.s32.totalorder %s97, %s113
      %p115 = scmp.eq.s32.totalorder %s25, 0
      %p116 = por %p114, %p115
      %s117 = ssub.s32 %s26, %s38
      %p118 = scmp.eq.s32.totalorder %s117, 0
      %s120 = sadd.s32 %s119, 1
      %s121 = scalar_select %p118, %s119, %s120
      %p124 = pneg %p118
      %p125 = scmp.eq.s32.totalorder %s19, 5
      %p126 = por %p124, %p125
      %p127 = scmp.ne.s32.totalorder %s119, %s122
      %p128 = scmp.eq.s32.totalorder %s19, 0
      %p129 = por %p127, %p128
      %p130 = scmp.ne.s32.totalorder %s119, %s122
      %p131 = scmp.eq.s32.totalorder %s24, 5
      %p132 = por %p130, %p131
      %p133 = scmp.ne.s32.totalorder %s122, %s123
      %p134 = scmp.eq.s32.totalorder %s24, 0
      %p135 = por %p133, %p134
      %p136 = scmp.ne.s32.totalorder %s122, %s123
      %p137 = scmp.eq.s32.totalorder %s25, 5
      %p138 = por %p136, %p137
      %p140 = scmp.ne.s32.totalorder %s123, %s139
      %p141 = scmp.eq.s32.totalorder %s25, 0
      %p142 = por %p140, %p141
      %s143 = ssub.s32 %s26, %s38
      %p144 = scmp.eq.s32.totalorder %s143, 0
      %s146 = sadd.s32 %s145, 1
      %s147 = scalar_select %p144, %s145, %s146
      %p150 = pneg %p144
      %p151 = scmp.eq.s32.totalorder %s19, 5
      %p152 = por %p150, %p151
      %p153 = scmp.ne.s32.totalorder %s145, %s148
      %p154 = scmp.eq.s32.totalorder %s19, 0
      %p155 = por %p153, %p154
      %p156 = scmp.ne.s32.totalorder %s145, %s148
      %p157 = scmp.eq.s32.totalorder %s24, 5
      %p158 = por %p156, %p157
      %p159 = scmp.ne.s32.totalorder %s148, %s149
      %p160 = scmp.eq.s32.totalorder %s24, 0
      %p161 = por %p159, %p160
      %p162 = scmp.ne.s32.totalorder %s148, %s149
      %p163 = scmp.eq.s32.totalorder %s25, 5
      %p164 = por %p162, %p163
      %p166 = scmp.ne.s32.totalorder %s149, %s165
      %p167 = scmp.eq.s32.totalorder %s25, 0
      %p168 = por %p166, %p167
      %s170 = sadd.s32 %s169, 1
      %p173 = scmp.eq.s32.totalorder %s19, 5
      %p174 = scmp.ne.s32.totalorder %s169, %s171
      %p175 = scmp.eq.s32.totalorder %s19, 0
      %p176 = por %p174, %p175
      %p177 = scmp.ne.s32.totalorder %s169, %s171
      %p178 = scmp.eq.s32.totalorder %s24, 5
      %p179 = por %p177, %p178
      %p180 = scmp.ne.s32.totalorder %s171, %s172
      %p181 = scmp.eq.s32.totalorder %s24, 0
      %p182 = por %p180, %p181
      %p183 = scmp.ne.s32.totalorder %s171, %s172
      %p184 = scmp.eq.s32.totalorder %s25, 5
      %p185 = por %p183, %p184
      %p187 = scmp.ne.s32.totalorder %s172, %s186
      %p188 = scmp.eq.s32.totalorder %s25, 0
      %p189 = por %p187, %p188
      %s191 = sadd.s32 %s190, 1
      %p194 = scmp.eq.s32.totalorder %s19, 5
      %p195 = scmp.ne.s32.totalorder %s190, %s192
      %p196 = scmp.eq.s32.totalorder %s19, 0
      %p197 = por %p195, %p196
      %p198 = scmp.ne.s32.totalorder %s190, %s192
      %p199 = scmp.eq.s32.totalorder %s24, 5
      %p200 = por %p198, %p199
      %p201 = scmp.ne.s32.totalorder %s192, %s193
      %p202 = scmp.eq.s32.totalorder %s24, 0
      %p203 = por %p201, %p202
      %p204 = scmp.ne.s32.totalorder %s192, %s193
      %p205 = scmp.eq.s32.totalorder %s25, 5
      %p206 = por %p204, %p205
      %p208 = scmp.ne.s32.totalorder %s193, %s207
      %p209 = scmp.eq.s32.totalorder %s25, 0
      %p210 = por %p208, %p209
      %s212 = sadd.s32 %s211, 1
      %p215 = scmp.eq.s32.totalorder %s19, 5
      %p216 = scmp.ne.s32.totalorder %s211, %s213
      %p217 = scmp.eq.s32.totalorder %s19, 0
      %p218 = por %p216, %p217
      %p219 = scmp.ne.s32.totalorder %s211, %s213
      %p220 = scmp.eq.s32.totalorder %s24, 5
      %p221 = por %p219, %p220
      %p222 = scmp.ne.s32.totalorder %s213, %s214
      %p223 = scmp.eq.s32.totalorder %s24, 0
      %p224 = por %p222, %p223
      %p225 = scmp.ne.s32.totalorder %s213, %s214
      %p226 = scmp.eq.s32.totalorder %s25, 5
      %p227 = por %p225, %p226
      %p229 = scmp.ne.s32.totalorder %s214, %s228
      %p230 = scmp.eq.s32.totalorder %s25, 0
      %p231 = por %p229, %p230
      %p232 = scmp.le.s32.totalorder 1, %s19
      %p233 = scmp.lt.s32.totalorder %s19, 7
      %p234 = pnand %p232, %p233
      %p235 = pneg %p234
      // Predicated region
      $region9: #{tpu_custom_call.1} parent=5 // pred_check
        _
      $region10: #{tpu_custom_call.1} parent=5 // pred_check_branch
        %237 = sbr.rel (%p234) target = $region12
      $region11: #{tpu_custom_call.1} parent=5 // pred_region
        %s238 = ssub.s32 %s19, 1
      $region12: #{tpu_custom_call.1} parent=5 // pred_fallthru
        _
      %p239 = scmp.lt.s32.totalorder %s19, 6
      // Predicated region
      $region13: #{tpu_custom_call.1} parent=5 // pred_check
        %p240 = pneg %p239
      $region14: #{tpu_custom_call.1} parent=5 // pred_check_branch
        %242 = sbr.rel (%p240) target = $region16
      $region15: #{tpu_custom_call.1} parent=5 // pred_region
        // Predicated region
        $region17: #{tpu_custom_call.1} parent=15 // pred_check
          %p243 = pneg %p51
        $region18: #{tpu_custom_call.1} parent=15 // pred_check_branch
          %245 = sbr.rel (%p243) target = $region20
        $region19: #{tpu_custom_call.1} parent=15 // pred_region
          %s246 = smul.u32 16, %s26
          %p247 = scmp.lt.s32.totalorder %s246, 31
          %s248 = scalar_select %p247, %s246, 31
          %s249 = smul.addr %s248, 2
          %s250 = smul.addr %s249, 4
          %s251 = scalar_lea.vmem %s0, %s250
          %s252 = smul.u32 16, %s26
        $region20: #{tpu_custom_call.1} parent=15 // pred_fallthru
          _
        // Predicated region
        $region21: #{tpu_custom_call.1} parent=15 // pred_check
          %p253 = pneg %p77
        $region22: #{tpu_custom_call.1} parent=15 // pred_check_branch
          %255 = sbr.rel (%p253) target = $region24
        $region23: #{tpu_custom_call.1} parent=15 // pred_region
          %s256 = sand.u32 %s67, 1
          %s257 = scalar_lea.sflag [#allocation7], %s256
          %s258 = sand.u32 %s67, 1
          %s259 = smul.addr %s258, 512
          %s260 = scalar_lea.vmem [#allocation6], %s259
          %s261 = smul.u32 64, %s27
          %s263 = ssub.s32 8192, 8192
          %264 = vsyncadd %s257, %s263
          %s265 = smul.addr %s261, 2
          %s266 = smul.addr %s265, 64
          %s267 = scalar_lea.hbm %s1, %s266
          %s268 = sshll.u32 %s260, 4
          %s269 = int_to_ptr.vmem [resolvable:$true] %s268
          %274 = dma.hbm_to_vmem [thread:$0]  %s267, 8192, %s269, %s257, 128, 128, 8
        $region24: #{tpu_custom_call.1} parent=15 // pred_fallthru
          _
        // Predicated region
        $region25: #{tpu_custom_call.1} parent=15 // pred_check
          %p275 = pneg %p103
        $region26: #{tpu_custom_call.1} parent=15 // pred_check_branch
          %277 = sbr.rel (%p275) target = $region28
        $region27: #{tpu_custom_call.1} parent=15 // pred_region
          %s278 = smul.u32 4, %s27
          %p279 = scmp.lt.s32.totalorder %s278, 11
          %s280 = scalar_select %p279, %s278, 11
          %s281 = scalar_lea.vmem %s2, %s280
          %s282 = smul.u32 4, %s27
        $region28: #{tpu_custom_call.1} parent=15 // pred_fallthru
          _
        // Predicated region
        $region29: #{tpu_custom_call.1} parent=15 // pred_check
          %p283 = pneg %p129
        $region30: #{tpu_custom_call.1} parent=15 // pred_check_branch
          %285 = sbr.rel (%p283) target = $region32
        $region31: #{tpu_custom_call.1} parent=15 // pred_region
          %s286 = smul.u32 16, %s26
          %p287 = scmp.lt.s32.totalorder %s286, 31
          %s288 = scalar_select %p287, %s286, 31
          %s289 = smul.addr %s288, 8
          %s290 = scalar_lea.vmem %s3, %s289
          %s291 = smul.u32 16, %s26
        $region32: #{tpu_custom_call.1} parent=15 // pred_fallthru
          _
        // Predicated region
        $region33: #{tpu_custom_call.1} parent=15 // pred_check
          %p292 = pneg %p155
        $region34: #{tpu_custom_call.1} parent=15 // pred_check_branch
          %294 = sbr.rel (%p292) target = $region36
        $region35: #{tpu_custom_call.1} parent=15 // pred_region
          %s295 = smul.u32 16, %s26
          %p296 = scmp.lt.s32.totalorder %s295, 31
          %s297 = scalar_select %p296, %s295, 31
          %s298 = smul.addr %s297, 8
          %s299 = scalar_lea.vmem %s4, %s298
          %s300 = smul.u32 16, %s26
        $region36: #{tpu_custom_call.1} parent=15 // pred_fallthru
          _
      $region16: #{tpu_custom_call.1} parent=5 // pred_fallthru
        _
      %p301 = scmp.le.s32.totalorder 1, %s19
      %p302 = scmp.lt.s32.totalorder %s19, 7
      %p303 = pnand %p301, %p302
      %p304 = pneg %p303
      // Predicated region
      $region37: #{tpu_custom_call.1} parent=5 // pred_check
        _
      $region38: #{tpu_custom_call.1} parent=5 // pred_check_branch
        %306 = sbr.rel (%p303) target = $region40
      $region39: #{tpu_custom_call.1} parent=5 // pred_region
        %s307 = ssub.s32 %s19, 1
        %s308 = sand.u32 %s70, 1
        %s309 = scalar_lea.sflag [#allocation7], %s308
        %s310 = sand.u32 %s70, 1
        %s311 = smul.addr %s310, 512
        %s312 = scalar_lea.vmem [#allocation6], %s311
        // Predicated region
        $region41: #{tpu_custom_call.1} parent=39 // pred_check
          %p313 = pneg %p83
        $region42: #{tpu_custom_call.1} parent=39 // pred_check_branch
          %315 = sbr.rel (%p313) target = $region44
        $region43: #{tpu_custom_call.1} parent=39 // pred_region
          %316 = dma.done %s309, 8192
        $region44: #{tpu_custom_call.1} parent=39 // pred_fallthru
          _
        %s317 = smul.u32 16, %s28
        %p318 = scmp.lt.s32.totalorder %s317, 31
        %s319 = scalar_select %p318, %s317, 31
        %s320 = smul.addr %s319, 2
        %s321 = smul.addr %s320, 4
        %s322 = scalar_lea.vmem %s0, %s321
        %p323 = pneg %p57
        %p324 = pneg %p54
        %s325 = sand.u32 %s70, 1
        %s326 = scalar_lea.sflag [#allocation7], %s325
        %s327 = sand.u32 %s70, 1
        %s328 = smul.addr %s327, 512
        %s329 = scalar_lea.vmem [#allocation6], %s328
        %p330 = pneg %p83
        %p331 = pneg %p80
        %s332 = smul.u32 4, %s29
        %p333 = scmp.lt.s32.totalorder %s332, 11
        %s334 = scalar_select %p333, %s332, 11
        %s335 = scalar_lea.vmem %s2, %s334
        %p336 = pneg %p109
        %p337 = pneg %p106
        %s338 = smul.u32 16, %s28
        %p339 = scmp.lt.s32.totalorder %s338, 31
        %s340 = scalar_select %p339, %s338, 31
        %s341 = smul.addr %s340, 8
        %s342 = scalar_lea.vmem %s3, %s341
        %p343 = pneg %p135
        %p344 = pneg %p132
        %s345 = smul.u32 16, %s28
        %p346 = scmp.lt.s32.totalorder %s345, 31
        %s347 = scalar_select %p346, %s345, 31
        %s348 = smul.addr %s347, 8
        %s349 = scalar_lea.vmem %s4, %s348
        %p350 = pneg %p161
        %p351 = pneg %p158
        %p352 = pneg %p182
        %p353 = pneg %p179
        %p354 = pneg %p203
        %p355 = pneg %p200
        %p356 = pneg %p224
        %p357 = pneg %p221
        %s358 = smul.u32 16, %s28
        %p359 = scmp.lt.s32.totalorder %s358, 31
        %s360 = scalar_select %p359, %s358, 31
        %s361 = smul.addr %s360, 2
        %s362 = smul.addr %s361, 4
        %s363 = scalar_lea.vmem %s0, %s362
        %s364 = smul.u32 16, %s28
        %s365 = smul.u32 64, %s29
        %s366 = smul.u32 4, %s29
        %p367 = scmp.lt.s32.totalorder %s366, 11
        %s368 = scalar_select %p367, %s366, 11
        %s369 = scalar_lea.vmem %s2, %s368
        %s370 = smul.u32 4, %s29
        %s371 = smul.u32 16, %s28
        %p372 = scmp.lt.s32.totalorder %s371, 31
        %s373 = scalar_select %p372, %s371, 31
        %s374 = smul.addr %s373, 8
        %s375 = scalar_lea.vmem %s3, %s374
        %s376 = smul.u32 16, %s28
        %s377 = smul.u32 16, %s28
        %p378 = scmp.lt.s32.totalorder %s377, 31
        %s379 = scalar_select %p378, %s377, 31
        %s380 = smul.addr %s379, 8
        %s381 = scalar_lea.vmem %s4, %s380
        %s382 = smul.u32 16, %s28
        %p383 = scmp.eq.s32.totalorder %s28, 0
        %p384 = scmp.eq.s32.totalorder %s29, 0
        %p385 = pnand %p383, %p384
        %p386 = pneg %p385
        // Predicated region
        $region45: #{tpu_custom_call.1} parent=39 // pred_check
          _
        $region46: #{tpu_custom_call.1} parent=39 // pred_check_branch
          %388 = sbr.rel (%p385) target = $region48
        $region47: #{tpu_custom_call.1} parent=39 // pred_region
          %vm389 = vcmask 0
          %390 = vst.msk [vmem:[#allocation9] sm:$0x1] %vm389, 0.0
          %391 = vst.msk [vmem:[#allocation10] sm:$0x1] %vm389, 0
          %392 = vst.msk [vmem:[#allocation12] sm:$0x1] %vm389, 0.0
        $region48: #{tpu_custom_call.1} parent=39 // pred_fallthru
          _
        // Predicated region
        $region49: #{tpu_custom_call.1} parent=39 // pred_check
          %p393 = pneg %p384
        $region50: #{tpu_custom_call.1} parent=39 // pred_check_branch
          %395 = sbr.rel (%p393) target = $region52
        $region51: #{tpu_custom_call.1} parent=39 // pred_region
          %vm396 = vcmask 7168
          %397 = vst.msk [vmem:[#allocation2] sm:$0xff] %vm396, -inf
          %398 = vst.msk [vmem:[#allocation2 + $0x8] sm:$0xff] %vm396, -inf
          %399 = vst.msk [vmem:[#allocation2 + $0x10] sm:$0xff] %vm396, -inf
          %400 = vst.msk [vmem:[#allocation2 + $0x18] sm:$0xff] %vm396, -inf
          %401 = vst.msk [vmem:[#allocation2 + $0x20] sm:$0xff] %vm396, -inf
          %402 = vst.msk [vmem:[#allocation2 + $0x28] sm:$0xff] %vm396, -inf
          %403 = vst.msk [vmem:[#allocation2 + $0x30] sm:$0xff] %vm396, -inf
          %404 = vst.msk [vmem:[#allocation2 + $0x38] sm:$0xff] %vm396, -inf
          %405 = vst.msk [vmem:[#allocation2 + $0x40] sm:$0xff] %vm396, -inf
          %406 = vst.msk [vmem:[#allocation2 + $0x48] sm:$0xff] %vm396, -inf
          %407 = vst.msk [vmem:[#allocation2 + $0x50] sm:$0xff] %vm396, -inf
          %408 = vst.msk [vmem:[#allocation2 + $0x58] sm:$0xff] %vm396, -inf
          %409 = vst.msk [vmem:[#allocation2 + $0x60] sm:$0xff] %vm396, -inf
          %410 = vst.msk [vmem:[#allocation2 + $0x68] sm:$0xff] %vm396, -inf
          %411 = vst.msk [vmem:[#allocation2 + $0x70] sm:$0xff] %vm396, -inf
          %412 = vst.msk [vmem:[#allocation2 + $0x78] sm:$0xff] %vm396, -inf
          %413 = vst.msk [vmem:[#allocation3] sm:$0xff] %vm396, 0.0
          %414 = vst.msk [vmem:[#allocation3 + $0x8] sm:$0xff] %vm396, 0.0
          %415 = vst.msk [vmem:[#allocation3 + $0x10] sm:$0xff] %vm396, 0.0
          %416 = vst.msk [vmem:[#allocation3 + $0x18] sm:$0xff] %vm396, 0.0
          %417 = vst.msk [vmem:[#allocation3 + $0x20] sm:$0xff] %vm396, 0.0
          %418 = vst.msk [vmem:[#allocation3 + $0x28] sm:$0xff] %vm396, 0.0
          %419 = vst.msk [vmem:[#allocation3 + $0x30] sm:$0xff] %vm396, 0.0
          %420 = vst.msk [vmem:[#allocation3 + $0x38] sm:$0xff] %vm396, 0.0
          %421 = vst.msk [vmem:[#allocation3 + $0x40] sm:$0xff] %vm396, 0.0
          %422 = vst.msk [vmem:[#allocation3 + $0x48] sm:$0xff] %vm396, 0.0
          %423 = vst.msk [vmem:[#allocation3 + $0x50] sm:$0xff] %vm396, 0.0
          %424 = vst.msk [vmem:[#allocation3 + $0x58] sm:$0xff] %vm396, 0.0
          %425 = vst.msk [vmem:[#allocation3 + $0x60] sm:$0xff] %vm396, 0.0
          %426 = vst.msk [vmem:[#allocation3 + $0x68] sm:$0xff] %vm396, 0.0
          %427 = vst.msk [vmem:[#allocation3 + $0x70] sm:$0xff] %vm396, 0.0
          %428 = vst.msk [vmem:[#allocation3 + $0x78] sm:$0xff] %vm396, 0.0
          %429 = vst.msk [vmem:[#allocation4] sm:$0xff] %vm396, 0.0
          %430 = vst.msk [vmem:[#allocation4 + $0x8] sm:$0xff] %vm396, 0.0
          %431 = vst.msk [vmem:[#allocation4 + $0x10] sm:$0xff] %vm396, 0.0
          %432 = vst.msk [vmem:[#allocation4 + $0x18] sm:$0xff] %vm396, 0.0
          %433 = vst.msk [vmem:[#allocation4 + $0x20] sm:$0xff] %vm396, 0.0
          %434 = vst.msk [vmem:[#allocation4 + $0x28] sm:$0xff] %vm396, 0.0
          %435 = vst.msk [vmem:[#allocation4 + $0x30] sm:$0xff] %vm396, 0.0
          %436 = vst.msk [vmem:[#allocation4 + $0x38] sm:$0xff] %vm396, 0.0
          %437 = vst.msk [vmem:[#allocation4 + $0x40] sm:$0xff] %vm396, 0.0
          %438 = vst.msk [vmem:[#allocation4 + $0x48] sm:$0xff] %vm396, 0.0
          %439 = vst.msk [vmem:[#allocation4 + $0x50] sm:$0xff] %vm396, 0.0
          %440 = vst.msk [vmem:[#allocation4 + $0x58] sm:$0xff] %vm396, 0.0
          %441 = vst.msk [vmem:[#allocation4 + $0x60] sm:$0xff] %vm396, 0.0
          %442 = vst.msk [vmem:[#allocation4 + $0x68] sm:$0xff] %vm396, 0.0
          %443 = vst.msk [vmem:[#allocation4 + $0x70] sm:$0xff] %vm396, 0.0
          %444 = vst.msk [vmem:[#allocation4 + $0x78] sm:$0xff] %vm396, 0.0
          %445 = vst.msk [vmem:[#allocation5] sm:$0xff] %vm396, 0
          %446 = vst.msk [vmem:[#allocation5 + $0x8] sm:$0xff] %vm396, 0
          %447 = vst.msk [vmem:[#allocation5 + $0x10] sm:$0xff] %vm396, 0
          %448 = vst.msk [vmem:[#allocation5 + $0x18] sm:$0xff] %vm396, 0
          %449 = vst.msk [vmem:[#allocation5 + $0x20] sm:$0xff] %vm396, 0
          %450 = vst.msk [vmem:[#allocation5 + $0x28] sm:$0xff] %vm396, 0
          %451 = vst.msk [vmem:[#allocation5 + $0x30] sm:$0xff] %vm396, 0
          %452 = vst.msk [vmem:[#allocation5 + $0x38] sm:$0xff] %vm396, 0
          %453 = vst.msk [vmem:[#allocation5 + $0x40] sm:$0xff] %vm396, 0
          %454 = vst.msk [vmem:[#allocation5 + $0x48] sm:$0xff] %vm396, 0
          %455 = vst.msk [vmem:[#allocation5 + $0x50] sm:$0xff] %vm396, 0
          %456 = vst.msk [vmem:[#allocation5 + $0x58] sm:$0xff] %vm396, 0
          %457 = vst.msk [vmem:[#allocation5 + $0x60] sm:$0xff] %vm396, 0
          %458 = vst.msk [vmem:[#allocation5 + $0x68] sm:$0xff] %vm396, 0
          %459 = vst.msk [vmem:[#allocation5 + $0x70] sm:$0xff] %vm396, 0
          %460 = vst.msk [vmem:[#allocation5 + $0x78] sm:$0xff] %vm396, 0
        $region52: #{tpu_custom_call.1} parent=39 // pred_fallthru
          _
        %v461 = vld [vmem:[%s363] sm:$0xff]
        %v462 = vld [vmem:[%s363 + $0x8] sm:$0xff]
        %v463 = vld [vmem:[%s363 + $0x10] sm:$0xff]
        %v464 = vld [vmem:[%s363 + $0x18] sm:$0xff]
        %v465 = vld [vmem:[%s363 + $0x20] sm:$0xff]
        %v466 = vld [vmem:[%s363 + $0x28] sm:$0xff]
        %v467 = vld [vmem:[%s363 + $0x30] sm:$0xff]
        %v468 = vld [vmem:[%s363 + $0x38] sm:$0xff]
        %v469 = vld [vmem:[%s363 + $0x40] sm:$0xff]
        %v470 = vld [vmem:[%s363 + $0x48] sm:$0xff]
        %v471 = vld [vmem:[%s363 + $0x50] sm:$0xff]
        %v472 = vld [vmem:[%s363 + $0x58] sm:$0xff]
        %v473 = vld [vmem:[%s363 + $0x60] sm:$0xff]
        %v474 = vld [vmem:[%s363 + $0x68] sm:$0xff]
        %v475 = vld [vmem:[%s363 + $0x70] sm:$0xff]
        %v476 = vld [vmem:[%s363 + $0x78] sm:$0xff]
        %v477 = vld [vmem:[%s312] sm:$0xff]
        %v478 = vld [vmem:[%s312 + $0x8] sm:$0xff]
        %v479 = vld [vmem:[%s312 + $0x10] sm:$0xff]
        %v480 = vld [vmem:[%s312 + $0x18] sm:$0xff]
        %v481 = vld [vmem:[%s312 + $0x20] sm:$0xff]
        %v482 = vld [vmem:[%s312 + $0x28] sm:$0xff]
        %v483 = vld [vmem:[%s312 + $0x30] sm:$0xff]
        %v484 = vld [vmem:[%s312 + $0x38] sm:$0xff]
        %v485 = vld [vmem:[%s312 + $0x40] sm:$0xff]
        %v486 = vld [vmem:[%s312 + $0x48] sm:$0xff]
        %v487 = vld [vmem:[%s312 + $0x50] sm:$0xff]
        %v488 = vld [vmem:[%s312 + $0x58] sm:$0xff]
        %v489 = vld [vmem:[%s312 + $0x60] sm:$0xff]
        %v490 = vld [vmem:[%s312 + $0x68] sm:$0xff]
        %v491 = vld [vmem:[%s312 + $0x70] sm:$0xff]
        %v492 = vld [vmem:[%s312 + $0x78] sm:$0xff]
        %v493 = vld [vmem:[%s312 + $0x80] sm:$0xff]
        %v494 = vld [vmem:[%s312 + $0x88] sm:$0xff]
        %v495 = vld [vmem:[%s312 + $0x90] sm:$0xff]
        %v496 = vld [vmem:[%s312 + $0x98] sm:$0xff]
        %v497 = vld [vmem:[%s312 + $0xa0] sm:$0xff]
        %v498 = vld [vmem:[%s312 + $0xa8] sm:$0xff]
        %v499 = vld [vmem:[%s312 + $0xb0] sm:$0xff]
        %v500 = vld [vmem:[%s312 + $0xb8] sm:$0xff]
        %v501 = vld [vmem:[%s312 + $0xc0] sm:$0xff]
        %v502 = vld [vmem:[%s312 + $0xc8] sm:$0xff]
        %v503 = vld [vmem:[%s312 + $0xd0] sm:$0xff]
        %v504 = vld [vmem:[%s312 + $0xd8] sm:$0xff]
        %v505 = vld [vmem:[%s312 + $0xe0] sm:$0xff]
        %v506 = vld [vmem:[%s312 + $0xe8] sm:$0xff]
        %v507 = vld [vmem:[%s312 + $0xf0] sm:$0xff]
        %v508 = vld [vmem:[%s312 + $0xf8] sm:$0xff]
        %v509 = vld [vmem:[%s312 + $0x100] sm:$0xff]
        %v510 = vld [vmem:[%s312 + $0x108] sm:$0xff]
        %v511 = vld [vmem:[%s312 + $0x110] sm:$0xff]
        %v512 = vld [vmem:[%s312 + $0x118] sm:$0xff]
        %v513 = vld [vmem:[%s312 + $0x120] sm:$0xff]
        %v514 = vld [vmem:[%s312 + $0x128] sm:$0xff]
        %v515 = vld [vmem:[%s312 + $0x130] sm:$0xff]
        %v516 = vld [vmem:[%s312 + $0x138] sm:$0xff]
        %v517 = vld [vmem:[%s312 + $0x140] sm:$0xff]
        %v518 = vld [vmem:[%s312 + $0x148] sm:$0xff]
        %v519 = vld [vmem:[%s312 + $0x150] sm:$0xff]
        %v520 = vld [vmem:[%s312 + $0x158] sm:$0xff]
        %v521 = vld [vmem:[%s312 + $0x160] sm:$0xff]
        %v522 = vld [vmem:[%s312 + $0x168] sm:$0xff]
        %v523 = vld [vmem:[%s312 + $0x170] sm:$0xff]
        %v524 = vld [vmem:[%s312 + $0x178] sm:$0xff]
        %v525 = vld [vmem:[%s312 + $0x180] sm:$0xff]
        %v526 = vld [vmem:[%s312 + $0x188] sm:$0xff]
        %v527 = vld [vmem:[%s312 + $0x190] sm:$0xff]
        %v528 = vld [vmem:[%s312 + $0x198] sm:$0xff]
        %v529 = vld [vmem:[%s312 + $0x1a0] sm:$0xff]
        %v530 = vld [vmem:[%s312 + $0x1a8] sm:$0xff]
        %v531 = vld [vmem:[%s312 + $0x1b0] sm:$0xff]
        %v532 = vld [vmem:[%s312 + $0x1b8] sm:$0xff]
        %v533 = vld [vmem:[%s312 + $0x1c0] sm:$0xff]
        %v534 = vld [vmem:[%s312 + $0x1c8] sm:$0xff]
        %v535 = vld [vmem:[%s312 + $0x1d0] sm:$0xff]
        %v536 = vld [vmem:[%s312 + $0x1d8] sm:$0xff]
        %v537 = vld [vmem:[%s312 + $0x1e0] sm:$0xff]
        %v538 = vld [vmem:[%s312 + $0x1e8] sm:$0xff]
        %v539 = vld [vmem:[%s312 + $0x1f0] sm:$0xff]
        %v540 = vld [vmem:[%s312 + $0x1f8] sm:$0xff]
        %v541 = vld [vmem:[%s369] sm:$0xf]
        %v543 = vlaneseq
        %v544 = vshrl.u32 %v543, 7
        %v545 = vsub.s32 0, %v544
        %v546 = vrot.slane %v541, %v545
        %v547 = vlaneseq
        %v548 = vshrl.u32 %v547, 7
        %v549 = vsub.s32 1, %v548
        %v550 = vrot.slane %v541, %v549
        %v551 = vlaneseq
        %v552 = vshrl.u32 %v551, 7
        %v553 = vsub.s32 2, %v552
        %v554 = vrot.slane %v541, %v553
        %v555 = vlaneseq
        %v556 = vshrl.u32 %v555, 7
        %v557 = vsub.s32 3, %v556
        %v558 = vrot.slane %v541, %v557
        %v579 = vunpack.c.l.b16 %v461
        %v580 = vunpack.c.h.b16 %v461
        %v581 = vunpack.c.l.b16 %v462
        %v582 = vunpack.c.h.b16 %v462
        %v583 = vunpack.c.l.b16 %v463
        %v584 = vunpack.c.h.b16 %v463
        %v585 = vunpack.c.l.b16 %v464
        %v586 = vunpack.c.h.b16 %v464
        %v587 = vunpack.c.l.b16 %v465
        %v588 = vunpack.c.h.b16 %v465
        %v589 = vunpack.c.l.b16 %v466
        %v590 = vunpack.c.h.b16 %v466
        %v591 = vunpack.c.l.b16 %v467
        %v592 = vunpack.c.h.b16 %v467
        %v593 = vunpack.c.l.b16 %v468
        %v594 = vunpack.c.h.b16 %v468
        %v595 = vunpack.c.l.b16 %v469
        %v596 = vunpack.c.h.b16 %v469
        %v597 = vunpack.c.l.b16 %v470
        %v598 = vunpack.c.h.b16 %v470
        %v599 = vunpack.c.l.b16 %v471
        %v600 = vunpack.c.h.b16 %v471
        %v601 = vunpack.c.l.b16 %v472
        %v602 = vunpack.c.h.b16 %v472
        %v603 = vunpack.c.l.b16 %v473
        %v604 = vunpack.c.h.b16 %v473
        %v605 = vunpack.c.l.b16 %v474
        %v606 = vunpack.c.h.b16 %v474
        %v607 = vunpack.c.l.b16 %v475
        %v608 = vunpack.c.h.b16 %v475
        %v609 = vunpack.c.l.b16 %v476
        %v610 = vunpack.c.h.b16 %v476
        %v611 = vpack.c.b16 %v581, %v579
        %v612 = vpack.c.b16 %v582, %v580
        %v613 = vpack.c.b16 %v585, %v583
        %v614 = vpack.c.b16 %v586, %v584
        %v615 = vpack.c.b16 %v589, %v587
        %v616 = vpack.c.b16 %v590, %v588
        %v617 = vpack.c.b16 %v593, %v591
        %v618 = vpack.c.b16 %v594, %v592
        %v619 = vpack.c.b16 %v597, %v595
        %v620 = vpack.c.b16 %v598, %v596
        %v621 = vpack.c.b16 %v601, %v599
        %v622 = vpack.c.b16 %v602, %v600
        %v623 = vpack.c.b16 %v605, %v603
        %v624 = vpack.c.b16 %v606, %v604
        %v625 = vpack.c.b16 %v609, %v607
        %v626 = vpack.c.b16 %v610, %v608
        %v707 = vunpack.c.l.b16 %v477
        %v708 = vunpack.c.h.b16 %v477
        %v709 = vunpack.c.l.b16 %v478
        %v710 = vunpack.c.h.b16 %v478
        %v711 = vunpack.c.l.b16 %v479
        %v712 = vunpack.c.h.b16 %v479
        %v713 = vunpack.c.l.b16 %v480
        %v714 = vunpack.c.h.b16 %v480
        %v715 = vunpack.c.l.b16 %v481
        %v716 = vunpack.c.h.b16 %v481
        %v717 = vunpack.c.l.b16 %v482
        %v718 = vunpack.c.h.b16 %v482
        %v719 = vunpack.c.l.b16 %v483
        %v720 = vunpack.c.h.b16 %v483
        %v721 = vunpack.c.l.b16 %v484
        %v722 = vunpack.c.h.b16 %v484
        %v723 = vunpack.c.l.b16 %v485
        %v724 = vunpack.c.h.b16 %v485
        %v725 = vunpack.c.l.b16 %v486
        %v726 = vunpack.c.h.b16 %v486
        %v727 = vunpack.c.l.b16 %v487
        %v728 = vunpack.c.h.b16 %v487
        %v729 = vunpack.c.l.b16 %v488
        %v730 = vunpack.c.h.b16 %v488
        %v731 = vunpack.c.l.b16 %v489
        %v732 = vunpack.c.h.b16 %v489
        %v733 = vunpack.c.l.b16 %v490
        %v734 = vunpack.c.h.b16 %v490
        %v735 = vunpack.c.l.b16 %v491
        %v736 = vunpack.c.h.b16 %v491
        %v737 = vunpack.c.l.b16 %v492
        %v738 = vunpack.c.h.b16 %v492
        %v739 = vunpack.c.l.b16 %v493
        %v740 = vunpack.c.h.b16 %v493
        %v741 = vunpack.c.l.b16 %v494
        %v742 = vunpack.c.h.b16 %v494
        %v743 = vunpack.c.l.b16 %v495
        %v744 = vunpack.c.h.b16 %v495
        %v745 = vunpack.c.l.b16 %v496
        %v746 = vunpack.c.h.b16 %v496
        %v747 = vunpack.c.l.b16 %v497
        %v748 = vunpack.c.h.b16 %v497
        %v749 = vunpack.c.l.b16 %v498
        %v750 = vunpack.c.h.b16 %v498
        %v751 = vunpack.c.l.b16 %v499
        %v752 = vunpack.c.h.b16 %v499
        %v753 = vunpack.c.l.b16 %v500
        %v754 = vunpack.c.h.b16 %v500
        %v755 = vunpack.c.l.b16 %v501
        %v756 = vunpack.c.h.b16 %v501
        %v757 = vunpack.c.l.b16 %v502
        %v758 = vunpack.c.h.b16 %v502
        %v759 = vunpack.c.l.b16 %v503
        %v760 = vunpack.c.h.b16 %v503
        %v761 = vunpack.c.l.b16 %v504
        %v762 = vunpack.c.h.b16 %v504
        %v763 = vunpack.c.l.b16 %v505
        %v764 = vunpack.c.h.b16 %v505
        %v765 = vunpack.c.l.b16 %v506
        %v766 = vunpack.c.h.b16 %v506
        %v767 = vunpack.c.l.b16 %v507
        %v768 = vunpack.c.h.b16 %v507
        %v769 = vunpack.c.l.b16 %v508
        %v770 = vunpack.c.h.b16 %v508
        %v771 = vunpack.c.l.b16 %v509
        %v772 = vunpack.c.h.b16 %v509
        %v773 = vunpack.c.l.b16 %v510
        %v774 = vunpack.c.h.b16 %v510
        %v775 = vunpack.c.l.b16 %v511
        %v776 = vunpack.c.h.b16 %v511
        %v777 = vunpack.c.l.b16 %v512
        %v778 = vunpack.c.h.b16 %v512
        %v779 = vunpack.c.l.b16 %v513
        %v780 = vunpack.c.h.b16 %v513
        %v781 = vunpack.c.l.b16 %v514
        %v782 = vunpack.c.h.b16 %v514
        %v783 = vunpack.c.l.b16 %v515
        %v784 = vunpack.c.h.b16 %v515
        %v785 = vunpack.c.l.b16 %v516
        %v786 = vunpack.c.h.b16 %v516
        %v787 = vunpack.c.l.b16 %v517
        %v788 = vunpack.c.h.b16 %v517
        %v789 = vunpack.c.l.b16 %v518
        %v790 = vunpack.c.h.b16 %v518
        %v791 = vunpack.c.l.b16 %v519
        %v792 = vunpack.c.h.b16 %v519
        %v793 = vunpack.c.l.b16 %v520
        %v794 = vunpack.c.h.b16 %v520
        %v795 = vunpack.c.l.b16 %v521
        %v796 = vunpack.c.h.b16 %v521
        %v797 = vunpack.c.l.b16 %v522
        %v798 = vunpack.c.h.b16 %v522
        %v799 = vunpack.c.l.b16 %v523
        %v800 = vunpack.c.h.b16 %v523
        %v801 = vunpack.c.l.b16 %v524
        %v802 = vunpack.c.h.b16 %v524
        %v803 = vunpack.c.l.b16 %v525
        %v804 = vunpack.c.h.b16 %v525
        %v805 = vunpack.c.l.b16 %v526
        %v806 = vunpack.c.h.b16 %v526
        %v807 = vunpack.c.l.b16 %v527
        %v808 = vunpack.c.h.b16 %v527
        %v809 = vunpack.c.l.b16 %v528
        %v810 = vunpack.c.h.b16 %v528
        %v811 = vunpack.c.l.b16 %v529
        %v812 = vunpack.c.h.b16 %v529
        %v813 = vunpack.c.l.b16 %v530
        %v814 = vunpack.c.h.b16 %v530
        %v815 = vunpack.c.l.b16 %v531
        %v816 = vunpack.c.h.b16 %v531
        %v817 = vunpack.c.l.b16 %v532
        %v818 = vunpack.c.h.b16 %v532
        %v819 = vunpack.c.l.b16 %v533
        %v820 = vunpack.c.h.b16 %v533
        %v821 = vunpack.c.l.b16 %v534
        %v822 = vunpack.c.h.b16 %v534
        %v823 = vunpack.c.l.b16 %v535
        %v824 = vunpack.c.h.b16 %v535
        %v825 = vunpack.c.l.b16 %v536
        %v826 = vunpack.c.h.b16 %v536
        %v827 = vunpack.c.l.b16 %v537
        %v828 = vunpack.c.h.b16 %v537
        %v829 = vunpack.c.l.b16 %v538
        %v830 = vunpack.c.h.b16 %v538
        %v831 = vunpack.c.l.b16 %v539
        %v832 = vunpack.c.h.b16 %v539
        %v833 = vunpack.c.l.b16 %v540
        %v834 = vunpack.c.h.b16 %v540
        %v835 = vpack.c.b16 %v709, %v707
        %v836 = vpack.c.b16 %v710, %v708
        %v837 = vpack.c.b16 %v713, %v711
        %v838 = vpack.c.b16 %v714, %v712
        %v839 = vpack.c.b16 %v717, %v715
        %v840 = vpack.c.b16 %v718, %v716
        %v841 = vpack.c.b16 %v721, %v719
        %v842 = vpack.c.b16 %v722, %v720
        %v843 = vpack.c.b16 %v725, %v723
        %v844 = vpack.c.b16 %v726, %v724
        %v845 = vpack.c.b16 %v729, %v727
        %v846 = vpack.c.b16 %v730, %v728
        %v847 = vpack.c.b16 %v733, %v731
        %v848 = vpack.c.b16 %v734, %v732
        %v849 = vpack.c.b16 %v737, %v735
        %v850 = vpack.c.b16 %v738, %v736
        %v851 = vpack.c.b16 %v741, %v739
        %v852 = vpack.c.b16 %v742, %v740
        %v853 = vpack.c.b16 %v745, %v743
        %v854 = vpack.c.b16 %v746, %v744
        %v855 = vpack.c.b16 %v749, %v747
        %v856 = vpack.c.b16 %v750, %v748
        %v857 = vpack.c.b16 %v753, %v751
        %v858 = vpack.c.b16 %v754, %v752
        %v859 = vpack.c.b16 %v757, %v755
        %v860 = vpack.c.b16 %v758, %v756
        %v861 = vpack.c.b16 %v761, %v759
        %v862 = vpack.c.b16 %v762, %v760
        %v863 = vpack.c.b16 %v765, %v763
        %v864 = vpack.c.b16 %v766, %v764
        %v865 = vpack.c.b16 %v769, %v767
        %v866 = vpack.c.b16 %v770, %v768
        %v867 = vpack.c.b16 %v773, %v771
        %v868 = vpack.c.b16 %v774, %v772
        %v869 = vpack.c.b16 %v777, %v775
        %v870 = vpack.c.b16 %v778, %v776
        %v871 = vpack.c.b16 %v781, %v779
        %v872 = vpack.c.b16 %v782, %v780
        %v873 = vpack.c.b16 %v785, %v783
        %v874 = vpack.c.b16 %v786, %v784
        %v875 = vpack.c.b16 %v789, %v787
        %v876 = vpack.c.b16 %v790, %v788
        %v877 = vpack.c.b16 %v793, %v791
        %v878 = vpack.c.b16 %v794, %v792
        %v879 = vpack.c.b16 %v797, %v795
        %v880 = vpack.c.b16 %v798, %v796
        %v881 = vpack.c.b16 %v801, %v799
        %v882 = vpack.c.b16 %v802, %v800
        %v883 = vpack.c.b16 %v805, %v803
        %v884 = vpack.c.b16 %v806, %v804
        %v885 = vpack.c.b16 %v809, %v807
        %v886 = vpack.c.b16 %v810, %v808
        %v887 = vpack.c.b16 %v813, %v811
        %v888 = vpack.c.b16 %v814, %v812
        %v889 = vpack.c.b16 %v817, %v815
        %v890 = vpack.c.b16 %v818, %v816
        %v891 = vpack.c.b16 %v821, %v819
        %v892 = vpack.c.b16 %v822, %v820
        %v893 = vpack.c.b16 %v825, %v823
        %v894 = vpack.c.b16 %v826, %v824
        %v895 = vpack.c.b16 %v829, %v827
        %v896 = vpack.c.b16 %v830, %v828
        %v897 = vpack.c.b16 %v833, %v831
        %v898 = vpack.c.b16 %v834, %v832
        %963 = vmatprep.subr.bf16.mxu0 %v850
        %964 = vmatpush1.bf16.xpose.msra.mxu0 %v849
        %965 = vmatprep.subr.bf16.mxu0 %v848
        %966 = vmatpush1.bf16.xpose.msra.mxu0 %v847
        %967 = vmatprep.subr.bf16.mxu0 %v846
        %968 = vmatpush1.bf16.xpose.msra.mxu0 %v845
        %969 = vmatprep.subr.bf16.mxu0 %v844
        %970 = vmatpush1.bf16.xpose.msra.mxu0 %v843
        %971 = vmatprep.subr.bf16.mxu0 %v842
        %972 = vmatpush1.bf16.xpose.msra.mxu0 %v841
        %973 = vmatprep.subr.bf16.mxu0 %v840
        %974 = vmatpush1.bf16.xpose.msra.mxu0 %v839
        %975 = vmatprep.subr.bf16.mxu0 %v838
        %976 = vmatpush1.bf16.xpose.msra.mxu0 %v837
        %977 = vmatprep.subr.bf16.mxu0 %v836
        %978 = vmatpush1.bf16.xpose.msra.mxu0 %v835
        %979 = vmatprep.subr.bf16.mxu0 %v866
        %980 = vmatpush2.bf16.xpose.msra.mxu0 %v865
        %981 = vmatprep.subr.bf16.mxu0 %v864
        %982 = vmatpush2.bf16.xpose.msra.mxu0 %v863
        %983 = vmatprep.subr.bf16.mxu0 %v862
        %984 = vmatpush2.bf16.xpose.msra.mxu0 %v861
        %985 = vmatprep.subr.bf16.mxu0 %v860
        %986 = vmatpush2.bf16.xpose.msra.mxu0 %v859
        %987 = vmatprep.subr.bf16.mxu0 %v858
        %988 = vmatpush2.bf16.xpose.msra.mxu0 %v857
        %989 = vmatprep.subr.bf16.mxu0 %v856
        %990 = vmatpush2.bf16.xpose.msra.mxu0 %v855
        %991 = vmatprep.subr.bf16.mxu0 %v854
        %992 = vmatpush2.bf16.xpose.msra.mxu0 %v853
        %993 = vmatprep.subr.bf16.mxu0 %v852
        %994 = vmatpush2.bf16.xpose.msra.mxu0 %v851
        %995 = vmatprep.mubr.bf16.mxu0 %v612
        %996 = vmatmul.mubr.bf16.gmra.mxu0 %v611
        %v997 = vpop.f32.mrf.mxu0
        %v998 = vadd.f32 %v546, %v997
        %v999 = vpop.f32.mrf.mxu0
        %v1000 = vadd.f32 %v550, %v999
        %v1001 = vpop.f32.mrf.mxu0
        %v1002 = vadd.f32 %v546, %v1001
        %v1003 = vpop.f32.mrf.mxu0
        %v1004 = vadd.f32 %v550, %v1003
        %1005 = vmatprep.mubr.bf16.mxu0 %v614
        %1006 = vmatmul.mubr.bf16.gmra.mxu0 %v613
        %v1007 = vpop.f32.mrf.mxu0
        %v1008 = vadd.f32 %v546, %v1007
        %v1009 = vpop.f32.mrf.mxu0
        %v1010 = vadd.f32 %v550, %v1009
        %v1011 = vpop.f32.mrf.mxu0
        %v1012 = vadd.f32 %v546, %v1011
        %v1013 = vpop.f32.mrf.mxu0
        %v1014 = vadd.f32 %v550, %v1013
        %1015 = vmatprep.mubr.bf16.mxu0 %v616
        %1016 = vmatmul.mubr.bf16.gmra.mxu0 %v615
        %v1017 = vpop.f32.mrf.mxu0
        %v1018 = vadd.f32 %v546, %v1017
        %v1019 = vpop.f32.mrf.mxu0
        %v1020 = vadd.f32 %v550, %v1019
        %v1021 = vpop.f32.mrf.mxu0
        %v1022 = vadd.f32 %v546, %v1021
        %v1023 = vpop.f32.mrf.mxu0
        %v1024 = vadd.f32 %v550, %v1023
        %1025 = vmatprep.mubr.bf16.mxu0 %v618
        %1026 = vmatmul.mubr.bf16.gmra.mxu0 %v617
        %v1027 = vpop.f32.mrf.mxu0
        %v1028 = vadd.f32 %v546, %v1027
        %v1029 = vpop.f32.mrf.mxu0
        %v1030 = vadd.f32 %v550, %v1029
        %v1031 = vpop.f32.mrf.mxu0
        %v1032 = vadd.f32 %v546, %v1031
        %v1033 = vpop.f32.mrf.mxu0
        %v1034 = vadd.f32 %v550, %v1033
        %1035 = vmatprep.mubr.bf16.mxu0 %v620
        %1036 = vmatmul.mubr.bf16.gmra.mxu0 %v619
        %v1037 = vpop.f32.mrf.mxu0
        %v1038 = vadd.f32 %v546, %v1037
        %v1039 = vpop.f32.mrf.mxu0
        %v1040 = vadd.f32 %v550, %v1039
        %v1041 = vpop.f32.mrf.mxu0
        %v1042 = vadd.f32 %v546, %v1041
        %v1043 = vpop.f32.mrf.mxu0
        %v1044 = vadd.f32 %v550, %v1043
        %1045 = vmatprep.mubr.bf16.mxu0 %v622
        %1046 = vmatmul.mubr.bf16.gmra.mxu0 %v621
        %v1047 = vpop.f32.mrf.mxu0
        %v1048 = vadd.f32 %v546, %v1047
        %v1049 = vpop.f32.mrf.mxu0
        %v1050 = vadd.f32 %v550, %v1049
        %v1051 = vpop.f32.mrf.mxu0
        %v1052 = vadd.f32 %v546, %v1051
        %v1053 = vpop.f32.mrf.mxu0
        %v1054 = vadd.f32 %v550, %v1053
        %1055 = vmatprep.mubr.bf16.mxu0 %v624
        %1056 = vmatmul.mubr.bf16.gmra.mxu0 %v623
        %v1057 = vpop.f32.mrf.mxu0
        %v1058 = vadd.f32 %v546, %v1057
        %v1059 = vpop.f32.mrf.mxu0
        %v1060 = vadd.f32 %v550, %v1059
        %v1061 = vpop.f32.mrf.mxu0
        %v1062 = vadd.f32 %v546, %v1061
        %v1063 = vpop.f32.mrf.mxu0
        %v1064 = vadd.f32 %v550, %v1063
        %1065 = vmatprep.mubr.bf16.mxu0 %v626
        %1066 = vmatmul.mubr.bf16.gmra.mxu0 %v625
        %v1067 = vpop.f32.mrf.mxu0
        %v1068 = vadd.f32 %v546, %v1067
        %v1069 = vpop.f32.mrf.mxu0
        %v1070 = vadd.f32 %v550, %v1069
        %v1071 = vpop.f32.mrf.mxu0
        %v1072 = vadd.f32 %v546, %v1071
        %v1073 = vpop.f32.mrf.mxu0
        %v1074 = vadd.f32 %v550, %v1073
        %1075 = vdwg.mxu0
        %1076 = vmatprep.subr.bf16.mxu0 %v882
        %1077 = vmatpush1.bf16.xpose.msra.mxu0 %v881
        %1078 = vmatprep.subr.bf16.mxu0 %v880
        %1079 = vmatpush1.bf16.xpose.msra.mxu0 %v879
        %1080 = vmatprep.subr.bf16.mxu0 %v878
        %1081 = vmatpush1.bf16.xpose.msra.mxu0 %v877
        %1082 = vmatprep.subr.bf16.mxu0 %v876
        %1083 = vmatpush1.bf16.xpose.msra.mxu0 %v875
        %1084 = vmatprep.subr.bf16.mxu0 %v874
        %1085 = vmatpush1.bf16.xpose.msra.mxu0 %v873
        %1086 = vmatprep.subr.bf16.mxu0 %v872
        %1087 = vmatpush1.bf16.xpose.msra.mxu0 %v871
        %1088 = vmatprep.subr.bf16.mxu0 %v870
        %1089 = vmatpush1.bf16.xpose.msra.mxu0 %v869
        %1090 = vmatprep.subr.bf16.mxu0 %v868
        %1091 = vmatpush1.bf16.xpose.msra.mxu0 %v867
        %1092 = vmatprep.subr.bf16.mxu0 %v898
        %1093 = vmatpush2.bf16.xpose.msra.mxu0 %v897
        %1094 = vmatprep.subr.bf16.mxu0 %v896
        %1095 = vmatpush2.bf16.xpose.msra.mxu0 %v895
        %1096 = vmatprep.subr.bf16.mxu0 %v894
        %1097 = vmatpush2.bf16.xpose.msra.mxu0 %v893
        %1098 = vmatprep.subr.bf16.mxu0 %v892
        %1099 = vmatpush2.bf16.xpose.msra.mxu0 %v891
        %1100 = vmatprep.subr.bf16.mxu0 %v890
        %1101 = vmatpush2.bf16.xpose.msra.mxu0 %v889
        %1102 = vmatprep.subr.bf16.mxu0 %v888
        %1103 = vmatpush2.bf16.xpose.msra.mxu0 %v887
        %1104 = vmatprep.subr.bf16.mxu0 %v886
        %1105 = vmatpush2.bf16.xpose.msra.mxu0 %v885
        %1106 = vmatprep.subr.bf16.mxu0 %v884
        %1107 = vmatpush2.bf16.xpose.msra.mxu0 %v883
        %1108 = vmatprep.mubr.bf16.mxu0 %v612
        %1109 = vmatmul.mubr.bf16.gmra.mxu0 %v611
        %v1110 = vpop.f32.mrf.mxu0
        %v1111 = vadd.f32 %v554, %v1110
        %v1112 = vpop.f32.mrf.mxu0
        %v1113 = vadd.f32 %v558, %v1112
        %v1114 = vpop.f32.mrf.mxu0
        %v1115 = vadd.f32 %v554, %v1114
        %v1116 = vpop.f32.mrf.mxu0
        %v1117 = vadd.f32 %v558, %v1116
        %1118 = vmatprep.mubr.bf16.mxu0 %v614
        %1119 = vmatmul.mubr.bf16.gmra.mxu0 %v613
        %v1120 = vpop.f32.mrf.mxu0
        %v1121 = vadd.f32 %v554, %v1120
        %v1122 = vpop.f32.mrf.mxu0
        %v1123 = vadd.f32 %v558, %v1122
        %v1124 = vpop.f32.mrf.mxu0
        %v1125 = vadd.f32 %v554, %v1124
        %v1126 = vpop.f32.mrf.mxu0
        %v1127 = vadd.f32 %v558, %v1126
        %1128 = vmatprep.mubr.bf16.mxu0 %v616
        %1129 = vmatmul.mubr.bf16.gmra.mxu0 %v615
        %v1130 = vpop.f32.mrf.mxu0
        %v1131 = vadd.f32 %v554, %v1130
        %v1132 = vpop.f32.mrf.mxu0
        %v1133 = vadd.f32 %v558, %v1132
        %v1134 = vpop.f32.mrf.mxu0
        %v1135 = vadd.f32 %v554, %v1134
        %v1136 = vpop.f32.mrf.mxu0
        %v1137 = vadd.f32 %v558, %v1136
        %1138 = vmatprep.mubr.bf16.mxu0 %v618
        %1139 = vmatmul.mubr.bf16.gmra.mxu0 %v617
        %v1140 = vpop.f32.mrf.mxu0
        %v1141 = vadd.f32 %v554, %v1140
        %v1142 = vpop.f32.mrf.mxu0
        %v1143 = vadd.f32 %v558, %v1142
        %v1144 = vpop.f32.mrf.mxu0
        %v1145 = vadd.f32 %v554, %v1144
        %v1146 = vpop.f32.mrf.mxu0
        %v1147 = vadd.f32 %v558, %v1146
        %1148 = vmatprep.mubr.bf16.mxu0 %v620
        %1149 = vmatmul.mubr.bf16.gmra.mxu0 %v619
        %v1150 = vpop.f32.mrf.mxu0
        %v1151 = vadd.f32 %v554, %v1150
        %v1152 = vpop.f32.mrf.mxu0
        %v1153 = vadd.f32 %v558, %v1152
        %v1154 = vpop.f32.mrf.mxu0
        %v1155 = vadd.f32 %v554, %v1154
        %v1156 = vpop.f32.mrf.mxu0
        %v1157 = vadd.f32 %v558, %v1156
        %1158 = vmatprep.mubr.bf16.mxu0 %v622
        %1159 = vmatmul.mubr.bf16.gmra.mxu0 %v621
        %v1160 = vpop.f32.mrf.mxu0
        %v1161 = vadd.f32 %v554, %v1160
        %v1162 = vpop.f32.mrf.mxu0
        %v1163 = vadd.f32 %v558, %v1162
        %v1164 = vpop.f32.mrf.mxu0
        %v1165 = vadd.f32 %v554, %v1164
        %v1166 = vpop.f32.mrf.mxu0
        %v1167 = vadd.f32 %v558, %v1166
        %1168 = vmatprep.mubr.bf16.mxu0 %v624
        %1169 = vmatmul.mubr.bf16.gmra.mxu0 %v623
        %v1170 = vpop.f32.mrf.mxu0
        %v1171 = vadd.f32 %v554, %v1170
        %v1172 = vpop.f32.mrf.mxu0
        %v1173 = vadd.f32 %v558, %v1172
        %v1174 = vpop.f32.mrf.mxu0
        %v1175 = vadd.f32 %v554, %v1174
        %v1176 = vpop.f32.mrf.mxu0
        %v1177 = vadd.f32 %v558, %v1176
        %1178 = vmatprep.mubr.bf16.mxu0 %v626
        %1179 = vmatmul.mubr.bf16.gmra.mxu0 %v625
        %v1180 = vpop.f32.mrf.mxu0
        %v1181 = vadd.f32 %v554, %v1180
        %v1182 = vpop.f32.mrf.mxu0
        %v1183 = vadd.f32 %v558, %v1182
        %v1184 = vpop.f32.mrf.mxu0
        %v1185 = vadd.f32 %v554, %v1184
        %v1186 = vpop.f32.mrf.mxu0
        %v1187 = vadd.f32 %v558, %v1186
        %1188 = vdwg.mxu0
        %v1189 = vld [vmem:[%s375] sm:$0xff]
        %v1190 = vld [vmem:[%s375 + $0x8] sm:$0xff]
        %v1191 = vld [vmem:[%s375 + $0x10] sm:$0xff]
        %v1192 = vld [vmem:[%s375 + $0x18] sm:$0xff]
        %v1193 = vld [vmem:[%s375 + $0x20] sm:$0xff]
        %v1194 = vld [vmem:[%s375 + $0x28] sm:$0xff]
        %v1195 = vld [vmem:[%s375 + $0x30] sm:$0xff]
        %v1196 = vld [vmem:[%s375 + $0x38] sm:$0xff]
        %v1197 = vld [vmem:[%s375 + $0x40] sm:$0xff]
        %v1198 = vld [vmem:[%s375 + $0x48] sm:$0xff]
        %v1199 = vld [vmem:[%s375 + $0x50] sm:$0xff]
        %v1200 = vld [vmem:[%s375 + $0x58] sm:$0xff]
        %v1201 = vld [vmem:[%s375 + $0x60] sm:$0xff]
        %v1202 = vld [vmem:[%s375 + $0x68] sm:$0xff]
        %v1203 = vld [vmem:[%s375 + $0x70] sm:$0xff]
        %v1204 = vld [vmem:[%s375 + $0x78] sm:$0xff]
        %s1205 = smul.u32 %s29, 512
        %v1206 = vlaneseq
        %v1207 = vand.u32 %v1206, 127
        %v1208 = vadd.s32 %v1207, 128
        %v1209 = vadd.s32 %v1207, 256
        %v1210 = vadd.s32 %v1207, 384
        %v1211 = vmax.f32 %v998, %v1000
        %v1212 = vmax.f32 %v1211, %v1111
        %v1213 = vmax.f32 %v1212, %v1113
        %1214 = vmax.xlane.f32.xlu0 %v1213
        %v1215 = vpop.xlane.xlu0 %1214
        %v1216 = vmax.f32 %v1002, %v1004
        %v1217 = vmax.f32 %v1216, %v1115
        %v1218 = vmax.f32 %v1217, %v1117
        %1219 = vmax.xlane.f32.xlu0 %v1218
        %v1220 = vpop.xlane.xlu0 %1219
        %v1221 = vmax.f32 %v1008, %v1010
        %v1222 = vmax.f32 %v1221, %v1121
        %v1223 = vmax.f32 %v1222, %v1123
        %1224 = vmax.xlane.f32.xlu0 %v1223
        %v1225 = vpop.xlane.xlu0 %1224
        %v1226 = vmax.f32 %v1012, %v1014
        %v1227 = vmax.f32 %v1226, %v1125
        %v1228 = vmax.f32 %v1227, %v1127
        %1229 = vmax.xlane.f32.xlu0 %v1228
        %v1230 = vpop.xlane.xlu0 %1229
        %v1231 = vmax.f32 %v1018, %v1020
        %v1232 = vmax.f32 %v1231, %v1131
        %v1233 = vmax.f32 %v1232, %v1133
        %1234 = vmax.xlane.f32.xlu0 %v1233
        %v1235 = vpop.xlane.xlu0 %1234
        %v1236 = vmax.f32 %v1022, %v1024
        %v1237 = vmax.f32 %v1236, %v1135
        %v1238 = vmax.f32 %v1237, %v1137
        %1239 = vmax.xlane.f32.xlu0 %v1238
        %v1240 = vpop.xlane.xlu0 %1239
        %v1241 = vmax.f32 %v1028, %v1030
        %v1242 = vmax.f32 %v1241, %v1141
        %v1243 = vmax.f32 %v1242, %v1143
        %1244 = vmax.xlane.f32.xlu0 %v1243
        %v1245 = vpop.xlane.xlu0 %1244
        %v1246 = vmax.f32 %v1032, %v1034
        %v1247 = vmax.f32 %v1246, %v1145
        %v1248 = vmax.f32 %v1247, %v1147
        %1249 = vmax.xlane.f32.xlu0 %v1248
        %v1250 = vpop.xlane.xlu0 %1249
        %v1251 = vmax.f32 %v1038, %v1040
        %v1252 = vmax.f32 %v1251, %v1151
        %v1253 = vmax.f32 %v1252, %v1153
        %1254 = vmax.xlane.f32.xlu0 %v1253
        %v1255 = vpop.xlane.xlu0 %1254
        %v1256 = vmax.f32 %v1042, %v1044
        %v1257 = vmax.f32 %v1256, %v1155
        %v1258 = vmax.f32 %v1257, %v1157
        %1259 = vmax.xlane.f32.xlu0 %v1258
        %v1260 = vpop.xlane.xlu0 %1259
        %v1261 = vmax.f32 %v1048, %v1050
        %v1262 = vmax.f32 %v1261, %v1161
        %v1263 = vmax.f32 %v1262, %v1163
        %1264 = vmax.xlane.f32.xlu0 %v1263
        %v1265 = vpop.xlane.xlu0 %1264
        %v1266 = vmax.f32 %v1052, %v1054
        %v1267 = vmax.f32 %v1266, %v1165
        %v1268 = vmax.f32 %v1267, %v1167
        %1269 = vmax.xlane.f32.xlu0 %v1268
        %v1270 = vpop.xlane.xlu0 %1269
        %v1271 = vmax.f32 %v1058, %v1060
        %v1272 = vmax.f32 %v1271, %v1171
        %v1273 = vmax.f32 %v1272, %v1173
        %1274 = vmax.xlane.f32.xlu0 %v1273
        %v1275 = vpop.xlane.xlu0 %1274
        %v1276 = vmax.f32 %v1062, %v1064
        %v1277 = vmax.f32 %v1276, %v1175
        %v1278 = vmax.f32 %v1277, %v1177
        %1279 = vmax.xlane.f32.xlu0 %v1278
        %v1280 = vpop.xlane.xlu0 %1279
        %v1281 = vmax.f32 %v1068, %v1070
        %v1282 = vmax.f32 %v1281, %v1181
        %v1283 = vmax.f32 %v1282, %v1183
        %1284 = vmax.xlane.f32.xlu0 %v1283
        %v1285 = vpop.xlane.xlu0 %1284
        %v1286 = vmax.f32 %v1072, %v1074
        %v1287 = vmax.f32 %v1286, %v1185
        %v1288 = vmax.f32 %v1287, %v1187
        %1289 = vmax.xlane.f32.xlu0 %v1288
        %v1290 = vpop.xlane.xlu0 %1289
        %vm1291 = vcmp.eq.f32.partialorder %v998, %v1215
        %vm1292 = vcmp.eq.f32.partialorder %v1000, %v1215
        %vm1293 = vcmp.eq.f32.partialorder %v1111, %v1215
        %vm1294 = vcmp.eq.f32.partialorder %v1113, %v1215
        %vm1295 = vcmp.eq.f32.partialorder %v1002, %v1220
        %vm1296 = vcmp.eq.f32.partialorder %v1004, %v1220
        %vm1297 = vcmp.eq.f32.partialorder %v1115, %v1220
        %vm1298 = vcmp.eq.f32.partialorder %v1117, %v1220
        %vm1299 = vcmp.eq.f32.partialorder %v1008, %v1225
        %vm1300 = vcmp.eq.f32.partialorder %v1010, %v1225
        %vm1301 = vcmp.eq.f32.partialorder %v1121, %v1225
        %vm1302 = vcmp.eq.f32.partialorder %v1123, %v1225
        %vm1303 = vcmp.eq.f32.partialorder %v1012, %v1230
        %vm1304 = vcmp.eq.f32.partialorder %v1014, %v1230
        %vm1305 = vcmp.eq.f32.partialorder %v1125, %v1230
        %vm1306 = vcmp.eq.f32.partialorder %v1127, %v1230
        %vm1307 = vcmp.eq.f32.partialorder %v1018, %v1235
        %vm1308 = vcmp.eq.f32.partialorder %v1020, %v1235
        %vm1309 = vcmp.eq.f32.partialorder %v1131, %v1235
        %vm1310 = vcmp.eq.f32.partialorder %v1133, %v1235
        %vm1311 = vcmp.eq.f32.partialorder %v1022, %v1240
        %vm1312 = vcmp.eq.f32.partialorder %v1024, %v1240
        %vm1313 = vcmp.eq.f32.partialorder %v1135, %v1240
        %vm1314 = vcmp.eq.f32.partialorder %v1137, %v1240
        %vm1315 = vcmp.eq.f32.partialorder %v1028, %v1245
        %vm1316 = vcmp.eq.f32.partialorder %v1030, %v1245
        %vm1317 = vcmp.eq.f32.partialorder %v1141, %v1245
        %vm1318 = vcmp.eq.f32.partialorder %v1143, %v1245
        %vm1319 = vcmp.eq.f32.partialorder %v1032, %v1250
        %vm1320 = vcmp.eq.f32.partialorder %v1034, %v1250
        %vm1321 = vcmp.eq.f32.partialorder %v1145, %v1250
        %vm1322 = vcmp.eq.f32.partialorder %v1147, %v1250
        %vm1323 = vcmp.eq.f32.partialorder %v1038, %v1255
        %vm1324 = vcmp.eq.f32.partialorder %v1040, %v1255
        %vm1325 = vcmp.eq.f32.partialorder %v1151, %v1255
        %vm1326 = vcmp.eq.f32.partialorder %v1153, %v1255
        %vm1327 = vcmp.eq.f32.partialorder %v1042, %v1260
        %vm1328 = vcmp.eq.f32.partialorder %v1044, %v1260
        %vm1329 = vcmp.eq.f32.partialorder %v1155, %v1260
        %vm1330 = vcmp.eq.f32.partialorder %v1157, %v1260
        %vm1331 = vcmp.eq.f32.partialorder %v1048, %v1265
        %vm1332 = vcmp.eq.f32.partialorder %v1050, %v1265
        %vm1333 = vcmp.eq.f32.partialorder %v1161, %v1265
        %vm1334 = vcmp.eq.f32.partialorder %v1163, %v1265
        %vm1335 = vcmp.eq.f32.partialorder %v1052, %v1270
        %vm1336 = vcmp.eq.f32.partialorder %v1054, %v1270
        %vm1337 = vcmp.eq.f32.partialorder %v1165, %v1270
        %vm1338 = vcmp.eq.f32.partialorder %v1167, %v1270
        %vm1339 = vcmp.eq.f32.partialorder %v1058, %v1275
        %vm1340 = vcmp.eq.f32.partialorder %v1060, %v1275
        %vm1341 = vcmp.eq.f32.partialorder %v1171, %v1275
        %vm1342 = vcmp.eq.f32.partialorder %v1173, %v1275
        %vm1343 = vcmp.eq.f32.partialorder %v1062, %v1280
        %vm1344 = vcmp.eq.f32.partialorder %v1064, %v1280
        %vm1345 = vcmp.eq.f32.partialorder %v1175, %v1280
        %vm1346 = vcmp.eq.f32.partialorder %v1177, %v1280
        %vm1347 = vcmp.eq.f32.partialorder %v1068, %v1285
        %vm1348 = vcmp.eq.f32.partialorder %v1070, %v1285
        %vm1349 = vcmp.eq.f32.partialorder %v1181, %v1285
        %vm1350 = vcmp.eq.f32.partialorder %v1183, %v1285
        %vm1351 = vcmp.eq.f32.partialorder %v1072, %v1290
        %vm1352 = vcmp.eq.f32.partialorder %v1074, %v1290
        %vm1353 = vcmp.eq.f32.partialorder %v1185, %v1290
        %vm1354 = vcmp.eq.f32.partialorder %v1187, %v1290
        %v1355 = vsel %vm1291, %v1207, 512
        %v1356 = vsel %vm1292, %v1208, 512
        %v1357 = vsel %vm1293, %v1209, 512
        %v1358 = vsel %vm1294, %v1210, 512
        %v1359 = vsel %vm1295, %v1207, 512
        %v1360 = vsel %vm1296, %v1208, 512
        %v1361 = vsel %vm1297, %v1209, 512
        %v1362 = vsel %vm1298, %v1210, 512
        %v1363 = vsel %vm1299, %v1207, 512
        %v1364 = vsel %vm1300, %v1208, 512
        %v1365 = vsel %vm1301, %v1209, 512
        %v1366 = vsel %vm1302, %v1210, 512
        %v1367 = vsel %vm1303, %v1207, 512
        %v1368 = vsel %vm1304, %v1208, 512
        %v1369 = vsel %vm1305, %v1209, 512
        %v1370 = vsel %vm1306, %v1210, 512
        %v1371 = vsel %vm1307, %v1207, 512
        %v1372 = vsel %vm1308, %v1208, 512
        %v1373 = vsel %vm1309, %v1209, 512
        %v1374 = vsel %vm1310, %v1210, 512
        %v1375 = vsel %vm1311, %v1207, 512
        %v1376 = vsel %vm1312, %v1208, 512
        %v1377 = vsel %vm1313, %v1209, 512
        %v1378 = vsel %vm1314, %v1210, 512
        %v1379 = vsel %vm1315, %v1207, 512
        %v1380 = vsel %vm1316, %v1208, 512
        %v1381 = vsel %vm1317, %v1209, 512
        %v1382 = vsel %vm1318, %v1210, 512
        %v1383 = vsel %vm1319, %v1207, 512
        %v1384 = vsel %vm1320, %v1208, 512
        %v1385 = vsel %vm1321, %v1209, 512
        %v1386 = vsel %vm1322, %v1210, 512
        %v1387 = vsel %vm1323, %v1207, 512
        %v1388 = vsel %vm1324, %v1208, 512
        %v1389 = vsel %vm1325, %v1209, 512
        %v1390 = vsel %vm1326, %v1210, 512
        %v1391 = vsel %vm1327, %v1207, 512
        %v1392 = vsel %vm1328, %v1208, 512
        %v1393 = vsel %vm1329, %v1209, 512
        %v1394 = vsel %vm1330, %v1210, 512
        %v1395 = vsel %vm1331, %v1207, 512
        %v1396 = vsel %vm1332, %v1208, 512
        %v1397 = vsel %vm1333, %v1209, 512
        %v1398 = vsel %vm1334, %v1210, 512
        %v1399 = vsel %vm1335, %v1207, 512
        %v1400 = vsel %vm1336, %v1208, 512
        %v1401 = vsel %vm1337, %v1209, 512
        %v1402 = vsel %vm1338, %v1210, 512
        %v1403 = vsel %vm1339, %v1207, 512
        %v1404 = vsel %vm1340, %v1208, 512
        %v1405 = vsel %vm1341, %v1209, 512
        %v1406 = vsel %vm1342, %v1210, 512
        %v1407 = vsel %vm1343, %v1207, 512
        %v1408 = vsel %vm1344, %v1208, 512
        %v1409 = vsel %vm1345, %v1209, 512
        %v1410 = vsel %vm1346, %v1210, 512
        %v1411 = vsel %vm1347, %v1207, 512
        %v1412 = vsel %vm1348, %v1208, 512
        %v1413 = vsel %vm1349, %v1209, 512
        %v1414 = vsel %vm1350, %v1210, 512
        %v1415 = vsel %vm1351, %v1207, 512
        %v1416 = vsel %vm1352, %v1208, 512
        %v1417 = vsel %vm1353, %v1209, 512
        %v1418 = vsel %vm1354, %v1210, 512
        %vm1419 = vcmp.lt.s32.totalorder %v1355, %v1356
        %v1420 = vsel %vm1419, %v1355, %v1356
        %vm1421 = vcmp.lt.s32.totalorder %v1420, %v1357
        %v1422 = vsel %vm1421, %v1420, %v1357
        %vm1423 = vcmp.lt.s32.totalorder %v1422, %v1358
        %v1424 = vsel %vm1423, %v1422, %v1358
        %v1425 = vand.u32 %v1424, 65535
        %v1426 = vshra.s32 %v1424, 16
        %v1427 = vcvt.s32.f32 %v1425
        %v1428 = vcvt.s32.f32 %v1426
        %1429 = vmin.xlane.f32.xlu0 %v1428
        %v1430 = vpop.xlane.xlu0 %1429
        %vm1431 = vcmp.eq.f32.partialorder %v1428, %v1430
        %v1432 = vsel %vm1431, %v1427, inf
        %1433 = vmin.xlane.f32.xlu0 %v1432
        %v1434 = vpop.xlane.xlu0 %1433
        %v1435 = vcvt.f32.s32 %v1434
        %v1436 = vcvt.f32.s32 %v1430
        %v1437 = vshll.u32 %v1436, 16
        %v1438 = vadd.s32 %v1437, %v1435
        %vm1439 = vcmp.lt.s32.totalorder %v1359, %v1360
        %v1440 = vsel %vm1439, %v1359, %v1360
        %vm1441 = vcmp.lt.s32.totalorder %v1440, %v1361
        %v1442 = vsel %vm1441, %v1440, %v1361
        %vm1443 = vcmp.lt.s32.totalorder %v1442, %v1362
        %v1444 = vsel %vm1443, %v1442, %v1362
        %v1445 = vand.u32 %v1444, 65535
        %v1446 = vshra.s32 %v1444, 16
        %v1447 = vcvt.s32.f32 %v1445
        %v1448 = vcvt.s32.f32 %v1446
        %1449 = vmin.xlane.f32.xlu0 %v1448
        %v1450 = vpop.xlane.xlu0 %1449
        %vm1451 = vcmp.eq.f32.partialorder %v1448, %v1450
        %v1452 = vsel %vm1451, %v1447, inf
        %1453 = vmin.xlane.f32.xlu0 %v1452
        %v1454 = vpop.xlane.xlu0 %1453
        %v1455 = vcvt.f32.s32 %v1454
        %v1456 = vcvt.f32.s32 %v1450
        %v1457 = vshll.u32 %v1456, 16
        %v1458 = vadd.s32 %v1457, %v1455
        %vm1459 = vcmp.lt.s32.totalorder %v1363, %v1364
        %v1460 = vsel %vm1459, %v1363, %v1364
        %vm1461 = vcmp.lt.s32.totalorder %v1460, %v1365
        %v1462 = vsel %vm1461, %v1460, %v1365
        %vm1463 = vcmp.lt.s32.totalorder %v1462, %v1366
        %v1464 = vsel %vm1463, %v1462, %v1366
        %v1465 = vand.u32 %v1464, 65535
        %v1466 = vshra.s32 %v1464, 16
        %v1467 = vcvt.s32.f32 %v1465
        %v1468 = vcvt.s32.f32 %v1466
        %1469 = vmin.xlane.f32.xlu0 %v1468
        %v1470 = vpop.xlane.xlu0 %1469
        %vm1471 = vcmp.eq.f32.partialorder %v1468, %v1470
        %v1472 = vsel %vm1471, %v1467, inf
        %1473 = vmin.xlane.f32.xlu0 %v1472
        %v1474 = vpop.xlane.xlu0 %1473
        %v1475 = vcvt.f32.s32 %v1474
        %v1476 = vcvt.f32.s32 %v1470
        %v1477 = vshll.u32 %v1476, 16
        %v1478 = vadd.s32 %v1477, %v1475
        %vm1479 = vcmp.lt.s32.totalorder %v1367, %v1368
        %v1480 = vsel %vm1479, %v1367, %v1368
        %vm1481 = vcmp.lt.s32.totalorder %v1480, %v1369
        %v1482 = vsel %vm1481, %v1480, %v1369
        %vm1483 = vcmp.lt.s32.totalorder %v1482, %v1370
        %v1484 = vsel %vm1483, %v1482, %v1370
        %v1485 = vand.u32 %v1484, 65535
        %v1486 = vshra.s32 %v1484, 16
        %v1487 = vcvt.s32.f32 %v1485
        %v1488 = vcvt.s32.f32 %v1486
        %1489 = vmin.xlane.f32.xlu0 %v1488
        %v1490 = vpop.xlane.xlu0 %1489
        %vm1491 = vcmp.eq.f32.partialorder %v1488, %v1490
        %v1492 = vsel %vm1491, %v1487, inf
        %1493 = vmin.xlane.f32.xlu0 %v1492
        %v1494 = vpop.xlane.xlu0 %1493
        %v1495 = vcvt.f32.s32 %v1494
        %v1496 = vcvt.f32.s32 %v1490
        %v1497 = vshll.u32 %v1496, 16
        %v1498 = vadd.s32 %v1497, %v1495
        %vm1499 = vcmp.lt.s32.totalorder %v1371, %v1372
        %v1500 = vsel %vm1499, %v1371, %v1372
        %vm1501 = vcmp.lt.s32.totalorder %v1500, %v1373
        %v1502 = vsel %vm1501, %v1500, %v1373
        %vm1503 = vcmp.lt.s32.totalorder %v1502, %v1374
        %v1504 = vsel %vm1503, %v1502, %v1374
        %v1505 = vand.u32 %v1504, 65535
        %v1506 = vshra.s32 %v1504, 16
        %v1507 = vcvt.s32.f32 %v1505
        %v1508 = vcvt.s32.f32 %v1506
        %1509 = vmin.xlane.f32.xlu0 %v1508
        %v1510 = vpop.xlane.xlu0 %1509
        %vm1511 = vcmp.eq.f32.partialorder %v1508, %v1510
        %v1512 = vsel %vm1511, %v1507, inf
        %1513 = vmin.xlane.f32.xlu0 %v1512
        %v1514 = vpop.xlane.xlu0 %1513
        %v1515 = vcvt.f32.s32 %v1514
        %v1516 = vcvt.f32.s32 %v1510
        %v1517 = vshll.u32 %v1516, 16
        %v1518 = vadd.s32 %v1517, %v1515
        %vm1519 = vcmp.lt.s32.totalorder %v1375, %v1376
        %v1520 = vsel %vm1519, %v1375, %v1376
        %vm1521 = vcmp.lt.s32.totalorder %v1520, %v1377
        %v1522 = vsel %vm1521, %v1520, %v1377
        %vm1523 = vcmp.lt.s32.totalorder %v1522, %v1378
        %v1524 = vsel %vm1523, %v1522, %v1378
        %v1525 = vand.u32 %v1524, 65535
        %v1526 = vshra.s32 %v1524, 16
        %v1527 = vcvt.s32.f32 %v1525
        %v1528 = vcvt.s32.f32 %v1526
        %1529 = vmin.xlane.f32.xlu0 %v1528
        %v1530 = vpop.xlane.xlu0 %1529
        %vm1531 = vcmp.eq.f32.partialorder %v1528, %v1530
        %v1532 = vsel %vm1531, %v1527, inf
        %1533 = vmin.xlane.f32.xlu0 %v1532
        %v1534 = vpop.xlane.xlu0 %1533
        %v1535 = vcvt.f32.s32 %v1534
        %v1536 = vcvt.f32.s32 %v1530
        %v1537 = vshll.u32 %v1536, 16
        %v1538 = vadd.s32 %v1537, %v1535
        %vm1539 = vcmp.lt.s32.totalorder %v1379, %v1380
        %v1540 = vsel %vm1539, %v1379, %v1380
        %vm1541 = vcmp.lt.s32.totalorder %v1540, %v1381
        %v1542 = vsel %vm1541, %v1540, %v1381
        %vm1543 = vcmp.lt.s32.totalorder %v1542, %v1382
        %v1544 = vsel %vm1543, %v1542, %v1382
        %v1545 = vand.u32 %v1544, 65535
        %v1546 = vshra.s32 %v1544, 16
        %v1547 = vcvt.s32.f32 %v1545
        %v1548 = vcvt.s32.f32 %v1546
        %1549 = vmin.xlane.f32.xlu0 %v1548
        %v1550 = vpop.xlane.xlu0 %1549
        %vm1551 = vcmp.eq.f32.partialorder %v1548, %v1550
        %v1552 = vsel %vm1551, %v1547, inf
        %1553 = vmin.xlane.f32.xlu0 %v1552
        %v1554 = vpop.xlane.xlu0 %1553
        %v1555 = vcvt.f32.s32 %v1554
        %v1556 = vcvt.f32.s32 %v1550
        %v1557 = vshll.u32 %v1556, 16
        %v1558 = vadd.s32 %v1557, %v1555
        %vm1559 = vcmp.lt.s32.totalorder %v1383, %v1384
        %v1560 = vsel %vm1559, %v1383, %v1384
        %vm1561 = vcmp.lt.s32.totalorder %v1560, %v1385
        %v1562 = vsel %vm1561, %v1560, %v1385
        %vm1563 = vcmp.lt.s32.totalorder %v1562, %v1386
        %v1564 = vsel %vm1563, %v1562, %v1386
        %v1565 = vand.u32 %v1564, 65535
        %v1566 = vshra.s32 %v1564, 16
        %v1567 = vcvt.s32.f32 %v1565
        %v1568 = vcvt.s32.f32 %v1566
        %1569 = vmin.xlane.f32.xlu0 %v1568
        %v1570 = vpop.xlane.xlu0 %1569
        %vm1571 = vcmp.eq.f32.partialorder %v1568, %v1570
        %v1572 = vsel %vm1571, %v1567, inf
        %1573 = vmin.xlane.f32.xlu0 %v1572
        %v1574 = vpop.xlane.xlu0 %1573
        %v1575 = vcvt.f32.s32 %v1574
        %v1576 = vcvt.f32.s32 %v1570
        %v1577 = vshll.u32 %v1576, 16
        %v1578 = vadd.s32 %v1577, %v1575
        %vm1579 = vcmp.lt.s32.totalorder %v1387, %v1388
        %v1580 = vsel %vm1579, %v1387, %v1388
        %vm1581 = vcmp.lt.s32.totalorder %v1580, %v1389
        %v1582 = vsel %vm1581, %v1580, %v1389
        %vm1583 = vcmp.lt.s32.totalorder %v1582, %v1390
        %v1584 = vsel %vm1583, %v1582, %v1390
        %v1585 = vand.u32 %v1584, 65535
        %v1586 = vshra.s32 %v1584, 16
        %v1587 = vcvt.s32.f32 %v1585
        %v1588 = vcvt.s32.f32 %v1586
        %1589 = vmin.xlane.f32.xlu0 %v1588
        %v1590 = vpop.xlane.xlu0 %1589
        %vm1591 = vcmp.eq.f32.partialorder %v1588, %v1590
        %v1592 = vsel %vm1591, %v1587, inf
        %1593 = vmin.xlane.f32.xlu0 %v1592
        %v1594 = vpop.xlane.xlu0 %1593
        %v1595 = vcvt.f32.s32 %v1594
        %v1596 = vcvt.f32.s32 %v1590
        %v1597 = vshll.u32 %v1596, 16
        %v1598 = vadd.s32 %v1597, %v1595
        %vm1599 = vcmp.lt.s32.totalorder %v1391, %v1392
        %v1600 = vsel %vm1599, %v1391, %v1392
        %vm1601 = vcmp.lt.s32.totalorder %v1600, %v1393
        %v1602 = vsel %vm1601, %v1600, %v1393
        %vm1603 = vcmp.lt.s32.totalorder %v1602, %v1394
        %v1604 = vsel %vm1603, %v1602, %v1394
        %v1605 = vand.u32 %v1604, 65535
        %v1606 = vshra.s32 %v1604, 16
        %v1607 = vcvt.s32.f32 %v1605
        %v1608 = vcvt.s32.f32 %v1606
        %1609 = vmin.xlane.f32.xlu0 %v1608
        %v1610 = vpop.xlane.xlu0 %1609
        %vm1611 = vcmp.eq.f32.partialorder %v1608, %v1610
        %v1612 = vsel %vm1611, %v1607, inf
        %1613 = vmin.xlane.f32.xlu0 %v1612
        %v1614 = vpop.xlane.xlu0 %1613
        %v1615 = vcvt.f32.s32 %v1614
        %v1616 = vcvt.f32.s32 %v1610
        %v1617 = vshll.u32 %v1616, 16
        %v1618 = vadd.s32 %v1617, %v1615
        %vm1619 = vcmp.lt.s32.totalorder %v1395, %v1396
        %v1620 = vsel %vm1619, %v1395, %v1396
        %vm1621 = vcmp.lt.s32.totalorder %v1620, %v1397
        %v1622 = vsel %vm1621, %v1620, %v1397
        %vm1623 = vcmp.lt.s32.totalorder %v1622, %v1398
        %v1624 = vsel %vm1623, %v1622, %v1398
        %v1625 = vand.u32 %v1624, 65535
        %v1626 = vshra.s32 %v1624, 16
        %v1627 = vcvt.s32.f32 %v1625
        %v1628 = vcvt.s32.f32 %v1626
        %1629 = vmin.xlane.f32.xlu0 %v1628
        %v1630 = vpop.xlane.xlu0 %1629
        %vm1631 = vcmp.eq.f32.partialorder %v1628, %v1630
        %v1632 = vsel %vm1631, %v1627, inf
        %1633 = vmin.xlane.f32.xlu0 %v1632
        %v1634 = vpop.xlane.xlu0 %1633
        %v1635 = vcvt.f32.s32 %v1634
        %v1636 = vcvt.f32.s32 %v1630
        %v1637 = vshll.u32 %v1636, 16
        %v1638 = vadd.s32 %v1637, %v1635
        %vm1639 = vcmp.lt.s32.totalorder %v1399, %v1400
        %v1640 = vsel %vm1639, %v1399, %v1400
        %vm1641 = vcmp.lt.s32.totalorder %v1640, %v1401
        %v1642 = vsel %vm1641, %v1640, %v1401
        %vm1643 = vcmp.lt.s32.totalorder %v1642, %v1402
        %v1644 = vsel %vm1643, %v1642, %v1402
        %v1645 = vand.u32 %v1644, 65535
        %v1646 = vshra.s32 %v1644, 16
        %v1647 = vcvt.s32.f32 %v1645
        %v1648 = vcvt.s32.f32 %v1646
        %1649 = vmin.xlane.f32.xlu0 %v1648
        %v1650 = vpop.xlane.xlu0 %1649
        %vm1651 = vcmp.eq.f32.partialorder %v1648, %v1650
        %v1652 = vsel %vm1651, %v1647, inf
        %1653 = vmin.xlane.f32.xlu0 %v1652
        %v1654 = vpop.xlane.xlu0 %1653
        %v1655 = vcvt.f32.s32 %v1654
        %v1656 = vcvt.f32.s32 %v1650
        %v1657 = vshll.u32 %v1656, 16
        %v1658 = vadd.s32 %v1657, %v1655
        %vm1659 = vcmp.lt.s32.totalorder %v1403, %v1404
        %v1660 = vsel %vm1659, %v1403, %v1404
        %vm1661 = vcmp.lt.s32.totalorder %v1660, %v1405
        %v1662 = vsel %vm1661, %v1660, %v1405
        %vm1663 = vcmp.lt.s32.totalorder %v1662, %v1406
        %v1664 = vsel %vm1663, %v1662, %v1406
        %v1665 = vand.u32 %v1664, 65535
        %v1666 = vshra.s32 %v1664, 16
        %v1667 = vcvt.s32.f32 %v1665
        %v1668 = vcvt.s32.f32 %v1666
        %1669 = vmin.xlane.f32.xlu0 %v1668
        %v1670 = vpop.xlane.xlu0 %1669
        %vm1671 = vcmp.eq.f32.partialorder %v1668, %v1670
        %v1672 = vsel %vm1671, %v1667, inf
        %1673 = vmin.xlane.f32.xlu0 %v1672
        %v1674 = vpop.xlane.xlu0 %1673
        %v1675 = vcvt.f32.s32 %v1674
        %v1676 = vcvt.f32.s32 %v1670
        %v1677 = vshll.u32 %v1676, 16
        %v1678 = vadd.s32 %v1677, %v1675
        %vm1679 = vcmp.lt.s32.totalorder %v1407, %v1408
        %v1680 = vsel %vm1679, %v1407, %v1408
        %vm1681 = vcmp.lt.s32.totalorder %v1680, %v1409
        %v1682 = vsel %vm1681, %v1680, %v1409
        %vm1683 = vcmp.lt.s32.totalorder %v1682, %v1410
        %v1684 = vsel %vm1683, %v1682, %v1410
        %v1685 = vand.u32 %v1684, 65535
        %v1686 = vshra.s32 %v1684, 16
        %v1687 = vcvt.s32.f32 %v1685
        %v1688 = vcvt.s32.f32 %v1686
        %1689 = vmin.xlane.f32.xlu0 %v1688
        %v1690 = vpop.xlane.xlu0 %1689
        %vm1691 = vcmp.eq.f32.partialorder %v1688, %v1690
        %v1692 = vsel %vm1691, %v1687, inf
        %1693 = vmin.xlane.f32.xlu0 %v1692
        %v1694 = vpop.xlane.xlu0 %1693
        %v1695 = vcvt.f32.s32 %v1694
        %v1696 = vcvt.f32.s32 %v1690
        %v1697 = vshll.u32 %v1696, 16
        %v1698 = vadd.s32 %v1697, %v1695
        %vm1699 = vcmp.lt.s32.totalorder %v1411, %v1412
        %v1700 = vsel %vm1699, %v1411, %v1412
        %vm1701 = vcmp.lt.s32.totalorder %v1700, %v1413
        %v1702 = vsel %vm1701, %v1700, %v1413
        %vm1703 = vcmp.lt.s32.totalorder %v1702, %v1414
        %v1704 = vsel %vm1703, %v1702, %v1414
        %v1705 = vand.u32 %v1704, 65535
        %v1706 = vshra.s32 %v1704, 16
        %v1707 = vcvt.s32.f32 %v1705
        %v1708 = vcvt.s32.f32 %v1706
        %1709 = vmin.xlane.f32.xlu0 %v1708
        %v1710 = vpop.xlane.xlu0 %1709
        %vm1711 = vcmp.eq.f32.partialorder %v1708, %v1710
        %v1712 = vsel %vm1711, %v1707, inf
        %1713 = vmin.xlane.f32.xlu0 %v1712
        %v1714 = vpop.xlane.xlu0 %1713
        %v1715 = vcvt.f32.s32 %v1714
        %v1716 = vcvt.f32.s32 %v1710
        %v1717 = vshll.u32 %v1716, 16
        %v1718 = vadd.s32 %v1717, %v1715
        %vm1719 = vcmp.lt.s32.totalorder %v1415, %v1416
        %v1720 = vsel %vm1719, %v1415, %v1416
        %vm1721 = vcmp.lt.s32.totalorder %v1720, %v1417
        %v1722 = vsel %vm1721, %v1720, %v1417
        %vm1723 = vcmp.lt.s32.totalorder %v1722, %v1418
        %v1724 = vsel %vm1723, %v1722, %v1418
        %v1725 = vand.u32 %v1724, 65535
        %v1726 = vshra.s32 %v1724, 16
        %v1727 = vcvt.s32.f32 %v1725
        %v1728 = vcvt.s32.f32 %v1726
        %1729 = vmin.xlane.f32.xlu0 %v1728
        %v1730 = vpop.xlane.xlu0 %1729
        %vm1731 = vcmp.eq.f32.partialorder %v1728, %v1730
        %v1732 = vsel %vm1731, %v1727, inf
        %1733 = vmin.xlane.f32.xlu0 %v1732
        %v1734 = vpop.xlane.xlu0 %1733
        %v1735 = vcvt.f32.s32 %v1734
        %v1736 = vcvt.f32.s32 %v1730
        %v1737 = vshll.u32 %v1736, 16
        %v1738 = vadd.s32 %v1737, %v1735
        %v1739 = vstv %s1205
        %v1740 = vadd.s32 %v1438, %v1739
        %v1741 = vadd.s32 %v1458, %v1739
        %v1742 = vadd.s32 %v1478, %v1739
        %v1743 = vadd.s32 %v1498, %v1739
        %v1744 = vadd.s32 %v1518, %v1739
        %v1745 = vadd.s32 %v1538, %v1739
        %v1746 = vadd.s32 %v1558, %v1739
        %v1747 = vadd.s32 %v1578, %v1739
        %v1748 = vadd.s32 %v1598, %v1739
        %v1749 = vadd.s32 %v1618, %v1739
        %v1750 = vadd.s32 %v1638, %v1739
        %v1751 = vadd.s32 %v1658, %v1739
        %v1752 = vadd.s32 %v1678, %v1739
        %v1753 = vadd.s32 %v1698, %v1739
        %v1754 = vadd.s32 %v1718, %v1739
        %v1755 = vadd.s32 %v1738, %v1739
        %v1756 = vld [vmem:[#allocation2] sm:$0xff]
        %v1757 = vld [vmem:[#allocation2 + $0x8] sm:$0xff]
        %v1758 = vld [vmem:[#allocation2 + $0x10] sm:$0xff]
        %v1759 = vld [vmem:[#allocation2 + $0x18] sm:$0xff]
        %v1760 = vld [vmem:[#allocation2 + $0x20] sm:$0xff]
        %v1761 = vld [vmem:[#allocation2 + $0x28] sm:$0xff]
        %v1762 = vld [vmem:[#allocation2 + $0x30] sm:$0xff]
        %v1763 = vld [vmem:[#allocation2 + $0x38] sm:$0xff]
        %v1764 = vld [vmem:[#allocation2 + $0x40] sm:$0xff]
        %v1765 = vld [vmem:[#allocation2 + $0x48] sm:$0xff]
        %v1766 = vld [vmem:[#allocation2 + $0x50] sm:$0xff]
        %v1767 = vld [vmem:[#allocation2 + $0x58] sm:$0xff]
        %v1768 = vld [vmem:[#allocation2 + $0x60] sm:$0xff]
        %v1769 = vld [vmem:[#allocation2 + $0x68] sm:$0xff]
        %v1770 = vld [vmem:[#allocation2 + $0x70] sm:$0xff]
        %v1771 = vld [vmem:[#allocation2 + $0x78] sm:$0xff]
        %v1772 = vmax.f32 %v1756, %v1215
        %v1773 = vmax.f32 %v1757, %v1220
        %v1774 = vmax.f32 %v1758, %v1225
        %v1775 = vmax.f32 %v1759, %v1230
        %v1776 = vmax.f32 %v1760, %v1235
        %v1777 = vmax.f32 %v1761, %v1240
        %v1778 = vmax.f32 %v1762, %v1245
        %v1779 = vmax.f32 %v1763, %v1250
        %v1780 = vmax.f32 %v1764, %v1255
        %v1781 = vmax.f32 %v1765, %v1260
        %v1782 = vmax.f32 %v1766, %v1265
        %v1783 = vmax.f32 %v1767, %v1270
        %v1784 = vmax.f32 %v1768, %v1275
        %v1785 = vmax.f32 %v1769, %v1280
        %v1786 = vmax.f32 %v1770, %v1285
        %v1787 = vmax.f32 %v1771, %v1290
        %vm1788 = vcmp.gt.f32.partialorder %v1215, %v1756
        %vm1789 = vcmp.gt.f32.partialorder %v1220, %v1757
        %vm1790 = vcmp.gt.f32.partialorder %v1225, %v1758
        %vm1791 = vcmp.gt.f32.partialorder %v1230, %v1759
        %vm1792 = vcmp.gt.f32.partialorder %v1235, %v1760
        %vm1793 = vcmp.gt.f32.partialorder %v1240, %v1761
        %vm1794 = vcmp.gt.f32.partialorder %v1245, %v1762
        %vm1795 = vcmp.gt.f32.partialorder %v1250, %v1763
        %vm1796 = vcmp.gt.f32.partialorder %v1255, %v1764
        %vm1797 = vcmp.gt.f32.partialorder %v1260, %v1765
        %vm1798 = vcmp.gt.f32.partialorder %v1265, %v1766
        %vm1799 = vcmp.gt.f32.partialorder %v1270, %v1767
        %vm1800 = vcmp.gt.f32.partialorder %v1275, %v1768
        %vm1801 = vcmp.gt.f32.partialorder %v1280, %v1769
        %vm1802 = vcmp.gt.f32.partialorder %v1285, %v1770
        %vm1803 = vcmp.gt.f32.partialorder %v1290, %v1771
        %v1804 = vld [vmem:[#allocation5] sm:$0xff]
        %v1805 = vld [vmem:[#allocation5 + $0x8] sm:$0xff]
        %v1806 = vld [vmem:[#allocation5 + $0x10] sm:$0xff]
        %v1807 = vld [vmem:[#allocation5 + $0x18] sm:$0xff]
        %v1808 = vld [vmem:[#allocation5 + $0x20] sm:$0xff]
        %v1809 = vld [vmem:[#allocation5 + $0x28] sm:$0xff]
        %v1810 = vld [vmem:[#allocation5 + $0x30] sm:$0xff]
        %v1811 = vld [vmem:[#allocation5 + $0x38] sm:$0xff]
        %v1812 = vld [vmem:[#allocation5 + $0x40] sm:$0xff]
        %v1813 = vld [vmem:[#allocation5 + $0x48] sm:$0xff]
        %v1814 = vld [vmem:[#allocation5 + $0x50] sm:$0xff]
        %v1815 = vld [vmem:[#allocation5 + $0x58] sm:$0xff]
        %v1816 = vld [vmem:[#allocation5 + $0x60] sm:$0xff]
        %v1817 = vld [vmem:[#allocation5 + $0x68] sm:$0xff]
        %v1818 = vld [vmem:[#allocation5 + $0x70] sm:$0xff]
        %v1819 = vld [vmem:[#allocation5 + $0x78] sm:$0xff]
        %v1820 = vsel %vm1788, %v1740, %v1804
        %v1821 = vsel %vm1789, %v1741, %v1805
        %v1822 = vsel %vm1790, %v1742, %v1806
        %v1823 = vsel %vm1791, %v1743, %v1807
        %v1824 = vsel %vm1792, %v1744, %v1808
        %v1825 = vsel %vm1793, %v1745, %v1809
        %v1826 = vsel %vm1794, %v1746, %v1810
        %v1827 = vsel %vm1795, %v1747, %v1811
        %v1828 = vsel %vm1796, %v1748, %v1812
        %v1829 = vsel %vm1797, %v1749, %v1813
        %v1830 = vsel %vm1798, %v1750, %v1814
        %v1831 = vsel %vm1799, %v1751, %v1815
        %v1832 = vsel %vm1800, %v1752, %v1816
        %v1833 = vsel %vm1801, %v1753, %v1817
        %v1834 = vsel %vm1802, %v1754, %v1818
        %v1835 = vsel %vm1803, %v1755, %v1819
        %vm1836 = vcmask 7168
        %1837 = vst.msk [vmem:[#allocation5] sm:$0xff] %vm1836, %v1820
        %1838 = vst.msk [vmem:[#allocation5 + $0x8] sm:$0xff] %vm1836, %v1821
        %1839 = vst.msk [vmem:[#allocation5 + $0x10] sm:$0xff] %vm1836, %v1822
        %1840 = vst.msk [vmem:[#allocation5 + $0x18] sm:$0xff] %vm1836, %v1823
        %1841 = vst.msk [vmem:[#allocation5 + $0x20] sm:$0xff] %vm1836, %v1824
        %1842 = vst.msk [vmem:[#allocation5 + $0x28] sm:$0xff] %vm1836, %v1825
        %1843 = vst.msk [vmem:[#allocation5 + $0x30] sm:$0xff] %vm1836, %v1826
        %1844 = vst.msk [vmem:[#allocation5 + $0x38] sm:$0xff] %vm1836, %v1827
        %1845 = vst.msk [vmem:[#allocation5 + $0x40] sm:$0xff] %vm1836, %v1828
        %1846 = vst.msk [vmem:[#allocation5 + $0x48] sm:$0xff] %vm1836, %v1829
        %1847 = vst.msk [vmem:[#allocation5 + $0x50] sm:$0xff] %vm1836, %v1830
        %1848 = vst.msk [vmem:[#allocation5 + $0x58] sm:$0xff] %vm1836, %v1831
        %1849 = vst.msk [vmem:[#allocation5 + $0x60] sm:$0xff] %vm1836, %v1832
        %1850 = vst.msk [vmem:[#allocation5 + $0x68] sm:$0xff] %vm1836, %v1833
        %1851 = vst.msk [vmem:[#allocation5 + $0x70] sm:$0xff] %vm1836, %v1834
        %1852 = vst.msk [vmem:[#allocation5 + $0x78] sm:$0xff] %vm1836, %v1835
        %v1853 = vld [vmem:[#allocation3] sm:$0xff]
        %v1854 = vld [vmem:[#allocation3 + $0x8] sm:$0xff]
        %v1855 = vld [vmem:[#allocation3 + $0x10] sm:$0xff]
        %v1856 = vld [vmem:[#allocation3 + $0x18] sm:$0xff]
        %v1857 = vld [vmem:[#allocation3 + $0x20] sm:$0xff]
        %v1858 = vld [vmem:[#allocation3 + $0x28] sm:$0xff]
        %v1859 = vld [vmem:[#allocation3 + $0x30] sm:$0xff]
        %v1860 = vld [vmem:[#allocation3 + $0x38] sm:$0xff]
        %v1861 = vld [vmem:[#allocation3 + $0x40] sm:$0xff]
        %v1862 = vld [vmem:[#allocation3 + $0x48] sm:$0xff]
        %v1863 = vld [vmem:[#allocation3 + $0x50] sm:$0xff]
        %v1864 = vld [vmem:[#allocation3 + $0x58] sm:$0xff]
        %v1865 = vld [vmem:[#allocation3 + $0x60] sm:$0xff]
        %v1866 = vld [vmem:[#allocation3 + $0x68] sm:$0xff]
        %v1867 = vld [vmem:[#allocation3 + $0x70] sm:$0xff]
        %v1868 = vld [vmem:[#allocation3 + $0x78] sm:$0xff]
        %v1869 = vsub.f32 %v1756, %v1772
        %v1870 = vsub.f32 %v1757, %v1773
        %v1871 = vsub.f32 %v1758, %v1774
        %v1872 = vsub.f32 %v1759, %v1775
        %v1873 = vsub.f32 %v1760, %v1776
        %v1874 = vsub.f32 %v1761, %v1777
        %v1875 = vsub.f32 %v1762, %v1778
        %v1876 = vsub.f32 %v1763, %v1779
        %v1877 = vsub.f32 %v1764, %v1780
        %v1878 = vsub.f32 %v1765, %v1781
        %v1879 = vsub.f32 %v1766, %v1782
        %v1880 = vsub.f32 %v1767, %v1783
        %v1881 = vsub.f32 %v1768, %v1784
        %v1882 = vsub.f32 %v1769, %v1785
        %v1883 = vsub.f32 %v1770, %v1786
        %v1884 = vsub.f32 %v1771, %v1787
        %v1885 = vmul.f32 %v1869, 1.442695
        %v1886 = vpow.pop %v1885
        %v1887 = vmul.f32 %v1870, 1.442695
        %v1888 = vpow.pop %v1887
        %v1889 = vmul.f32 %v1871, 1.442695
        %v1890 = vpow.pop %v1889
        %v1891 = vmul.f32 %v1872, 1.442695
        %v1892 = vpow.pop %v1891
        %v1893 = vmul.f32 %v1873, 1.442695
        %v1894 = vpow.pop %v1893
        %v1895 = vmul.f32 %v1874, 1.442695
        %v1896 = vpow.pop %v1895
        %v1897 = vmul.f32 %v1875, 1.442695
        %v1898 = vpow.pop %v1897
        %v1899 = vmul.f32 %v1876, 1.442695
        %v1900 = vpow.pop %v1899
        %v1901 = vmul.f32 %v1877, 1.442695
        %v1902 = vpow.pop %v1901
        %v1903 = vmul.f32 %v1878, 1.442695
        %v1904 = vpow.pop %v1903
        %v1905 = vmul.f32 %v1879, 1.442695
        %v1906 = vpow.pop %v1905
        %v1907 = vmul.f32 %v1880, 1.442695
        %v1908 = vpow.pop %v1907
        %v1909 = vmul.f32 %v1881, 1.442695
        %v1910 = vpow.pop %v1909
        %v1911 = vmul.f32 %v1882, 1.442695
        %v1912 = vpow.pop %v1911
        %v1913 = vmul.f32 %v1883, 1.442695
        %v1914 = vpow.pop %v1913
        %v1915 = vmul.f32 %v1884, 1.442695
        %v1916 = vpow.pop %v1915
        %v1917 = vmul.f32 %v1853, %v1886
        %v1918 = vmul.f32 %v1854, %v1888
        %v1919 = vmul.f32 %v1855, %v1890
        %v1920 = vmul.f32 %v1856, %v1892
        %v1921 = vmul.f32 %v1857, %v1894
        %v1922 = vmul.f32 %v1858, %v1896
        %v1923 = vmul.f32 %v1859, %v1898
        %v1924 = vmul.f32 %v1860, %v1900
        %v1925 = vmul.f32 %v1861, %v1902
        %v1926 = vmul.f32 %v1862, %v1904
        %v1927 = vmul.f32 %v1863, %v1906
        %v1928 = vmul.f32 %v1864, %v1908
        %v1929 = vmul.f32 %v1865, %v1910
        %v1930 = vmul.f32 %v1866, %v1912
        %v1931 = vmul.f32 %v1867, %v1914
        %v1932 = vmul.f32 %v1868, %v1916
        %1934 = vset.pattern.permute.xlu0 0
        %1935 = vperm.xlu0 %1934, %v1772
        %v1936 = vpop.permute.xlu0 %1935
        %1939 = vset.pattern.permute.xlu0 0
        %1940 = vperm.xlu0 %1939, %v1773
        %v1941 = vpop.permute.xlu0 %1940
        %1944 = vset.pattern.permute.xlu0 0
        %1945 = vperm.xlu0 %1944, %v1774
        %v1946 = vpop.permute.xlu0 %1945
        %1949 = vset.pattern.permute.xlu0 0
        %1950 = vperm.xlu0 %1949, %v1775
        %v1951 = vpop.permute.xlu0 %1950
        %1954 = vset.pattern.permute.xlu0 0
        %1955 = vperm.xlu0 %1954, %v1776
        %v1956 = vpop.permute.xlu0 %1955
        %1959 = vset.pattern.permute.xlu0 0
        %1960 = vperm.xlu0 %1959, %v1777
        %v1961 = vpop.permute.xlu0 %1960
        %1964 = vset.pattern.permute.xlu0 0
        %1965 = vperm.xlu0 %1964, %v1778
        %v1966 = vpop.permute.xlu0 %1965
        %1969 = vset.pattern.permute.xlu0 0
        %1970 = vperm.xlu0 %1969, %v1779
        %v1971 = vpop.permute.xlu0 %1970
        %1974 = vset.pattern.permute.xlu0 0
        %1975 = vperm.xlu0 %1974, %v1780
        %v1976 = vpop.permute.xlu0 %1975
        %1979 = vset.pattern.permute.xlu0 0
        %1980 = vperm.xlu0 %1979, %v1781
        %v1981 = vpop.permute.xlu0 %1980
        %1984 = vset.pattern.permute.xlu0 0
        %1985 = vperm.xlu0 %1984, %v1782
        %v1986 = vpop.permute.xlu0 %1985
        %1989 = vset.pattern.permute.xlu0 0
        %1990 = vperm.xlu0 %1989, %v1783
        %v1991 = vpop.permute.xlu0 %1990
        %1994 = vset.pattern.permute.xlu0 0
        %1995 = vperm.xlu0 %1994, %v1784
        %v1996 = vpop.permute.xlu0 %1995
        %1999 = vset.pattern.permute.xlu0 0
        %2000 = vperm.xlu0 %1999, %v1785
        %v2001 = vpop.permute.xlu0 %2000
        %2004 = vset.pattern.permute.xlu0 0
        %2005 = vperm.xlu0 %2004, %v1786
        %v2006 = vpop.permute.xlu0 %2005
        %2009 = vset.pattern.permute.xlu0 0
        %2010 = vperm.xlu0 %2009, %v1787
        %v2011 = vpop.permute.xlu0 %2010
        %v2013 = vsub.f32 %v998, %v1936
        %v2014 = vsub.f32 %v1000, %v1936
        %v2015 = vsub.f32 %v1111, %v1936
        %v2016 = vsub.f32 %v1113, %v1936
        %v2017 = vsub.f32 %v1002, %v1941
        %v2018 = vsub.f32 %v1004, %v1941
        %v2019 = vsub.f32 %v1115, %v1941
        %v2020 = vsub.f32 %v1117, %v1941
        %v2021 = vsub.f32 %v1008, %v1946
        %v2022 = vsub.f32 %v1010, %v1946
        %v2023 = vsub.f32 %v1121, %v1946
        %v2024 = vsub.f32 %v1123, %v1946
        %v2025 = vsub.f32 %v1012, %v1951
        %v2026 = vsub.f32 %v1014, %v1951
        %v2027 = vsub.f32 %v1125, %v1951
        %v2028 = vsub.f32 %v1127, %v1951
        %v2029 = vsub.f32 %v1018, %v1956
        %v2030 = vsub.f32 %v1020, %v1956
        %v2031 = vsub.f32 %v1131, %v1956
        %v2032 = vsub.f32 %v1133, %v1956
        %v2033 = vsub.f32 %v1022, %v1961
        %v2034 = vsub.f32 %v1024, %v1961
        %v2035 = vsub.f32 %v1135, %v1961
        %v2036 = vsub.f32 %v1137, %v1961
        %v2037 = vsub.f32 %v1028, %v1966
        %v2038 = vsub.f32 %v1030, %v1966
        %v2039 = vsub.f32 %v1141, %v1966
        %v2040 = vsub.f32 %v1143, %v1966
        %v2041 = vsub.f32 %v1032, %v1971
        %v2042 = vsub.f32 %v1034, %v1971
        %v2043 = vsub.f32 %v1145, %v1971
        %v2044 = vsub.f32 %v1147, %v1971
        %v2045 = vsub.f32 %v1038, %v1976
        %v2046 = vsub.f32 %v1040, %v1976
        %v2047 = vsub.f32 %v1151, %v1976
        %v2048 = vsub.f32 %v1153, %v1976
        %v2049 = vsub.f32 %v1042, %v1981
        %v2050 = vsub.f32 %v1044, %v1981
        %v2051 = vsub.f32 %v1155, %v1981
        %v2052 = vsub.f32 %v1157, %v1981
        %v2053 = vsub.f32 %v1048, %v1986
        %v2054 = vsub.f32 %v1050, %v1986
        %v2055 = vsub.f32 %v1161, %v1986
        %v2056 = vsub.f32 %v1163, %v1986
        %v2057 = vsub.f32 %v1052, %v1991
        %v2058 = vsub.f32 %v1054, %v1991
        %v2059 = vsub.f32 %v1165, %v1991
        %v2060 = vsub.f32 %v1167, %v1991
        %v2061 = vsub.f32 %v1058, %v1996
        %v2062 = vsub.f32 %v1060, %v1996
        %v2063 = vsub.f32 %v1171, %v1996
        %v2064 = vsub.f32 %v1173, %v1996
        %v2065 = vsub.f32 %v1062, %v2001
        %v2066 = vsub.f32 %v1064, %v2001
        %v2067 = vsub.f32 %v1175, %v2001
        %v2068 = vsub.f32 %v1177, %v2001
        %v2069 = vsub.f32 %v1068, %v2006
        %v2070 = vsub.f32 %v1070, %v2006
        %v2071 = vsub.f32 %v1181, %v2006
        %v2072 = vsub.f32 %v1183, %v2006
        %v2073 = vsub.f32 %v1072, %v2011
        %v2074 = vsub.f32 %v1074, %v2011
        %v2075 = vsub.f32 %v1185, %v2011
        %v2076 = vsub.f32 %v1187, %v2011
        %v2077 = vmul.f32 %v2013, 1.442695
        %v2078 = vpow.pop %v2077
        %v2079 = vmul.f32 %v2014, 1.442695
        %v2080 = vpow.pop %v2079
        %v2081 = vmul.f32 %v2015, 1.442695
        %v2082 = vpow.pop %v2081
        %v2083 = vmul.f32 %v2016, 1.442695
        %v2084 = vpow.pop %v2083
        %v2085 = vmul.f32 %v2017, 1.442695
        %v2086 = vpow.pop %v2085
        %v2087 = vmul.f32 %v2018, 1.442695
        %v2088 = vpow.pop %v2087
        %v2089 = vmul.f32 %v2019, 1.442695
        %v2090 = vpow.pop %v2089
        %v2091 = vmul.f32 %v2020, 1.442695
        %v2092 = vpow.pop %v2091
        %v2093 = vmul.f32 %v2021, 1.442695
        %v2094 = vpow.pop %v2093
        %v2095 = vmul.f32 %v2022, 1.442695
        %v2096 = vpow.pop %v2095
        %v2097 = vmul.f32 %v2023, 1.442695
        %v2098 = vpow.pop %v2097
        %v2099 = vmul.f32 %v2024, 1.442695
        %v2100 = vpow.pop %v2099
        %v2101 = vmul.f32 %v2025, 1.442695
        %v2102 = vpow.pop %v2101
        %v2103 = vmul.f32 %v2026, 1.442695
        %v2104 = vpow.pop %v2103
        %v2105 = vmul.f32 %v2027, 1.442695
        %v2106 = vpow.pop %v2105
        %v2107 = vmul.f32 %v2028, 1.442695
        %v2108 = vpow.pop %v2107
        %v2109 = vmul.f32 %v2029, 1.442695
        %v2110 = vpow.pop %v2109
        %v2111 = vmul.f32 %v2030, 1.442695
        %v2112 = vpow.pop %v2111
        %v2113 = vmul.f32 %v2031, 1.442695
        %v2114 = vpow.pop %v2113
        %v2115 = vmul.f32 %v2032, 1.442695
        %v2116 = vpow.pop %v2115
        %v2117 = vmul.f32 %v2033, 1.442695
        %v2118 = vpow.pop %v2117
        %v2119 = vmul.f32 %v2034, 1.442695
        %v2120 = vpow.pop %v2119
        %v2121 = vmul.f32 %v2035, 1.442695
        %v2122 = vpow.pop %v2121
        %v2123 = vmul.f32 %v2036, 1.442695
        %v2124 = vpow.pop %v2123
        %v2125 = vmul.f32 %v2037, 1.442695
        %v2126 = vpow.pop %v2125
        %v2127 = vmul.f32 %v2038, 1.442695
        %v2128 = vpow.pop %v2127
        %v2129 = vmul.f32 %v2039, 1.442695
        %v2130 = vpow.pop %v2129
        %v2131 = vmul.f32 %v2040, 1.442695
        %v2132 = vpow.pop %v2131
        %v2133 = vmul.f32 %v2041, 1.442695
        %v2134 = vpow.pop %v2133
        %v2135 = vmul.f32 %v2042, 1.442695
        %v2136 = vpow.pop %v2135
        %v2137 = vmul.f32 %v2043, 1.442695
        %v2138 = vpow.pop %v2137
        %v2139 = vmul.f32 %v2044, 1.442695
        %v2140 = vpow.pop %v2139
        %v2141 = vmul.f32 %v2045, 1.442695
        %v2142 = vpow.pop %v2141
        %v2143 = vmul.f32 %v2046, 1.442695
        %v2144 = vpow.pop %v2143
        %v2145 = vmul.f32 %v2047, 1.442695
        %v2146 = vpow.pop %v2145
        %v2147 = vmul.f32 %v2048, 1.442695
        %v2148 = vpow.pop %v2147
        %v2149 = vmul.f32 %v2049, 1.442695
        %v2150 = vpow.pop %v2149
        %v2151 = vmul.f32 %v2050, 1.442695
        %v2152 = vpow.pop %v2151
        %v2153 = vmul.f32 %v2051, 1.442695
        %v2154 = vpow.pop %v2153
        %v2155 = vmul.f32 %v2052, 1.442695
        %v2156 = vpow.pop %v2155
        %v2157 = vmul.f32 %v2053, 1.442695
        %v2158 = vpow.pop %v2157
        %v2159 = vmul.f32 %v2054, 1.442695
        %v2160 = vpow.pop %v2159
        %v2161 = vmul.f32 %v2055, 1.442695
        %v2162 = vpow.pop %v2161
        %v2163 = vmul.f32 %v2056, 1.442695
        %v2164 = vpow.pop %v2163
        %v2165 = vmul.f32 %v2057, 1.442695
        %v2166 = vpow.pop %v2165
        %v2167 = vmul.f32 %v2058, 1.442695
        %v2168 = vpow.pop %v2167
        %v2169 = vmul.f32 %v2059, 1.442695
        %v2170 = vpow.pop %v2169
        %v2171 = vmul.f32 %v2060, 1.442695
        %v2172 = vpow.pop %v2171
        %v2173 = vmul.f32 %v2061, 1.442695
        %v2174 = vpow.pop %v2173
        %v2175 = vmul.f32 %v2062, 1.442695
        %v2176 = vpow.pop %v2175
        %v2177 = vmul.f32 %v2063, 1.442695
        %v2178 = vpow.pop %v2177
        %v2179 = vmul.f32 %v2064, 1.442695
        %v2180 = vpow.pop %v2179
        %v2181 = vmul.f32 %v2065, 1.442695
        %v2182 = vpow.pop %v2181
        %v2183 = vmul.f32 %v2066, 1.442695
        %v2184 = vpow.pop %v2183
        %v2185 = vmul.f32 %v2067, 1.442695
        %v2186 = vpow.pop %v2185
        %v2187 = vmul.f32 %v2068, 1.442695
        %v2188 = vpow.pop %v2187
        %v2189 = vmul.f32 %v2069, 1.442695
        %v2190 = vpow.pop %v2189
        %v2191 = vmul.f32 %v2070, 1.442695
        %v2192 = vpow.pop %v2191
        %v2193 = vmul.f32 %v2071, 1.442695
        %v2194 = vpow.pop %v2193
        %v2195 = vmul.f32 %v2072, 1.442695
        %v2196 = vpow.pop %v2195
        %v2197 = vmul.f32 %v2073, 1.442695
        %v2198 = vpow.pop %v2197
        %v2199 = vmul.f32 %v2074, 1.442695
        %v2200 = vpow.pop %v2199
        %v2201 = vmul.f32 %v2075, 1.442695
        %v2202 = vpow.pop %v2201
        %v2203 = vmul.f32 %v2076, 1.442695
        %v2204 = vpow.pop %v2203
        %v2205 = vadd.f32 %v2078, %v2080
        %v2206 = vadd.f32 %v2205, %v2082
        %v2207 = vadd.f32 %v2206, %v2084
        %2208 = vadd.xlane.f32.xlu0 %v2207
        %v2209 = vpop.xlane.xlu0 %2208
        %v2210 = vadd.f32 %v2086, %v2088
        %v2211 = vadd.f32 %v2210, %v2090
        %v2212 = vadd.f32 %v2211, %v2092
        %2213 = vadd.xlane.f32.xlu0 %v2212
        %v2214 = vpop.xlane.xlu0 %2213
        %v2215 = vadd.f32 %v2094, %v2096
        %v2216 = vadd.f32 %v2215, %v2098
        %v2217 = vadd.f32 %v2216, %v2100
        %2218 = vadd.xlane.f32.xlu0 %v2217
        %v2219 = vpop.xlane.xlu0 %2218
        %v2220 = vadd.f32 %v2102, %v2104
        %v2221 = vadd.f32 %v2220, %v2106
        %v2222 = vadd.f32 %v2221, %v2108
        %2223 = vadd.xlane.f32.xlu0 %v2222
        %v2224 = vpop.xlane.xlu0 %2223
        %v2225 = vadd.f32 %v2110, %v2112
        %v2226 = vadd.f32 %v2225, %v2114
        %v2227 = vadd.f32 %v2226, %v2116
        %2228 = vadd.xlane.f32.xlu0 %v2227
        %v2229 = vpop.xlane.xlu0 %2228
        %v2230 = vadd.f32 %v2118, %v2120
        %v2231 = vadd.f32 %v2230, %v2122
        %v2232 = vadd.f32 %v2231, %v2124
        %2233 = vadd.xlane.f32.xlu0 %v2232
        %v2234 = vpop.xlane.xlu0 %2233
        %v2235 = vadd.f32 %v2126, %v2128
        %v2236 = vadd.f32 %v2235, %v2130
        %v2237 = vadd.f32 %v2236, %v2132
        %2238 = vadd.xlane.f32.xlu0 %v2237
        %v2239 = vpop.xlane.xlu0 %2238
        %v2240 = vadd.f32 %v2134, %v2136
        %v2241 = vadd.f32 %v2240, %v2138
        %v2242 = vadd.f32 %v2241, %v2140
        %2243 = vadd.xlane.f32.xlu0 %v2242
        %v2244 = vpop.xlane.xlu0 %2243
        %v2245 = vadd.f32 %v2142, %v2144
        %v2246 = vadd.f32 %v2245, %v2146
        %v2247 = vadd.f32 %v2246, %v2148
        %2248 = vadd.xlane.f32.xlu0 %v2247
        %v2249 = vpop.xlane.xlu0 %2248
        %v2250 = vadd.f32 %v2150, %v2152
        %v2251 = vadd.f32 %v2250, %v2154
        %v2252 = vadd.f32 %v2251, %v2156
        %2253 = vadd.xlane.f32.xlu0 %v2252
        %v2254 = vpop.xlane.xlu0 %2253
        %v2255 = vadd.f32 %v2158, %v2160
        %v2256 = vadd.f32 %v2255, %v2162
        %v2257 = vadd.f32 %v2256, %v2164
        %2258 = vadd.xlane.f32.xlu0 %v2257
        %v2259 = vpop.xlane.xlu0 %2258
        %v2260 = vadd.f32 %v2166, %v2168
        %v2261 = vadd.f32 %v2260, %v2170
        %v2262 = vadd.f32 %v2261, %v2172
        %2263 = vadd.xlane.f32.xlu0 %v2262
        %v2264 = vpop.xlane.xlu0 %2263
        %v2265 = vadd.f32 %v2174, %v2176
        %v2266 = vadd.f32 %v2265, %v2178
        %v2267 = vadd.f32 %v2266, %v2180
        %2268 = vadd.xlane.f32.xlu0 %v2267
        %v2269 = vpop.xlane.xlu0 %2268
        %v2270 = vadd.f32 %v2182, %v2184
        %v2271 = vadd.f32 %v2270, %v2186
        %v2272 = vadd.f32 %v2271, %v2188
        %2273 = vadd.xlane.f32.xlu0 %v2272
        %v2274 = vpop.xlane.xlu0 %2273
        %v2275 = vadd.f32 %v2190, %v2192
        %v2276 = vadd.f32 %v2275, %v2194
        %v2277 = vadd.f32 %v2276, %v2196
        %2278 = vadd.xlane.f32.xlu0 %v2277
        %v2279 = vpop.xlane.xlu0 %2278
        %v2280 = vadd.f32 %v2198, %v2200
        %v2281 = vadd.f32 %v2280, %v2202
        %v2282 = vadd.f32 %v2281, %v2204
        %2283 = vadd.xlane.f32.xlu0 %v2282
        %v2284 = vpop.xlane.xlu0 %2283
        %v2285 = vadd.f32 %v1917, %v2209
        %v2286 = vadd.f32 %v1918, %v2214
        %v2287 = vadd.f32 %v1919, %v2219
        %v2288 = vadd.f32 %v1920, %v2224
        %v2289 = vadd.f32 %v1921, %v2229
        %v2290 = vadd.f32 %v1922, %v2234
        %v2291 = vadd.f32 %v1923, %v2239
        %v2292 = vadd.f32 %v1924, %v2244
        %v2293 = vadd.f32 %v1925, %v2249
        %v2294 = vadd.f32 %v1926, %v2254
        %v2295 = vadd.f32 %v1927, %v2259
        %v2296 = vadd.f32 %v1928, %v2264
        %v2297 = vadd.f32 %v1929, %v2269
        %v2298 = vadd.f32 %v1930, %v2274
        %v2299 = vadd.f32 %v1931, %v2279
        %v2300 = vadd.f32 %v1932, %v2284
        %2301 = vst.msk [vmem:[#allocation3] sm:$0xff] %vm1836, %v2285
        %2302 = vst.msk [vmem:[#allocation3 + $0x8] sm:$0xff] %vm1836, %v2286
        %2303 = vst.msk [vmem:[#allocation3 + $0x10] sm:$0xff] %vm1836, %v2287
        %2304 = vst.msk [vmem:[#allocation3 + $0x18] sm:$0xff] %vm1836, %v2288
        %2305 = vst.msk [vmem:[#allocation3 + $0x20] sm:$0xff] %vm1836, %v2289
        %2306 = vst.msk [vmem:[#allocation3 + $0x28] sm:$0xff] %vm1836, %v2290
        %2307 = vst.msk [vmem:[#allocation3 + $0x30] sm:$0xff] %vm1836, %v2291
        %2308 = vst.msk [vmem:[#allocation3 + $0x38] sm:$0xff] %vm1836, %v2292
        %2309 = vst.msk [vmem:[#allocation3 + $0x40] sm:$0xff] %vm1836, %v2293
        %2310 = vst.msk [vmem:[#allocation3 + $0x48] sm:$0xff] %vm1836, %v2294
        %2311 = vst.msk [vmem:[#allocation3 + $0x50] sm:$0xff] %vm1836, %v2295
        %2312 = vst.msk [vmem:[#allocation3 + $0x58] sm:$0xff] %vm1836, %v2296
        %2313 = vst.msk [vmem:[#allocation3 + $0x60] sm:$0xff] %vm1836, %v2297
        %2314 = vst.msk [vmem:[#allocation3 + $0x68] sm:$0xff] %vm1836, %v2298
        %2315 = vst.msk [vmem:[#allocation3 + $0x70] sm:$0xff] %vm1836, %v2299
        %2316 = vst.msk [vmem:[#allocation3 + $0x78] sm:$0xff] %vm1836, %v2300
        %2317 = vst.msk [vmem:[#allocation2] sm:$0xff] %vm1836, %v1772
        %2318 = vst.msk [vmem:[#allocation2 + $0x8] sm:$0xff] %vm1836, %v1773
        %2319 = vst.msk [vmem:[#allocation2 + $0x10] sm:$0xff] %vm1836, %v1774
        %2320 = vst.msk [vmem:[#allocation2 + $0x18] sm:$0xff] %vm1836, %v1775
        %2321 = vst.msk [vmem:[#allocation2 + $0x20] sm:$0xff] %vm1836, %v1776
        %2322 = vst.msk [vmem:[#allocation2 + $0x28] sm:$0xff] %vm1836, %v1777
        %2323 = vst.msk [vmem:[#allocation2 + $0x30] sm:$0xff] %vm1836, %v1778
        %2324 = vst.msk [vmem:[#allocation2 + $0x38] sm:$0xff] %vm1836, %v1779
        %2325 = vst.msk [vmem:[#allocation2 + $0x40] sm:$0xff] %vm1836, %v1780
        %2326 = vst.msk [vmem:[#allocation2 + $0x48] sm:$0xff] %vm1836, %v1781
        %2327 = vst.msk [vmem:[#allocation2 + $0x50] sm:$0xff] %vm1836, %v1782
        %2328 = vst.msk [vmem:[#allocation2 + $0x58] sm:$0xff] %vm1836, %v1783
        %2329 = vst.msk [vmem:[#allocation2 + $0x60] sm:$0xff] %vm1836, %v1784
        %2330 = vst.msk [vmem:[#allocation2 + $0x68] sm:$0xff] %vm1836, %v1785
        %2331 = vst.msk [vmem:[#allocation2 + $0x70] sm:$0xff] %vm1836, %v1786
        %2332 = vst.msk [vmem:[#allocation2 + $0x78] sm:$0xff] %vm1836, %v1787
        %v2333 = vadd.s32 %v1207, %v1739
        %v2334 = vadd.s32 %v1208, %v1739
        %v2335 = vadd.s32 %v1209, %v1739
        %v2336 = vadd.s32 %v1210, %v1739
        %2337 = vset.pattern.permute.xlu0 0
        %2338 = vperm.xlu0 %2337, %v1189
        %v2339 = vpop.permute.xlu0 %2338
        %2340 = vset.pattern.permute.xlu0 0
        %2341 = vperm.xlu0 %2340, %v1190
        %v2342 = vpop.permute.xlu0 %2341
        %2343 = vset.pattern.permute.xlu0 0
        %2344 = vperm.xlu0 %2343, %v1191
        %v2345 = vpop.permute.xlu0 %2344
        %2346 = vset.pattern.permute.xlu0 0
        %2347 = vperm.xlu0 %2346, %v1192
        %v2348 = vpop.permute.xlu0 %2347
        %2349 = vset.pattern.permute.xlu0 0
        %2350 = vperm.xlu0 %2349, %v1193
        %v2351 = vpop.permute.xlu0 %2350
        %2352 = vset.pattern.permute.xlu0 0
        %2353 = vperm.xlu0 %2352, %v1194
        %v2354 = vpop.permute.xlu0 %2353
        %2355 = vset.pattern.permute.xlu0 0
        %2356 = vperm.xlu0 %2355, %v1195
        %v2357 = vpop.permute.xlu0 %2356
        %2358 = vset.pattern.permute.xlu0 0
        %2359 = vperm.xlu0 %2358, %v1196
        %v2360 = vpop.permute.xlu0 %2359
        %2361 = vset.pattern.permute.xlu0 0
        %2362 = vperm.xlu0 %2361, %v1197
        %v2363 = vpop.permute.xlu0 %2362
        %2364 = vset.pattern.permute.xlu0 0
        %2365 = vperm.xlu0 %2364, %v1198
        %v2366 = vpop.permute.xlu0 %2365
        %2367 = vset.pattern.permute.xlu0 0
        %2368 = vperm.xlu0 %2367, %v1199
        %v2369 = vpop.permute.xlu0 %2368
        %2370 = vset.pattern.permute.xlu0 0
        %2371 = vperm.xlu0 %2370, %v1200
        %v2372 = vpop.permute.xlu0 %2371
        %2373 = vset.pattern.permute.xlu0 0
        %2374 = vperm.xlu0 %2373, %v1201
        %v2375 = vpop.permute.xlu0 %2374
        %2376 = vset.pattern.permute.xlu0 0
        %2377 = vperm.xlu0 %2376, %v1202
        %v2378 = vpop.permute.xlu0 %2377
        %2379 = vset.pattern.permute.xlu0 0
        %2380 = vperm.xlu0 %2379, %v1203
        %v2381 = vpop.permute.xlu0 %2380
        %2382 = vset.pattern.permute.xlu0 0
        %2383 = vperm.xlu0 %2382, %v1204
        %v2384 = vpop.permute.xlu0 %2383
        %vm2385 = vcmp.eq.s32.totalorder %v2333, %v2339
        %vm2386 = vcmp.eq.s32.totalorder %v2334, %v2339
        %vm2387 = vcmp.eq.s32.totalorder %v2335, %v2339
        %vm2388 = vcmp.eq.s32.totalorder %v2336, %v2339
        %vm2389 = vcmp.eq.s32.totalorder %v2333, %v2342
        %vm2390 = vcmp.eq.s32.totalorder %v2334, %v2342
        %vm2391 = vcmp.eq.s32.totalorder %v2335, %v2342
        %vm2392 = vcmp.eq.s32.totalorder %v2336, %v2342
        %vm2393 = vcmp.eq.s32.totalorder %v2333, %v2345
        %vm2394 = vcmp.eq.s32.totalorder %v2334, %v2345
        %vm2395 = vcmp.eq.s32.totalorder %v2335, %v2345
        %vm2396 = vcmp.eq.s32.totalorder %v2336, %v2345
        %vm2397 = vcmp.eq.s32.totalorder %v2333, %v2348
        %vm2398 = vcmp.eq.s32.totalorder %v2334, %v2348
        %vm2399 = vcmp.eq.s32.totalorder %v2335, %v2348
        %vm2400 = vcmp.eq.s32.totalorder %v2336, %v2348
        %vm2401 = vcmp.eq.s32.totalorder %v2333, %v2351
        %vm2402 = vcmp.eq.s32.totalorder %v2334, %v2351
        %vm2403 = vcmp.eq.s32.totalorder %v2335, %v2351
        %vm2404 = vcmp.eq.s32.totalorder %v2336, %v2351
        %vm2405 = vcmp.eq.s32.totalorder %v2333, %v2354
        %vm2406 = vcmp.eq.s32.totalorder %v2334, %v2354
        %vm2407 = vcmp.eq.s32.totalorder %v2335, %v2354
        %vm2408 = vcmp.eq.s32.totalorder %v2336, %v2354
        %vm2409 = vcmp.eq.s32.totalorder %v2333, %v2357
        %vm2410 = vcmp.eq.s32.totalorder %v2334, %v2357
        %vm2411 = vcmp.eq.s32.totalorder %v2335, %v2357
        %vm2412 = vcmp.eq.s32.totalorder %v2336, %v2357
        %vm2413 = vcmp.eq.s32.totalorder %v2333, %v2360
        %vm2414 = vcmp.eq.s32.totalorder %v2334, %v2360
        %vm2415 = vcmp.eq.s32.totalorder %v2335, %v2360
        %vm2416 = vcmp.eq.s32.totalorder %v2336, %v2360
        %vm2417 = vcmp.eq.s32.totalorder %v2333, %v2363
        %vm2418 = vcmp.eq.s32.totalorder %v2334, %v2363
        %vm2419 = vcmp.eq.s32.totalorder %v2335, %v2363
        %vm2420 = vcmp.eq.s32.totalorder %v2336, %v2363
        %vm2421 = vcmp.eq.s32.totalorder %v2333, %v2366
        %vm2422 = vcmp.eq.s32.totalorder %v2334, %v2366
        %vm2423 = vcmp.eq.s32.totalorder %v2335, %v2366
        %vm2424 = vcmp.eq.s32.totalorder %v2336, %v2366
        %vm2425 = vcmp.eq.s32.totalorder %v2333, %v2369
        %vm2426 = vcmp.eq.s32.totalorder %v2334, %v2369
        %vm2427 = vcmp.eq.s32.totalorder %v2335, %v2369
        %vm2428 = vcmp.eq.s32.totalorder %v2336, %v2369
        %vm2429 = vcmp.eq.s32.totalorder %v2333, %v2372
        %vm2430 = vcmp.eq.s32.totalorder %v2334, %v2372
        %vm2431 = vcmp.eq.s32.totalorder %v2335, %v2372
        %vm2432 = vcmp.eq.s32.totalorder %v2336, %v2372
        %vm2433 = vcmp.eq.s32.totalorder %v2333, %v2375
        %vm2434 = vcmp.eq.s32.totalorder %v2334, %v2375
        %vm2435 = vcmp.eq.s32.totalorder %v2335, %v2375
        %vm2436 = vcmp.eq.s32.totalorder %v2336, %v2375
        %vm2437 = vcmp.eq.s32.totalorder %v2333, %v2378
        %vm2438 = vcmp.eq.s32.totalorder %v2334, %v2378
        %vm2439 = vcmp.eq.s32.totalorder %v2335, %v2378
        %vm2440 = vcmp.eq.s32.totalorder %v2336, %v2378
        %vm2441 = vcmp.eq.s32.totalorder %v2333, %v2381
        %vm2442 = vcmp.eq.s32.totalorder %v2334, %v2381
        %vm2443 = vcmp.eq.s32.totalorder %v2335, %v2381
        %vm2444 = vcmp.eq.s32.totalorder %v2336, %v2381
        %vm2445 = vcmp.eq.s32.totalorder %v2333, %v2384
        %vm2446 = vcmp.eq.s32.totalorder %v2334, %v2384
        %vm2447 = vcmp.eq.s32.totalorder %v2335, %v2384
        %vm2448 = vcmp.eq.s32.totalorder %v2336, %v2384
        %v2449 = vld [vmem:[#allocation4] sm:$0xff]
        %v2450 = vld [vmem:[#allocation4 + $0x8] sm:$0xff]
        %v2451 = vld [vmem:[#allocation4 + $0x10] sm:$0xff]
        %v2452 = vld [vmem:[#allocation4 + $0x18] sm:$0xff]
        %v2453 = vld [vmem:[#allocation4 + $0x20] sm:$0xff]
        %v2454 = vld [vmem:[#allocation4 + $0x28] sm:$0xff]
        %v2455 = vld [vmem:[#allocation4 + $0x30] sm:$0xff]
        %v2456 = vld [vmem:[#allocation4 + $0x38] sm:$0xff]
        %v2457 = vld [vmem:[#allocation4 + $0x40] sm:$0xff]
        %v2458 = vld [vmem:[#allocation4 + $0x48] sm:$0xff]
        %v2459 = vld [vmem:[#allocation4 + $0x50] sm:$0xff]
        %v2460 = vld [vmem:[#allocation4 + $0x58] sm:$0xff]
        %v2461 = vld [vmem:[#allocation4 + $0x60] sm:$0xff]
        %v2462 = vld [vmem:[#allocation4 + $0x68] sm:$0xff]
        %v2463 = vld [vmem:[#allocation4 + $0x70] sm:$0xff]
        %v2464 = vld [vmem:[#allocation4 + $0x78] sm:$0xff]
        %v2465 = vsel %vm2385, %v998, 0.0
        %v2466 = vsel %vm2386, %v1000, 0.0
        %v2467 = vsel %vm2387, %v1111, 0.0
        %v2468 = vsel %vm2388, %v1113, 0.0
        %v2469 = vsel %vm2389, %v1002, 0.0
        %v2470 = vsel %vm2390, %v1004, 0.0
        %v2471 = vsel %vm2391, %v1115, 0.0
        %v2472 = vsel %vm2392, %v1117, 0.0
        %v2473 = vsel %vm2393, %v1008, 0.0
        %v2474 = vsel %vm2394, %v1010, 0.0
        %v2475 = vsel %vm2395, %v1121, 0.0
        %v2476 = vsel %vm2396, %v1123, 0.0
        %v2477 = vsel %vm2397, %v1012, 0.0
        %v2478 = vsel %vm2398, %v1014, 0.0
        %v2479 = vsel %vm2399, %v1125, 0.0
        %v2480 = vsel %vm2400, %v1127, 0.0
        %v2481 = vsel %vm2401, %v1018, 0.0
        %v2482 = vsel %vm2402, %v1020, 0.0
        %v2483 = vsel %vm2403, %v1131, 0.0
        %v2484 = vsel %vm2404, %v1133, 0.0
        %v2485 = vsel %vm2405, %v1022, 0.0
        %v2486 = vsel %vm2406, %v1024, 0.0
        %v2487 = vsel %vm2407, %v1135, 0.0
        %v2488 = vsel %vm2408, %v1137, 0.0
        %v2489 = vsel %vm2409, %v1028, 0.0
        %v2490 = vsel %vm2410, %v1030, 0.0
        %v2491 = vsel %vm2411, %v1141, 0.0
        %v2492 = vsel %vm2412, %v1143, 0.0
        %v2493 = vsel %vm2413, %v1032, 0.0
        %v2494 = vsel %vm2414, %v1034, 0.0
        %v2495 = vsel %vm2415, %v1145, 0.0
        %v2496 = vsel %vm2416, %v1147, 0.0
        %v2497 = vsel %vm2417, %v1038, 0.0
        %v2498 = vsel %vm2418, %v1040, 0.0
        %v2499 = vsel %vm2419, %v1151, 0.0
        %v2500 = vsel %vm2420, %v1153, 0.0
        %v2501 = vsel %vm2421, %v1042, 0.0
        %v2502 = vsel %vm2422, %v1044, 0.0
        %v2503 = vsel %vm2423, %v1155, 0.0
        %v2504 = vsel %vm2424, %v1157, 0.0
        %v2505 = vsel %vm2425, %v1048, 0.0
        %v2506 = vsel %vm2426, %v1050, 0.0
        %v2507 = vsel %vm2427, %v1161, 0.0
        %v2508 = vsel %vm2428, %v1163, 0.0
        %v2509 = vsel %vm2429, %v1052, 0.0
        %v2510 = vsel %vm2430, %v1054, 0.0
        %v2511 = vsel %vm2431, %v1165, 0.0
        %v2512 = vsel %vm2432, %v1167, 0.0
        %v2513 = vsel %vm2433, %v1058, 0.0
        %v2514 = vsel %vm2434, %v1060, 0.0
        %v2515 = vsel %vm2435, %v1171, 0.0
        %v2516 = vsel %vm2436, %v1173, 0.0
        %v2517 = vsel %vm2437, %v1062, 0.0
        %v2518 = vsel %vm2438, %v1064, 0.0
        %v2519 = vsel %vm2439, %v1175, 0.0
        %v2520 = vsel %vm2440, %v1177, 0.0
        %v2521 = vsel %vm2441, %v1068, 0.0
        %v2522 = vsel %vm2442, %v1070, 0.0
        %v2523 = vsel %vm2443, %v1181, 0.0
        %v2524 = vsel %vm2444, %v1183, 0.0
        %v2525 = vsel %vm2445, %v1072, 0.0
        %v2526 = vsel %vm2446, %v1074, 0.0
        %v2527 = vsel %vm2447, %v1185, 0.0
        %v2528 = vsel %vm2448, %v1187, 0.0
        %v2529 = vadd.f32 %v2465, %v2466
        %v2530 = vadd.f32 %v2529, %v2467
        %v2531 = vadd.f32 %v2530, %v2468
        %2532 = vadd.xlane.f32.xlu0 %v2531
        %v2533 = vpop.xlane.xlu0 %2532
        %v2534 = vadd.f32 %v2469, %v2470
        %v2535 = vadd.f32 %v2534, %v2471
        %v2536 = vadd.f32 %v2535, %v2472
        %2537 = vadd.xlane.f32.xlu0 %v2536
        %v2538 = vpop.xlane.xlu0 %2537
        %v2539 = vadd.f32 %v2473, %v2474
        %v2540 = vadd.f32 %v2539, %v2475
        %v2541 = vadd.f32 %v2540, %v2476
        %2542 = vadd.xlane.f32.xlu0 %v2541
        %v2543 = vpop.xlane.xlu0 %2542
        %v2544 = vadd.f32 %v2477, %v2478
        %v2545 = vadd.f32 %v2544, %v2479
        %v2546 = vadd.f32 %v2545, %v2480
        %2547 = vadd.xlane.f32.xlu0 %v2546
        %v2548 = vpop.xlane.xlu0 %2547
        %v2549 = vadd.f32 %v2481, %v2482
        %v2550 = vadd.f32 %v2549, %v2483
        %v2551 = vadd.f32 %v2550, %v2484
        %2552 = vadd.xlane.f32.xlu0 %v2551
        %v2553 = vpop.xlane.xlu0 %2552
        %v2554 = vadd.f32 %v2485, %v2486
        %v2555 = vadd.f32 %v2554, %v2487
        %v2556 = vadd.f32 %v2555, %v2488
        %2557 = vadd.xlane.f32.xlu0 %v2556
        %v2558 = vpop.xlane.xlu0 %2557
        %v2559 = vadd.f32 %v2489, %v2490
        %v2560 = vadd.f32 %v2559, %v2491
        %v2561 = vadd.f32 %v2560, %v2492
        %2562 = vadd.xlane.f32.xlu0 %v2561
        %v2563 = vpop.xlane.xlu0 %2562
        %v2564 = vadd.f32 %v2493, %v2494
        %v2565 = vadd.f32 %v2564, %v2495
        %v2566 = vadd.f32 %v2565, %v2496
        %2567 = vadd.xlane.f32.xlu0 %v2566
        %v2568 = vpop.xlane.xlu0 %2567
        %v2569 = vadd.f32 %v2497, %v2498
        %v2570 = vadd.f32 %v2569, %v2499
        %v2571 = vadd.f32 %v2570, %v2500
        %2572 = vadd.xlane.f32.xlu0 %v2571
        %v2573 = vpop.xlane.xlu0 %2572
        %v2574 = vadd.f32 %v2501, %v2502
        %v2575 = vadd.f32 %v2574, %v2503
        %v2576 = vadd.f32 %v2575, %v2504
        %2577 = vadd.xlane.f32.xlu0 %v2576
        %v2578 = vpop.xlane.xlu0 %2577
        %v2579 = vadd.f32 %v2505, %v2506
        %v2580 = vadd.f32 %v2579, %v2507
        %v2581 = vadd.f32 %v2580, %v2508
        %2582 = vadd.xlane.f32.xlu0 %v2581
        %v2583 = vpop.xlane.xlu0 %2582
        %v2584 = vadd.f32 %v2509, %v2510
        %v2585 = vadd.f32 %v2584, %v2511
        %v2586 = vadd.f32 %v2585, %v2512
        %2587 = vadd.xlane.f32.xlu0 %v2586
        %v2588 = vpop.xlane.xlu0 %2587
        %v2589 = vadd.f32 %v2513, %v2514
        %v2590 = vadd.f32 %v2589, %v2515
        %v2591 = vadd.f32 %v2590, %v2516
        %2592 = vadd.xlane.f32.xlu0 %v2591
        %v2593 = vpop.xlane.xlu0 %2592
        %v2594 = vadd.f32 %v2517, %v2518
        %v2595 = vadd.f32 %v2594, %v2519
        %v2596 = vadd.f32 %v2595, %v2520
        %2597 = vadd.xlane.f32.xlu0 %v2596
        %v2598 = vpop.xlane.xlu0 %2597
        %v2599 = vadd.f32 %v2521, %v2522
        %v2600 = vadd.f32 %v2599, %v2523
        %v2601 = vadd.f32 %v2600, %v2524
        %2602 = vadd.xlane.f32.xlu0 %v2601
        %v2603 = vpop.xlane.xlu0 %2602
        %v2604 = vadd.f32 %v2525, %v2526
        %v2605 = vadd.f32 %v2604, %v2527
        %v2606 = vadd.f32 %v2605, %v2528
        %2607 = vadd.xlane.f32.xlu0 %v2606
        %v2608 = vpop.xlane.xlu0 %2607
        %v2609 = vadd.f32 %v2449, %v2533
        %v2610 = vadd.f32 %v2450, %v2538
        %v2611 = vadd.f32 %v2451, %v2543
        %v2612 = vadd.f32 %v2452, %v2548
        %v2613 = vadd.f32 %v2453, %v2553
        %v2614 = vadd.f32 %v2454, %v2558
        %v2615 = vadd.f32 %v2455, %v2563
        %v2616 = vadd.f32 %v2456, %v2568
        %v2617 = vadd.f32 %v2457, %v2573
        %v2618 = vadd.f32 %v2458, %v2578
        %v2619 = vadd.f32 %v2459, %v2583
        %v2620 = vadd.f32 %v2460, %v2588
        %v2621 = vadd.f32 %v2461, %v2593
        %v2622 = vadd.f32 %v2462, %v2598
        %v2623 = vadd.f32 %v2463, %v2603
        %v2624 = vadd.f32 %v2464, %v2608
        %2625 = vst.msk [vmem:[#allocation4] sm:$0xff] %vm1836, %v2609
        %2626 = vst.msk [vmem:[#allocation4 + $0x8] sm:$0xff] %vm1836, %v2610
        %2627 = vst.msk [vmem:[#allocation4 + $0x10] sm:$0xff] %vm1836, %v2611
        %2628 = vst.msk [vmem:[#allocation4 + $0x18] sm:$0xff] %vm1836, %v2612
        %2629 = vst.msk [vmem:[#allocation4 + $0x20] sm:$0xff] %vm1836, %v2613
        %2630 = vst.msk [vmem:[#allocation4 + $0x28] sm:$0xff] %vm1836, %v2614
        %2631 = vst.msk [vmem:[#allocation4 + $0x30] sm:$0xff] %vm1836, %v2615
        %2632 = vst.msk [vmem:[#allocation4 + $0x38] sm:$0xff] %vm1836, %v2616
        %2633 = vst.msk [vmem:[#allocation4 + $0x40] sm:$0xff] %vm1836, %v2617
        %2634 = vst.msk [vmem:[#allocation4 + $0x48] sm:$0xff] %vm1836, %v2618
        %2635 = vst.msk [vmem:[#allocation4 + $0x50] sm:$0xff] %vm1836, %v2619
        %2636 = vst.msk [vmem:[#allocation4 + $0x58] sm:$0xff] %vm1836, %v2620
        %2637 = vst.msk [vmem:[#allocation4 + $0x60] sm:$0xff] %vm1836, %v2621
        %2638 = vst.msk [vmem:[#allocation4 + $0x68] sm:$0xff] %vm1836, %v2622
        %2639 = vst.msk [vmem:[#allocation4 + $0x70] sm:$0xff] %vm1836, %v2623
        %2640 = vst.msk [vmem:[#allocation4 + $0x78] sm:$0xff] %vm1836, %v2624
        %p2641 = scmp.eq.s32.totalorder %s29, 2
        // Predicated region
        $region53: #{tpu_custom_call.1} parent=39 // pred_check
          %p2642 = pneg %p2641
        $region54: #{tpu_custom_call.1} parent=39 // pred_check_branch
          %2644 = sbr.rel (%p2642) target = $region56
        $region55: #{tpu_custom_call.1} parent=39 // pred_region
          %v2645 = vld [vmem:[%s381] sm:$0xff]
          %v2646 = vld [vmem:[%s381 + $0x8] sm:$0xff]
          %v2647 = vld [vmem:[%s381 + $0x10] sm:$0xff]
          %v2648 = vld [vmem:[%s381 + $0x18] sm:$0xff]
          %v2649 = vld [vmem:[%s381 + $0x20] sm:$0xff]
          %v2650 = vld [vmem:[%s381 + $0x28] sm:$0xff]
          %v2651 = vld [vmem:[%s381 + $0x30] sm:$0xff]
          %v2652 = vld [vmem:[%s381 + $0x38] sm:$0xff]
          %v2653 = vld [vmem:[%s381 + $0x40] sm:$0xff]
          %v2654 = vld [vmem:[%s381 + $0x48] sm:$0xff]
          %v2655 = vld [vmem:[%s381 + $0x50] sm:$0xff]
          %v2656 = vld [vmem:[%s381 + $0x58] sm:$0xff]
          %v2657 = vld [vmem:[%s381 + $0x60] sm:$0xff]
          %v2658 = vld [vmem:[%s381 + $0x68] sm:$0xff]
          %v2659 = vld [vmem:[%s381 + $0x70] sm:$0xff]
          %v2660 = vld [vmem:[%s381 + $0x78] sm:$0xff]
          %vm2661 = vcmp.ne.s32.totalorder %v1189, 0
          %vm2662 = vcmp.ne.s32.totalorder %v1190, 0
          %vm2663 = vcmp.ne.s32.totalorder %v1191, 0
          %vm2664 = vcmp.ne.s32.totalorder %v1192, 0
          %vm2665 = vcmp.ne.s32.totalorder %v1193, 0
          %vm2666 = vcmp.ne.s32.totalorder %v1194, 0
          %vm2667 = vcmp.ne.s32.totalorder %v1195, 0
          %vm2668 = vcmp.ne.s32.totalorder %v1196, 0
          %vm2669 = vcmp.ne.s32.totalorder %v1197, 0
          %vm2670 = vcmp.ne.s32.totalorder %v1198, 0
          %vm2671 = vcmp.ne.s32.totalorder %v1199, 0
          %vm2672 = vcmp.ne.s32.totalorder %v1200, 0
          %vm2673 = vcmp.ne.s32.totalorder %v1201, 0
          %vm2674 = vcmp.ne.s32.totalorder %v1202, 0
          %vm2675 = vcmp.ne.s32.totalorder %v1203, 0
          %vm2676 = vcmp.ne.s32.totalorder %v1204, 0
          %v2677 = vsel %vm2661, 1, 0
          %v2678 = vsel %vm2662, 1, 0
          %v2679 = vsel %vm2663, 1, 0
          %v2680 = vsel %vm2664, 1, 0
          %v2681 = vsel %vm2665, 1, 0
          %v2682 = vsel %vm2666, 1, 0
          %v2683 = vsel %vm2667, 1, 0
          %v2684 = vsel %vm2668, 1, 0
          %v2685 = vsel %vm2669, 1, 0
          %v2686 = vsel %vm2670, 1, 0
          %v2687 = vsel %vm2671, 1, 0
          %v2688 = vsel %vm2672, 1, 0
          %v2689 = vsel %vm2673, 1, 0
          %v2690 = vsel %vm2674, 1, 0
          %v2691 = vsel %vm2675, 1, 0
          %v2692 = vsel %vm2676, 1, 0
          %v2693 = vcvt.s32.f32 %v2677
          %v2694 = vcvt.s32.f32 %v2678
          %v2695 = vcvt.s32.f32 %v2679
          %v2696 = vcvt.s32.f32 %v2680
          %v2697 = vcvt.s32.f32 %v2681
          %v2698 = vcvt.s32.f32 %v2682
          %v2699 = vcvt.s32.f32 %v2683
          %v2700 = vcvt.s32.f32 %v2684
          %v2701 = vcvt.s32.f32 %v2685
          %v2702 = vcvt.s32.f32 %v2686
          %v2703 = vcvt.s32.f32 %v2687
          %v2704 = vcvt.s32.f32 %v2688
          %v2705 = vcvt.s32.f32 %v2689
          %v2706 = vcvt.s32.f32 %v2690
          %v2707 = vcvt.s32.f32 %v2691
          %v2708 = vcvt.s32.f32 %v2692
          %v2709 = vld [vmem:[#allocation2] sm:$0xff]
          %v2710 = vld [vmem:[#allocation2 + $0x8] sm:$0xff]
          %v2711 = vld [vmem:[#allocation2 + $0x10] sm:$0xff]
          %v2712 = vld [vmem:[#allocation2 + $0x18] sm:$0xff]
          %v2713 = vld [vmem:[#allocation2 + $0x20] sm:$0xff]
          %v2714 = vld [vmem:[#allocation2 + $0x28] sm:$0xff]
          %v2715 = vld [vmem:[#allocation2 + $0x30] sm:$0xff]
          %v2716 = vld [vmem:[#allocation2 + $0x38] sm:$0xff]
          %v2717 = vld [vmem:[#allocation2 + $0x40] sm:$0xff]
          %v2718 = vld [vmem:[#allocation2 + $0x48] sm:$0xff]
          %v2719 = vld [vmem:[#allocation2 + $0x50] sm:$0xff]
          %v2720 = vld [vmem:[#allocation2 + $0x58] sm:$0xff]
          %v2721 = vld [vmem:[#allocation2 + $0x60] sm:$0xff]
          %v2722 = vld [vmem:[#allocation2 + $0x68] sm:$0xff]
          %v2723 = vld [vmem:[#allocation2 + $0x70] sm:$0xff]
          %v2724 = vld [vmem:[#allocation2 + $0x78] sm:$0xff]
          %v2725 = vld [vmem:[#allocation3] sm:$0xff]
          %v2726 = vld [vmem:[#allocation3 + $0x8] sm:$0xff]
          %v2727 = vld [vmem:[#allocation3 + $0x10] sm:$0xff]
          %v2728 = vld [vmem:[#allocation3 + $0x18] sm:$0xff]
          %v2729 = vld [vmem:[#allocation3 + $0x20] sm:$0xff]
          %v2730 = vld [vmem:[#allocation3 + $0x28] sm:$0xff]
          %v2731 = vld [vmem:[#allocation3 + $0x30] sm:$0xff]
          %v2732 = vld [vmem:[#allocation3 + $0x38] sm:$0xff]
          %v2733 = vld [vmem:[#allocation3 + $0x40] sm:$0xff]
          %v2734 = vld [vmem:[#allocation3 + $0x48] sm:$0xff]
          %v2735 = vld [vmem:[#allocation3 + $0x50] sm:$0xff]
          %v2736 = vld [vmem:[#allocation3 + $0x58] sm:$0xff]
          %v2737 = vld [vmem:[#allocation3 + $0x60] sm:$0xff]
          %v2738 = vld [vmem:[#allocation3 + $0x68] sm:$0xff]
          %v2739 = vld [vmem:[#allocation3 + $0x70] sm:$0xff]
          %v2740 = vld [vmem:[#allocation3 + $0x78] sm:$0xff]
          %v2741 = vlog2.pop %v2725
          %v2742 = vmul.f32 %v2741, 0.6931472
          %v2743 = vlog2.pop %v2726
          %v2744 = vmul.f32 %v2743, 0.6931472
          %v2745 = vlog2.pop %v2727
          %v2746 = vmul.f32 %v2745, 0.6931472
          %v2747 = vlog2.pop %v2728
          %v2748 = vmul.f32 %v2747, 0.6931472
          %v2749 = vlog2.pop %v2729
          %v2750 = vmul.f32 %v2749, 0.6931472
          %v2751 = vlog2.pop %v2730
          %v2752 = vmul.f32 %v2751, 0.6931472
          %v2753 = vlog2.pop %v2731
          %v2754 = vmul.f32 %v2753, 0.6931472
          %v2755 = vlog2.pop %v2732
          %v2756 = vmul.f32 %v2755, 0.6931472
          %v2757 = vlog2.pop %v2733
          %v2758 = vmul.f32 %v2757, 0.6931472
          %v2759 = vlog2.pop %v2734
          %v2760 = vmul.f32 %v2759, 0.6931472
          %v2761 = vlog2.pop %v2735
          %v2762 = vmul.f32 %v2761, 0.6931472
          %v2763 = vlog2.pop %v2736
          %v2764 = vmul.f32 %v2763, 0.6931472
          %v2765 = vlog2.pop %v2737
          %v2766 = vmul.f32 %v2765, 0.6931472
          %v2767 = vlog2.pop %v2738
          %v2768 = vmul.f32 %v2767, 0.6931472
          %v2769 = vlog2.pop %v2739
          %v2770 = vmul.f32 %v2769, 0.6931472
          %v2771 = vlog2.pop %v2740
          %v2772 = vmul.f32 %v2771, 0.6931472
          %v2773 = vadd.f32 %v2709, %v2742
          %v2774 = vadd.f32 %v2710, %v2744
          %v2775 = vadd.f32 %v2711, %v2746
          %v2776 = vadd.f32 %v2712, %v2748
          %v2777 = vadd.f32 %v2713, %v2750
          %v2778 = vadd.f32 %v2714, %v2752
          %v2779 = vadd.f32 %v2715, %v2754
          %v2780 = vadd.f32 %v2716, %v2756
          %v2781 = vadd.f32 %v2717, %v2758
          %v2782 = vadd.f32 %v2718, %v2760
          %v2783 = vadd.f32 %v2719, %v2762
          %v2784 = vadd.f32 %v2720, %v2764
          %v2785 = vadd.f32 %v2721, %v2766
          %v2786 = vadd.f32 %v2722, %v2768
          %v2787 = vadd.f32 %v2723, %v2770
          %v2788 = vadd.f32 %v2724, %v2772
          %v2789 = vld [vmem:[#allocation4] sm:$0xff]
          %v2790 = vld [vmem:[#allocation4 + $0x8] sm:$0xff]
          %v2791 = vld [vmem:[#allocation4 + $0x10] sm:$0xff]
          %v2792 = vld [vmem:[#allocation4 + $0x18] sm:$0xff]
          %v2793 = vld [vmem:[#allocation4 + $0x20] sm:$0xff]
          %v2794 = vld [vmem:[#allocation4 + $0x28] sm:$0xff]
          %v2795 = vld [vmem:[#allocation4 + $0x30] sm:$0xff]
          %v2796 = vld [vmem:[#allocation4 + $0x38] sm:$0xff]
          %v2797 = vld [vmem:[#allocation4 + $0x40] sm:$0xff]
          %v2798 = vld [vmem:[#allocation4 + $0x48] sm:$0xff]
          %v2799 = vld [vmem:[#allocation4 + $0x50] sm:$0xff]
          %v2800 = vld [vmem:[#allocation4 + $0x58] sm:$0xff]
          %v2801 = vld [vmem:[#allocation4 + $0x60] sm:$0xff]
          %v2802 = vld [vmem:[#allocation4 + $0x68] sm:$0xff]
          %v2803 = vld [vmem:[#allocation4 + $0x70] sm:$0xff]
          %v2804 = vld [vmem:[#allocation4 + $0x78] sm:$0xff]
          %v2805 = vsub.f32 %v2789, %v2773
          %v2806 = vsub.f32 %v2790, %v2774
          %v2807 = vsub.f32 %v2791, %v2775
          %v2808 = vsub.f32 %v2792, %v2776
          %v2809 = vsub.f32 %v2793, %v2777
          %v2810 = vsub.f32 %v2794, %v2778
          %v2811 = vsub.f32 %v2795, %v2779
          %v2812 = vsub.f32 %v2796, %v2780
          %v2813 = vsub.f32 %v2797, %v2781
          %v2814 = vsub.f32 %v2798, %v2782
          %v2815 = vsub.f32 %v2799, %v2783
          %v2816 = vsub.f32 %v2800, %v2784
          %v2817 = vsub.f32 %v2801, %v2785
          %v2818 = vsub.f32 %v2802, %v2786
          %v2819 = vsub.f32 %v2803, %v2787
          %v2820 = vsub.f32 %v2804, %v2788
          %v2821 = vld [vmem:[#allocation9] sm:$0x1]
          %v2822 = vmul.f32 %v2805, %v2645
          %v2823 = vmul.f32 %v2806, %v2646
          %v2824 = vmul.f32 %v2807, %v2647
          %v2825 = vmul.f32 %v2808, %v2648
          %v2826 = vmul.f32 %v2809, %v2649
          %v2827 = vmul.f32 %v2810, %v2650
          %v2828 = vmul.f32 %v2811, %v2651
          %v2829 = vmul.f32 %v2812, %v2652
          %v2830 = vmul.f32 %v2813, %v2653
          %v2831 = vmul.f32 %v2814, %v2654
          %v2832 = vmul.f32 %v2815, %v2655
          %v2833 = vmul.f32 %v2816, %v2656
          %v2834 = vmul.f32 %v2817, %v2657
          %v2835 = vmul.f32 %v2818, %v2658
          %v2836 = vmul.f32 %v2819, %v2659
          %v2837 = vmul.f32 %v2820, %v2660
          %v2838 = vmul.f32 %v2822, %v2693
          %v2839 = vmul.f32 %v2823, %v2694
          %v2840 = vmul.f32 %v2824, %v2695
          %v2841 = vmul.f32 %v2825, %v2696
          %v2842 = vmul.f32 %v2826, %v2697
          %v2843 = vmul.f32 %v2827, %v2698
          %v2844 = vmul.f32 %v2828, %v2699
          %v2845 = vmul.f32 %v2829, %v2700
          %v2846 = vmul.f32 %v2830, %v2701
          %v2847 = vmul.f32 %v2831, %v2702
          %v2848 = vmul.f32 %v2832, %v2703
          %v2849 = vmul.f32 %v2833, %v2704
          %v2850 = vmul.f32 %v2834, %v2705
          %v2851 = vmul.f32 %v2835, %v2706
          %v2852 = vmul.f32 %v2836, %v2707
          %v2853 = vmul.f32 %v2837, %v2708
          %v2854 = vsel %vm1836, %v2838, 0.0
          %v2855 = vsel %vm1836, %v2839, 0.0
          %v2856 = vadd.f32 %v2854, %v2855
          %v2857 = vsel %vm1836, %v2840, 0.0
          %v2858 = vadd.f32 %v2856, %v2857
          %v2859 = vsel %vm1836, %v2841, 0.0
          %v2860 = vadd.f32 %v2858, %v2859
          %v2861 = vsel %vm1836, %v2842, 0.0
          %v2862 = vadd.f32 %v2860, %v2861
          %v2863 = vsel %vm1836, %v2843, 0.0
          %v2864 = vadd.f32 %v2862, %v2863
          %v2865 = vsel %vm1836, %v2844, 0.0
          %v2866 = vadd.f32 %v2864, %v2865
          %v2867 = vsel %vm1836, %v2845, 0.0
          %v2868 = vadd.f32 %v2866, %v2867
          %v2869 = vsel %vm1836, %v2846, 0.0
          %v2870 = vadd.f32 %v2868, %v2869
          %v2871 = vsel %vm1836, %v2847, 0.0
          %v2872 = vadd.f32 %v2870, %v2871
          %v2873 = vsel %vm1836, %v2848, 0.0
          %v2874 = vadd.f32 %v2872, %v2873
          %v2875 = vsel %vm1836, %v2849, 0.0
          %v2876 = vadd.f32 %v2874, %v2875
          %v2877 = vsel %vm1836, %v2850, 0.0
          %v2878 = vadd.f32 %v2876, %v2877
          %v2879 = vsel %vm1836, %v2851, 0.0
          %v2880 = vadd.f32 %v2878, %v2879
          %v2881 = vsel %vm1836, %v2852, 0.0
          %v2882 = vadd.f32 %v2880, %v2881
          %v2883 = vsel %vm1836, %v2853, 0.0
          %v2884 = vadd.f32 %v2882, %v2883
          %2885 = vadd.xlane.f32.xlu0 %v2884
          %v2886 = vpop.xlane.xlu0 %2885
          %v2887 = vrot.slane %v2886, 4
          %v2888 = vadd.f32 %v2886, %v2887
          %v2889 = vrot.slane %v2888, 2
          %v2890 = vadd.f32 %v2888, %v2889
          %v2891 = vrot.slane %v2890, 1
          %v2892 = vadd.f32 %v2890, %v2891
          %s2893 = vtos %v2892
          %v2894 = vstv %s2893
          %v2895 = vsub.f32 0.0, %v2894
          %v2896 = vadd.f32 %v2821, %v2895
          %vm2897 = vcmask 0
          %2898 = vst.msk [vmem:[#allocation9] sm:$0x1] %vm2897, %v2896
          %v2899 = vld [vmem:[#allocation12] sm:$0x1]
          %v2900 = vmul.f32 %v2773, %v2645
          %v2901 = vmul.f32 %v2774, %v2646
          %v2902 = vmul.f32 %v2775, %v2647
          %v2903 = vmul.f32 %v2776, %v2648
          %v2904 = vmul.f32 %v2777, %v2649
          %v2905 = vmul.f32 %v2778, %v2650
          %v2906 = vmul.f32 %v2779, %v2651
          %v2907 = vmul.f32 %v2780, %v2652
          %v2908 = vmul.f32 %v2781, %v2653
          %v2909 = vmul.f32 %v2782, %v2654
          %v2910 = vmul.f32 %v2783, %v2655
          %v2911 = vmul.f32 %v2784, %v2656
          %v2912 = vmul.f32 %v2785, %v2657
          %v2913 = vmul.f32 %v2786, %v2658
          %v2914 = vmul.f32 %v2787, %v2659
          %v2915 = vmul.f32 %v2788, %v2660
          %v2916 = vand.u32 2147483647, %v2900
          %v2917 = vand.u32 2147483647, %v2901
          %v2918 = vand.u32 2147483647, %v2902
          %v2919 = vand.u32 2147483647, %v2903
          %v2920 = vand.u32 2147483647, %v2904
          %v2921 = vand.u32 2147483647, %v2905
          %v2922 = vand.u32 2147483647, %v2906
          %v2923 = vand.u32 2147483647, %v2907
          %v2924 = vand.u32 2147483647, %v2908
          %v2925 = vand.u32 2147483647, %v2909
          %v2926 = vand.u32 2147483647, %v2910
          %v2927 = vand.u32 2147483647, %v2911
          %v2928 = vand.u32 2147483647, %v2912
          %v2929 = vand.u32 2147483647, %v2913
          %v2930 = vand.u32 2147483647, %v2914
          %v2931 = vand.u32 2147483647, %v2915
          %v2932 = vsel %vm1836, %v2916, 0.0
          %v2933 = vsel %vm1836, %v2917, 0.0
          %v2934 = vadd.f32 %v2932, %v2933
          %v2935 = vsel %vm1836, %v2918, 0.0
          %v2936 = vadd.f32 %v2934, %v2935
          %v2937 = vsel %vm1836, %v2919, 0.0
          %v2938 = vadd.f32 %v2936, %v2937
          %v2939 = vsel %vm1836, %v2920, 0.0
          %v2940 = vadd.f32 %v2938, %v2939
          %v2941 = vsel %vm1836, %v2921, 0.0
          %v2942 = vadd.f32 %v2940, %v2941
          %v2943 = vsel %vm1836, %v2922, 0.0
          %v2944 = vadd.f32 %v2942, %v2943
          %v2945 = vsel %vm1836, %v2923, 0.0
          %v2946 = vadd.f32 %v2944, %v2945
          %v2947 = vsel %vm1836, %v2924, 0.0
          %v2948 = vadd.f32 %v2946, %v2947
          %v2949 = vsel %vm1836, %v2925, 0.0
          %v2950 = vadd.f32 %v2948, %v2949
          %v2951 = vsel %vm1836, %v2926, 0.0
          %v2952 = vadd.f32 %v2950, %v2951
          %v2953 = vsel %vm1836, %v2927, 0.0
          %v2954 = vadd.f32 %v2952, %v2953
          %v2955 = vsel %vm1836, %v2928, 0.0
          %v2956 = vadd.f32 %v2954, %v2955
          %v2957 = vsel %vm1836, %v2929, 0.0
          %v2958 = vadd.f32 %v2956, %v2957
          %v2959 = vsel %vm1836, %v2930, 0.0
          %v2960 = vadd.f32 %v2958, %v2959
          %v2961 = vsel %vm1836, %v2931, 0.0
          %v2962 = vadd.f32 %v2960, %v2961
          %2963 = vadd.xlane.f32.xlu0 %v2962
          %v2964 = vpop.xlane.xlu0 %2963
          %v2965 = vrot.slane %v2964, 4
          %v2966 = vadd.f32 %v2964, %v2965
          %v2967 = vrot.slane %v2966, 2
          %v2968 = vadd.f32 %v2966, %v2967
          %v2969 = vrot.slane %v2968, 1
          %v2970 = vadd.f32 %v2968, %v2969
          %s2971 = vtos %v2970
          %v2972 = vstv %s2971
          %v2973 = vadd.f32 %v2899, %v2972
          %2974 = vst.msk [vmem:[#allocation12] sm:$0x1] %vm2897, %v2973
          %v2975 = vld [vmem:[#allocation10] sm:$0x1]
          %v2976 = vld [vmem:[#allocation5] sm:$0xff]
          %v2977 = vld [vmem:[#allocation5 + $0x8] sm:$0xff]
          %v2978 = vld [vmem:[#allocation5 + $0x10] sm:$0xff]
          %v2979 = vld [vmem:[#allocation5 + $0x18] sm:$0xff]
          %v2980 = vld [vmem:[#allocation5 + $0x20] sm:$0xff]
          %v2981 = vld [vmem:[#allocation5 + $0x28] sm:$0xff]
          %v2982 = vld [vmem:[#allocation5 + $0x30] sm:$0xff]
          %v2983 = vld [vmem:[#allocation5 + $0x38] sm:$0xff]
          %v2984 = vld [vmem:[#allocation5 + $0x40] sm:$0xff]
          %v2985 = vld [vmem:[#allocation5 + $0x48] sm:$0xff]
          %v2986 = vld [vmem:[#allocation5 + $0x50] sm:$0xff]
          %v2987 = vld [vmem:[#allocation5 + $0x58] sm:$0xff]
          %v2988 = vld [vmem:[#allocation5 + $0x60] sm:$0xff]
          %v2989 = vld [vmem:[#allocation5 + $0x68] sm:$0xff]
          %v2990 = vld [vmem:[#allocation5 + $0x70] sm:$0xff]
          %v2991 = vld [vmem:[#allocation5 + $0x78] sm:$0xff]
          %vm2992 = vcmp.eq.s32.totalorder %v2976, %v1189
          %vm2993 = vcmp.eq.s32.totalorder %v2977, %v1190
          %vm2994 = vcmp.eq.s32.totalorder %v2978, %v1191
          %vm2995 = vcmp.eq.s32.totalorder %v2979, %v1192
          %vm2996 = vcmp.eq.s32.totalorder %v2980, %v1193
          %vm2997 = vcmp.eq.s32.totalorder %v2981, %v1194
          %vm2998 = vcmp.eq.s32.totalorder %v2982, %v1195
          %vm2999 = vcmp.eq.s32.totalorder %v2983, %v1196
          %vm3000 = vcmp.eq.s32.totalorder %v2984, %v1197
          %vm3001 = vcmp.eq.s32.totalorder %v2985, %v1198
          %vm3002 = vcmp.eq.s32.totalorder %v2986, %v1199
          %vm3003 = vcmp.eq.s32.totalorder %v2987, %v1200
          %vm3004 = vcmp.eq.s32.totalorder %v2988, %v1201
          %vm3005 = vcmp.eq.s32.totalorder %v2989, %v1202
          %vm3006 = vcmp.eq.s32.totalorder %v2990, %v1203
          %vm3007 = vcmp.eq.s32.totalorder %v2991, %v1204
          %vm3008 = vmand %vm2992, %vm2661
          %vm3009 = vmand %vm2993, %vm2662
          %vm3010 = vmand %vm2994, %vm2663
          %vm3011 = vmand %vm2995, %vm2664
          %vm3012 = vmand %vm2996, %vm2665
          %vm3013 = vmand %vm2997, %vm2666
          %vm3014 = vmand %vm2998, %vm2667
          %vm3015 = vmand %vm2999, %vm2668
          %vm3016 = vmand %vm3000, %vm2669
          %vm3017 = vmand %vm3001, %vm2670
          %vm3018 = vmand %vm3002, %vm2671
          %vm3019 = vmand %vm3003, %vm2672
          %vm3020 = vmand %vm3004, %vm2673
          %vm3021 = vmand %vm3005, %vm2674
          %vm3022 = vmand %vm3006, %vm2675
          %vm3023 = vmand %vm3007, %vm2676
          %v3024 = vsel %vm3008, 1, 0
          %v3025 = vsel %vm3009, 1, 0
          %v3026 = vsel %vm3010, 1, 0
          %v3027 = vsel %vm3011, 1, 0
          %v3028 = vsel %vm3012, 1, 0
          %v3029 = vsel %vm3013, 1, 0
          %v3030 = vsel %vm3014, 1, 0
          %v3031 = vsel %vm3015, 1, 0
          %v3032 = vsel %vm3016, 1, 0
          %v3033 = vsel %vm3017, 1, 0
          %v3034 = vsel %vm3018, 1, 0
          %v3035 = vsel %vm3019, 1, 0
          %v3036 = vsel %vm3020, 1, 0
          %v3037 = vsel %vm3021, 1, 0
          %v3038 = vsel %vm3022, 1, 0
          %v3039 = vsel %vm3023, 1, 0
          %v3040 = vsel %vm1836, %v3024, 0
          %v3041 = vsel %vm1836, %v3025, 0
          %v3042 = vsel %vm1836, %v3026, 0
          %v3043 = vsel %vm1836, %v3027, 0
          %v3044 = vsel %vm1836, %v3028, 0
          %v3045 = vadd.s32 %v3040, %v3044
          %v3046 = vsel %vm1836, %v3029, 0
          %v3047 = vadd.s32 %v3041, %v3046
          %v3048 = vsel %vm1836, %v3030, 0
          %v3049 = vadd.s32 %v3042, %v3048
          %v3050 = vsel %vm1836, %v3031, 0
          %v3051 = vadd.s32 %v3043, %v3050
          %v3052 = vsel %vm1836, %v3032, 0
          %v3053 = vadd.s32 %v3045, %v3052
          %v3054 = vsel %vm1836, %v3033, 0
          %v3055 = vadd.s32 %v3047, %v3054
          %v3056 = vsel %vm1836, %v3034, 0
          %v3057 = vadd.s32 %v3049, %v3056
          %v3058 = vsel %vm1836, %v3035, 0
          %v3059 = vadd.s32 %v3051, %v3058
          %v3060 = vsel %vm1836, %v3036, 0
          %v3061 = vadd.s32 %v3053, %v3060
          %v3062 = vsel %vm1836, %v3037, 0
          %v3063 = vadd.s32 %v3055, %v3062
          %v3064 = vsel %vm1836, %v3038, 0
          %v3065 = vadd.s32 %v3057, %v3064
          %v3066 = vsel %vm1836, %v3039, 0
          %v3067 = vadd.s32 %v3059, %v3066
          %v3068 = vadd.s32 %v3061, %v3063
          %v3069 = vadd.s32 %v3065, %v3067
          %v3070 = vadd.s32 %v3068, %v3069
          %v3071 = vand.u32 %v3070, 65535
          %v3072 = vshrl.u32 %v3070, 16
          %v3073 = vcvt.s32.f32 %v3071
          %v3074 = vcvt.s32.f32 %v3072
          %3075 = vadd.xlane.f32.xlu0 %v3073
          %v3076 = vpop.xlane.xlu0 %3075
          %3077 = vadd.xlane.f32.xlu0 %v3074
          %v3078 = vpop.xlane.xlu0 %3077
          %v3079 = vcvt.f32.s32 %v3076
          %v3080 = vcvt.f32.s32 %v3078
          %v3081 = vshll.u32 %v3080, 16
          %v3082 = vadd.s32 %v3081, %v3079
          %v3083 = vrot.slane %v3082, 4
          %v3084 = vadd.s32 %v3082, %v3083
          %v3085 = vrot.slane %v3084, 2
          %v3086 = vadd.s32 %v3084, %v3085
          %v3087 = vrot.slane %v3086, 1
          %v3088 = vadd.s32 %v3086, %v3087
          %s3089 = vtos %v3088
          %v3090 = vstv %s3089
          %v3091 = vadd.s32 %v2975, %v3090
          %3092 = vst.msk [vmem:[#allocation10] sm:$0x1] %vm2897, %v3091
        $region56: #{tpu_custom_call.1} parent=39 // pred_fallthru
          _
        // Predicated region
        $region57: #{tpu_custom_call.1} parent=39 // pred_check
          %p3093 = pneg %p179
        $region58: #{tpu_custom_call.1} parent=39 // pred_check_branch
          %3095 = sbr.rel (%p3093) target = $region60
        $region59: #{tpu_custom_call.1} parent=39 // pred_region
          %s3097 = ssub.s32 16, 16
          %3098 = vsyncadd [#allocation8], %s3097
          %s3100 = sshll.u32 [#allocation9], 4
          %s3101 = int_to_ptr.vmem [resolvable:$true] %s3100
          %3103 = dma.vmem_to_hbm [thread:$0]  %s3101, 16, %s5, [#allocation8]
        $region60: #{tpu_custom_call.1} parent=39 // pred_fallthru
          _
        // Predicated region
        $region61: #{tpu_custom_call.1} parent=39 // pred_check
          %p3104 = pneg %p200
        $region62: #{tpu_custom_call.1} parent=39 // pred_check_branch
          %3106 = sbr.rel (%p3104) target = $region64
        $region63: #{tpu_custom_call.1} parent=39 // pred_region
          %s3108 = ssub.s32 16, 16
          %3109 = vsyncadd [#allocation11], %s3108
          %s3111 = sshll.u32 [#allocation10], 4
          %s3112 = int_to_ptr.vmem [resolvable:$true] %s3111
          %3114 = dma.vmem_to_hbm [thread:$0]  %s3112, 16, %s6, [#allocation11]
        $region64: #{tpu_custom_call.1} parent=39 // pred_fallthru
          _
        // Predicated region
        $region65: #{tpu_custom_call.1} parent=39 // pred_check
          %p3115 = pneg %p221
        $region66: #{tpu_custom_call.1} parent=39 // pred_check_branch
          %3117 = sbr.rel (%p3115) target = $region68
        $region67: #{tpu_custom_call.1} parent=39 // pred_region
          %s3119 = ssub.s32 16, 16
          %3120 = vsyncadd [#allocation11], %s3119
          %s3122 = sshll.u32 [#allocation12], 4
          %s3123 = int_to_ptr.vmem [resolvable:$true] %s3122
          %3125 = dma.vmem_to_hbm [thread:$0]  %s3123, 16, %s7, [#allocation11]
        $region68: #{tpu_custom_call.1} parent=39 // pred_fallthru
          _
        // Predicated region
        $region69: #{tpu_custom_call.1} parent=39 // pred_check
          %p3126 = pneg %p179
        $region70: #{tpu_custom_call.1} parent=39 // pred_check_branch
          %3128 = sbr.rel (%p3126) target = $region72
        $region71: #{tpu_custom_call.1} parent=39 // pred_region
          %3129 = dma.done [#allocation8], 16
        $region72: #{tpu_custom_call.1} parent=39 // pred_fallthru
          _
        // Predicated region
        $region73: #{tpu_custom_call.1} parent=39 // pred_check
          %p3130 = pneg %p200
        $region74: #{tpu_custom_call.1} parent=39 // pred_check_branch
          %3132 = sbr.rel (%p3130) target = $region76
        $region75: #{tpu_custom_call.1} parent=39 // pred_region
          %3133 = dma.done [#allocation11], 16
        $region76: #{tpu_custom_call.1} parent=39 // pred_fallthru
          _
        // Predicated region
        $region77: #{tpu_custom_call.1} parent=39 // pred_check
          %p3134 = pneg %p221
        $region78: #{tpu_custom_call.1} parent=39 // pred_check_branch
          %3136 = sbr.rel (%p3134) target = $region80
        $region79: #{tpu_custom_call.1} parent=39 // pred_region
          %3137 = dma.done [#allocation11], 16
        $region80: #{tpu_custom_call.1} parent=39 // pred_fallthru
          _
      $region40: #{tpu_custom_call.1} parent=5 // pred_fallthru
        _
      %p3138 = scmp.le.s32.totalorder 2, %s19
      // Predicated region
      $region81: #{tpu_custom_call.1} parent=5 // pred_check
        %p3139 = pneg %p3138
      $region82: #{tpu_custom_call.1} parent=5 // pred_check_branch
        %3141 = sbr.rel (%p3139) target = $region84
      $region83: #{tpu_custom_call.1} parent=5 // pred_region
        %s3142 = ssub.s32 %s19, 2
      $region84: #{tpu_custom_call.1} parent=5 // pred_fallthru
        _
    $region6: #{tpu_custom_call.1} parent=1 // loop_footer
      %s23 = sadd.s32 1, %s19
    $region7: #{tpu_custom_call.1} parent=1 // loop_footer_branch
      %18 = sbr.rel target = $region3
    $region8: #{tpu_custom_call.1} parent=1 // loop_exit
      _
    %3143 = vsyncpa [#allocation7], 1
    %s3144 = scalar_lea.sflag [#allocation7], 1
    %3145 = vsyncpa %s3144, 1
    %3146 = vsyncpa [#allocation8], 1
    %s3147 = scalar_lea.sflag [#allocation8], 1
    %3148 = vsyncpa %s3147, 1
    %3149 = vsyncpa [#allocation11], 1

</llo_original>
